<compile_context>
chip_gen: v5e
topology: v5e:2x2
jax: 0.10.0
libtpu: 0.0.40
codegen_flags: <defaults>
</compile_context>

<pallas_src>
import functools
import numpy as np

import jax
import jax.numpy as jnp
from jax import lax
from jax.experimental import pallas as pl
from jax.experimental.pallas import tpu as pltpu


# ---------------------------------------------------------------------------
# Fused kernel: gating + projections + adaptive max-pool + attention + BN + residual
# ---------------------------------------------------------------------------
def _fused_kernel(x_ref, gblk_ref, e_ref, wblk_ref, wz_ref, sh_ref, sel_ref,
                  out_ref, *, C, c2, P3, BV):
    f32 = jnp.float32
    bf16 = jnp.bfloat16

    x = x_ref[0]                                                          # (C, N) f32

    # --- all three per-direction gates in one MXU pass (blockdiag gates x stacked one-hots)
    G = jnp.dot(gblk_ref[0], e_ref[...], preferred_element_type=f32)      # (3C, N)

    # gated inputs [y0; y1; y2] stacked on the sublane axis; their mean is the residual path
    x3 = jnp.concatenate([x, x, x], axis=0)                               # (3C, N)
    y = x3 * G                                                            # (3C, N) f32
    avg = (y[0:C] + y[C:2 * C] + y[2 * C:3 * C]) * (1.0 / 3.0)            # (C, N)

    # --- t/p/g 1x1x1 convs in one MXU pass: blockdiag(wt, wp, wg) @ [y0; y1; y2]
    tpg = jnp.dot(wblk_ref[...], y.astype(bf16),
                  preferred_element_type=f32)                             # (3*c2, N)
    t = tpg[0:c2]                                                         # (c2, N)
    pg = tpg[c2:3 * c2]                                                   # (2*c2, N) = [p; g]

    # --- adaptive max pool of p and g to P3 bins: ONE selector matmul, then a VPU max tree
    pooled_all = lax.dot_general(sel_ref[...], pg.astype(bf16),
                                 (((1,), (1,)), ((), ())),
                                 preferred_element_type=f32)              # (BV*P3, 2*c2)
    parts = [pooled_all[j * P3:(j + 1) * P3] for j in range(BV)]          # aligned 64-row slabs
    while len(parts) > 1:
        nxt = [jnp.maximum(parts[i], parts[i + 1])
               for i in range(0, len(parts) - 1, 2)]
        if len(parts) % 2:
            nxt.append(parts[-1])
        parts = nxt
    pooled = parts[0]                                                     # (P3, 2*c2) = [p_pool | g_pool^T]
    p_pool = pooled[:, 0:c2]                                              # (P3, c2)

    # --- attention over the pooled keys (softmax along the key axis, size P3)
    att = jnp.dot(p_pool, t, preferred_element_type=f32)                  # (P3, N)
    att = att - jnp.max(att, axis=0, keepdims=True)                       # stable softmax
    att = jnp.exp(att)
    # approx reciprocal (EUP); use approx=False for tight parity validation
    att = att * pl.reciprocal(jnp.sum(att, axis=0, keepdims=True), approx=True)

    # o_full rows [c2:2*c2] hold g_pool @ att; the split is folded into the zero-padded wz
    o_full = lax.dot_general(pooled, att, (((0,), (0,)), ((), ())),
                             preferred_element_type=f32)                  # (2*c2, N)

    # --- z conv; BatchNorm scale and per-sample drop-path factor are folded into wz / sh
    z = jnp.dot(wz_ref[0], o_full.astype(bf16), preferred_element_type=f32)  # (C, N)
    z = z + sh_ref[0]                                                     # (C, 1) broadcast
    out_ref[0] = (avg + z).astype(out_ref.dtype)


# ---------------------------------------------------------------------------
# One-hot selection matrix for the adaptive max pool (flattened: rows = j*P3 + k)
# ---------------------------------------------------------------------------
def _build_pool_selectors(D, H, W, PS):
    """sel[j*P3 + k, n] = 1 iff voxel n is the j-th member of max-pool bin k."""
    bd, bh, bw = D // PS, H // PS, W // PS
    N, P3, BV = D * H * W, PS ** 3, bd * bh * bw
    sel = np.zeros((BV * P3, N), np.float32)
    for k in range(P3):
        di, hi, wi = k // (PS * PS), (k // PS) % PS, k % PS
        for j in range(BV):
            dj, hj, wj = j // (bh * bw), (j // bw) % bh, j % bw
            n = (di * bd + dj) * H * W + (hi * bh + hj) * W + (wi * bw + wj)
            sel[j * P3 + k, n] = 1.0
    return jnp.asarray(sel, dtype=jnp.bfloat16)   # 0/1 exact in bf16


def _padded_block_bytes(shape, dtype):
    shp = list(shape)
    shp[-1] = -(-shp[-1] // 128) * 128
    if len(shp) >= 2:
        shp[-2] = -(-shp[-2] // 8) * 8
    return int(np.prod(shp)) * jnp.dtype(dtype).itemsize


# ---------------------------------------------------------------------------
# Wrapper
# ---------------------------------------------------------------------------
def domain_attention_forward(x_ncdhw, params, *, groups, drop_prob, dp_key):
    B, C, D, H, W = x_ncdhw.shape
    PS = 4                                      # cross_attention pool_size (adaptive output)
    assert C % 2 == 0
    assert D % groups == 0 and H % groups == 0 and W % groups == 0
    assert D % PS == 0 and H % PS == 0 and W % PS == 0
    c2 = C // 2
    N = D * H * W
    L = D + H + W
    P3 = PS ** 3
    BV = (D // PS) * (H // PS) * (W // PS)
    f32 = jnp.float32
    bf16 = jnp.bfloat16

    x_cf = x_ncdhw.reshape(B, C, N)             # channels-first, flat voxels (free reshape)

    # ---- squeeze: global + per-direction / per-group average pools (tiny; plain JAX) -----
    m0 = jnp.mean(x_ncdhw, axis=(3, 4))                                  # (B, C, D)
    m1 = jnp.mean(x_ncdhw, axis=(2, 4))                                  # (B, C, H)
    m2 = jnp.mean(x_ncdhw, axis=(2, 3))                                  # (B, C, W)
    p0 = jnp.mean(m0.reshape(B, C, groups, D // groups), axis=-1)        # (B, C, G)
    p1 = jnp.mean(m1.reshape(B, C, groups, H // groups), axis=-1)
    p2 = jnp.mean(m2.reshape(B, C, groups, W // groups), axis=-1)
    pools3 = jnp.transpose(jnp.stack([p0, p1, p2], axis=1), (0, 1, 3, 2))  # (B, 3, G, C)
    gpool = jnp.mean(x_ncdhw, axis=(2, 3, 4))                              # (B, C)

    # dataset attention weights: softmax(fc_1(avg_pool(x)))
    weight = jax.nn.softmax(gpool @ params["fc1_w"].T + params["fc1_b"], axis=1)  # (B, nD)

    # SGSE excitation (synthesized), mixed across datasets, sigmoid gate
    h = jnp.einsum("bdgc,idkc->bidgk", pools3, params["se_w1"]) \
        + params["se_b1"][None, :, :, None, :]
    h = jax.nn.relu(h)
    ye = jnp.einsum("bidgk,idck->bidgc", h, params["se_w2"]) \
        + params["se_b2"][None, :, :, None, :]                            # (B, nD, 3, G, C)
    gate = jax.nn.sigmoid(jnp.einsum("bidgc,bi->bdgc", ye, weight))       # (B, 3, G, C)

    # per-axis gate vectors, channels-first
    g0 = jnp.transpose(jnp.repeat(gate[:, 0], D // groups, axis=1), (0, 2, 1))  # (B, C, D)
    g1 = jnp.transpose(jnp.repeat(gate[:, 1], H // groups, axis=1), (0, 2, 1))  # (B, C, H)
    g2 = jnp.transpose(jnp.repeat(gate[:, 2], W // groups, axis=1), (0, 2, 1))  # (B, C, W)

    # block-diagonal gate operand (per sample) for the single merged gate-expansion dot
    gblk = jnp.zeros((B, 3 * C, L), f32)
    gblk = gblk.at[:, 0:C, 0:D].set(g0)
    gblk = gblk.at[:, C:2 * C, D:D + H].set(g1)
    gblk = gblk.at[:, 2 * C:3 * C, D + H:L].set(g2)
    gblk = gblk.astype(bf16)

    # stacked one-hot expansion matrix: axis index -> flat voxel index (constant, bf16-exact)
    n_idx = jnp.arange(N)
    e0 = (n_idx[None, :] // (H * W) == jnp.arange(D)[:, None])             # (D, N)
    e1 = ((n_idx[None, :] // W) % H == jnp.arange(H)[:, None])             # (H, N)
    e2 = (n_idx[None, :] % W == jnp.arange(W)[:, None])                    # (W, N)
    e_stack = jnp.concatenate([e0, e1, e2], axis=0).astype(bf16)           # (L, N)

    # block-diagonal [wt; wp; wg] weight for the single merged projection dot
    wblk = jnp.zeros((3 * c2, 3 * C), f32)
    wblk = wblk.at[0:c2, 0:C].set(params["wt"])
    wblk = wblk.at[c2:2 * c2, C:2 * C].set(params["wp"])
    wblk = wblk.at[2 * c2:3 * c2, 2 * C:3 * C].set(params["wg"])
    wblk = wblk.astype(bf16)

    # one-hot selectors for the in-kernel adaptive max pool (single batched dot)
    sel = _build_pool_selectors(D, H, W, PS)                               # (BV*P3, N) bf16

    # fold BatchNorm (inference affine) and per-sample drop-path into the z conv; the left
    # zero block consumes the p_pool rows of o_full so no unaligned slice is needed in-kernel
    eps = 1e-5
    bn_scale = params["bn_gamma"] / jnp.sqrt(params["bn_var"] + eps)       # (C,)
    bn_shift = params["bn_beta"] - params["bn_mean"] * bn_scale            # (C,)
    keep = 1.0 - drop_prob
    dp_mask = jnp.floor(keep + jax.random.uniform(dp_key, (B,), dtype=f32))
    dp = dp_mask / keep                                                    # (B,)
    wz_eff = params["wz"] * bn_scale[:, None]                              # (C, c2)
    wz_pad = jnp.concatenate([jnp.zeros((C, c2), f32), wz_eff], axis=1)    # (C, 2*c2)
    wz_b = (wz_pad[None, :, :] * dp[:, None, None]).astype(bf16)           # (B, C, 2*c2)
    sh_b = (bn_shift[None, :, None] * dp[:, None, None]).astype(f32)       # (B, C, 1)

    kernel = functools.partial(_fused_kernel, C=C, c2=c2, P3=P3, BV=BV)

    # explicit VMEM budget sized from the (padded, double-buffered) block footprints
    block_bytes = (
        2 * _padded_block_bytes((1, C, N), x_cf.dtype)        # x block + out block
        + _padded_block_bytes((1, 3 * C, L), bf16)
        + _padded_block_bytes((L, N), bf16)
        + _padded_block_bytes((3 * c2, 3 * C), bf16)
        + _padded_block_bytes((1, C, 2 * c2), bf16)
        + _padded_block_bytes((1, C, 1), f32)
        + _padded_block_bytes((BV * P3, N), bf16)
    )
    vmem_limit = int(max(2 * block_bytes + (8 << 20), 16 << 20))

    out_cf = pl.pallas_call(
        kernel,
        out_shape=jax.ShapeDtypeStruct((B, C, N), x_cf.dtype),
        grid=(B,),
        in_specs=[
            pl.BlockSpec((1, C, N), lambda b: (b, 0, 0)),            # x (channels-first)
            pl.BlockSpec((1, 3 * C, L), lambda b: (b, 0, 0)),        # blockdiag gates
            pl.BlockSpec((L, N), lambda b: (0, 0)),                  # stacked one-hots
            pl.BlockSpec((3 * c2, 3 * C), lambda b: (0, 0)),         # blockdiag wt/wp/wg
            pl.BlockSpec((1, C, 2 * c2), lambda b: (b, 0, 0)),       # wz (BN+drop-path folded)
            pl.BlockSpec((1, C, 1), lambda b: (b, 0, 0)),            # bn shift (drop-path scaled)
            pl.BlockSpec((BV * P3, N), lambda b: (0, 0)),            # max-pool selectors
        ],
        out_specs=pl.BlockSpec((1, C, N), lambda b: (b, 0, 0)),
        compiler_params=pltpu.CompilerParams(
            dimension_semantics=("parallel",),
            vmem_limit_bytes=vmem_limit),
    )(x_cf, gblk, e_stack, wblk, wz_b, sh_b, sel)

    return out_cf.reshape(B, C, D, H, W)        # back to NCDHW (free reshape)


# ---------------------------------------------------------------------------
# Deterministic parameter construction + demo
# ---------------------------------------------------------------------------
def make_params(key, *, planes, reduction, n_datasets):
    C = planes
    c2 = C // 2
    hidden = max(C // reduction, 1)
    ks = jax.random.split(key, 14)
    s = 0.1
    f32 = jnp.float32
    return dict(
        # DomainAttention.fc_1 : Linear(planes -> n_datasets)
        fc1_w=s * jax.random.normal(ks[0], (n_datasets, C), f32),
        fc1_b=s * jax.random.normal(ks[1], (n_datasets,), f32),
        # synthesized SGSELayer params: per dataset, per direction (shared across groups)
        se_w1=s * jax.random.normal(ks[2], (n_datasets, 3, hidden, C), f32),
        se_b1=s * jax.random.normal(ks[3], (n_datasets, 3, hidden), f32),
        se_w2=s * jax.random.normal(ks[4], (n_datasets, 3, C, hidden), f32),
        se_b2=s * jax.random.normal(ks[5], (n_datasets, 3, C), f32),
        # cross_attention 1x1x1 convs, (out_channels, in_channels) orientation
        wt=s * jax.random.normal(ks[6], (c2, C), f32),
        wp=s * jax.random.normal(ks[7], (c2, C), f32),
        wg=s * jax.random.normal(ks[8], (c2, C), f32),
        wz=s * jax.random.normal(ks[9], (C, c2), f32),
        # BatchNorm3d(planes) inference parameters
        bn_gamma=1.0 + s * jax.random.normal(ks[10], (C,), f32),
        bn_beta=s * jax.random.normal(ks[11], (C,), f32),
        bn_mean=s * jax.random.normal(ks[12], (C,), f32),
        bn_var=1.0 + s * jnp.abs(jax.random.normal(ks[13], (C,), f32)),
    )


if __name__ == "__main__":
    # small shapes consistent with the module: planes=32, 8^3 volume, groups=2,
    # num_adapters (n_datasets)=2, reduction=16, drop_path=0.3 (train mode).
    B, C, D, H, W = 2, 32, 8, 8, 8
    groups = 2
    reduction = 16
    n_datasets = 2
    drop_prob = 0.3

    root = jax.random.PRNGKey(0)
    k_x, k_params, k_dp = jax.random.split(root, 3)

    x = jax.random.normal(k_x, (B, C, D, H, W), dtype=jnp.float32)
    params = make_params(k_params, planes=C, reduction=reduction, n_datasets=n_datasets)

    out = domain_attention_forward(
        x, params, groups=groups, drop_prob=drop_prob, dp_key=k_dp
    )
    out = jax.block_until_ready(out)

    assert out.shape == (B, C, D, H, W)
    assert bool(jnp.all(jnp.isfinite(out)))
    print("KERNEL_OK")
</pallas_src>

<mosaic_0001>
module attributes {stable_mosaic.version = 11 : i64} {
  func.func @_fused_kernel(%arg0: i32, %arg1: memref<1x32x512xf32, #tpu.memory_space<vmem>>, %arg2: memref<1x96x24xbf16, #tpu.memory_space<vmem>>, %arg3: memref<24x512xbf16, #tpu.memory_space<vmem>>, %arg4: memref<48x96xbf16, #tpu.memory_space<vmem>>, %arg5: memref<1x32x32xbf16, #tpu.memory_space<vmem>>, %arg6: memref<1x32x1xf32, #tpu.memory_space<vmem>>, %arg7: memref<512x512xbf16, #tpu.memory_space<vmem>>, %arg8: memref<1x32x512xf32, #tpu.memory_space<vmem>>) attributes {dimension_semantics = [#tpu.dimension_semantics<parallel>], iteration_bounds = array<i64: 2>, scalar_prefetch = 0 : i64, scratch_operands = 0 : i64, tpu.core_type = #tpu.core_type<tc>, window_params = [{transform_indices = @transform_0, window_bounds = array<i64: 1, 32, 512>}, {transform_indices = @transform_1, window_bounds = array<i64: 1, 96, 24>}, {pipeline_mode = #tpu.pipeline_mode<synchronous>, transform_indices = @transform_2, window_bounds = array<i64: 24, 512>}, {pipeline_mode = #tpu.pipeline_mode<synchronous>, transform_indices = @transform_3, window_bounds = array<i64: 48, 96>}, {transform_indices = @transform_4, window_bounds = array<i64: 1, 32, 32>}, {transform_indices = @transform_5, window_bounds = array<i64: 1, 32, 1>}, {pipeline_mode = #tpu.pipeline_mode<synchronous>, transform_indices = @transform_6, window_bounds = array<i64: 512, 512>}, {transform_indices = @transform_7, window_bounds = array<i64: 1, 32, 512>}]} {
    %c0 = arith.constant 0 : index
    %c0_0 = arith.constant 0 : index
    %c0_1 = arith.constant 0 : index
    %0 = vector.load %arg1[%c0, %c0_0, %c0_1] : memref<1x32x512xf32, #tpu.memory_space<vmem>>, vector<1x32x512xf32>
    %1 = vector.shape_cast %0 : vector<1x32x512xf32> to vector<32x512xf32>
    %c0_2 = arith.constant 0 : index
    %c0_3 = arith.constant 0 : index
    %c0_4 = arith.constant 0 : index
    %2 = vector.load %arg2[%c0_2, %c0_3, %c0_4] : memref<1x96x24xbf16, #tpu.memory_space<vmem>>, vector<1x96x24xbf16>
    %3 = vector.shape_cast %2 : vector<1x96x24xbf16> to vector<96x24xbf16>
    %c0_5 = arith.constant 0 : index
    %c0_6 = arith.constant 0 : index
    %4 = vector.load %arg3[%c0_5, %c0_6] : memref<24x512xbf16, #tpu.memory_space<vmem>>, vector<24x512xbf16>
    %cst = arith.constant dense<0.000000e+00> : vector<96x512xf32>
    %5 = tpu.matmul %3, %4, %cst {dimension_numbers = #tpu.dot_dimension_numbers<[1], [0], [0], [1], [0, 0, 1, 1], [], []>} : vector<96x24xbf16>, vector<24x512xbf16>, vector<96x512xf32> -> vector<96x512xf32>
    %6 = tpu.concatenate %1, %1, %1 in 0 : vector<32x512xf32>, vector<32x512xf32>, vector<32x512xf32> -> vector<96x512xf32>
    %7 = arith.mulf %6, %5 : vector<96x512xf32>
    %8 = vector.extract_strided_slice %7 {offsets = [0, 0], sizes = [32, 512], strides = [1, 1]} : vector<96x512xf32> to vector<32x512xf32>
    %9 = vector.extract_strided_slice %7 {offsets = [32, 0], sizes = [32, 512], strides = [1, 1]} : vector<96x512xf32> to vector<32x512xf32>
    %10 = arith.addf %8, %9 : vector<32x512xf32>
    %11 = vector.extract_strided_slice %7 {offsets = [64, 0], sizes = [32, 512], strides = [1, 1]} : vector<96x512xf32> to vector<32x512xf32>
    %12 = arith.addf %10, %11 : vector<32x512xf32>
    %cst_7 = arith.constant 0.333333343 : f32
    %13 = vector.broadcast %cst_7 : f32 to vector<32x512xf32>
    %14 = arith.mulf %12, %13 : vector<32x512xf32>
    %c0_8 = arith.constant 0 : index
    %c0_9 = arith.constant 0 : index
    %15 = vector.load %arg4[%c0_8, %c0_9] : memref<48x96xbf16, #tpu.memory_space<vmem>>, vector<48x96xbf16>
    %16 = arith.truncf %7 : vector<96x512xf32> to vector<96x512xbf16>
    %cst_10 = arith.constant dense<0.000000e+00> : vector<48x512xf32>
    %17 = tpu.matmul %15, %16, %cst_10 {dimension_numbers = #tpu.dot_dimension_numbers<[1], [0], [0], [1], [0, 0, 1, 1], [], []>} : vector<48x96xbf16>, vector<96x512xbf16>, vector<48x512xf32> -> vector<48x512xf32>
    %18 = vector.extract_strided_slice %17 {offsets = [0, 0], sizes = [16, 512], strides = [1, 1]} : vector<48x512xf32> to vector<16x512xf32>
    %19 = vector.extract_strided_slice %17 {offsets = [16, 0], sizes = [32, 512], strides = [1, 1]} : vector<48x512xf32> to vector<32x512xf32>
    %c0_11 = arith.constant 0 : index
    %c0_12 = arith.constant 0 : index
    %20 = vector.load %arg7[%c0_11, %c0_12] : memref<512x512xbf16, #tpu.memory_space<vmem>>, vector<512x512xbf16>
    %21 = arith.truncf %19 : vector<32x512xf32> to vector<32x512xbf16>
    %cst_13 = arith.constant dense<0.000000e+00> : vector<512x32xf32>
    %22 = tpu.matmul %20, %21, %cst_13 {dimension_numbers = #tpu.dot_dimension_numbers<[1], [1], [0], [0], [0, 0, 1, 0], [], []>} : vector<512x512xbf16>, vector<32x512xbf16>, vector<512x32xf32> -> vector<512x32xf32>
    %23 = vector.extract_strided_slice %22 {offsets = [0, 0], sizes = [64, 32], strides = [1, 1]} : vector<512x32xf32> to vector<64x32xf32>
    %24 = vector.extract_strided_slice %22 {offsets = [64, 0], sizes = [64, 32], strides = [1, 1]} : vector<512x32xf32> to vector<64x32xf32>
    %25 = vector.extract_strided_slice %22 {offsets = [128, 0], sizes = [64, 32], strides = [1, 1]} : vector<512x32xf32> to vector<64x32xf32>
    %26 = vector.extract_strided_slice %22 {offsets = [192, 0], sizes = [64, 32], strides = [1, 1]} : vector<512x32xf32> to vector<64x32xf32>
    %27 = vector.extract_strided_slice %22 {offsets = [256, 0], sizes = [64, 32], strides = [1, 1]} : vector<512x32xf32> to vector<64x32xf32>
    %28 = vector.extract_strided_slice %22 {offsets = [320, 0], sizes = [64, 32], strides = [1, 1]} : vector<512x32xf32> to vector<64x32xf32>
    %29 = vector.extract_strided_slice %22 {offsets = [384, 0], sizes = [64, 32], strides = [1, 1]} : vector<512x32xf32> to vector<64x32xf32>
    %30 = vector.extract_strided_slice %22 {offsets = [448, 0], sizes = [64, 32], strides = [1, 1]} : vector<512x32xf32> to vector<64x32xf32>
    %31 = arith.maximumf %23, %24 : vector<64x32xf32>
    %32 = arith.maximumf %25, %26 : vector<64x32xf32>
    %33 = arith.maximumf %27, %28 : vector<64x32xf32>
    %34 = arith.maximumf %29, %30 : vector<64x32xf32>
    %35 = arith.maximumf %31, %32 : vector<64x32xf32>
    %36 = arith.maximumf %33, %34 : vector<64x32xf32>
    %37 = arith.maximumf %35, %36 : vector<64x32xf32>
    %38 = vector.extract_strided_slice %37 {offsets = [0, 0], sizes = [64, 16], strides = [1, 1]} : vector<64x32xf32> to vector<64x16xf32>
    %cst_14 = arith.constant dense<0.000000e+00> : vector<64x512xf32>
    %39 = tpu.matmul %38, %18, %cst_14 {dimension_numbers = #tpu.dot_dimension_numbers<[1], [0], [0], [1], [0, 0, 1, 1], [], []>} : vector<64x16xf32>, vector<16x512xf32>, vector<64x512xf32> -> vector<64x512xf32>
    %cst_15 = arith.constant dense<0xFF800000> : vector<512xf32>
    %40 = vector.multi_reduction <maximumf>, %39, %cst_15 [0] : vector<64x512xf32> to vector<512xf32>
    %41 = vector.shape_cast %40 : vector<512xf32> to vector<1x512xf32>
    %42 = vector.broadcast %41 : vector<1x512xf32> to vector<64x512xf32>
    %43 = arith.subf %39, %42 : vector<64x512xf32>
    %44 = math.exp %43 : vector<64x512xf32>
    %cst_16 = arith.constant dense<0.000000e+00> : vector<512xf32>
    %45 = vector.multi_reduction <add>, %44, %cst_16 [0] : vector<64x512xf32> to vector<512xf32>
    %46 = vector.shape_cast %45 : vector<512xf32> to vector<1x512xf32>
    %47 = tpu.reciprocal %46 {approx = true} : vector<1x512xf32> -> vector<1x512xf32>
    %48 = vector.broadcast %47 : vector<1x512xf32> to vector<64x512xf32>
    %49 = arith.mulf %44, %48 : vector<64x512xf32>
    %cst_17 = arith.constant dense<0.000000e+00> : vector<32x512xf32>
    %50 = tpu.matmul %37, %49, %cst_17 {dimension_numbers = #tpu.dot_dimension_numbers<[0], [0], [1], [1], [0, 1, 1, 1], [], []>} : vector<64x32xf32>, vector<64x512xf32>, vector<32x512xf32> -> vector<32x512xf32>
    %c0_18 = arith.constant 0 : index
    %c0_19 = arith.constant 0 : index
    %c0_20 = arith.constant 0 : index
    %51 = vector.load %arg5[%c0_18, %c0_19, %c0_20] : memref<1x32x32xbf16, #tpu.memory_space<vmem>>, vector<1x32x32xbf16>
    %52 = vector.shape_cast %51 : vector<1x32x32xbf16> to vector<32x32xbf16>
    %53 = arith.truncf %50 : vector<32x512xf32> to vector<32x512xbf16>
    %cst_21 = arith.constant dense<0.000000e+00> : vector<32x512xf32>
    %54 = tpu.matmul %52, %53, %cst_21 {dimension_numbers = #tpu.dot_dimension_numbers<[1], [0], [0], [1], [0, 0, 1, 1], [], []>} : vector<32x32xbf16>, vector<32x512xbf16>, vector<32x512xf32> -> vector<32x512xf32>
    %c0_22 = arith.constant 0 : index
    %c0_23 = arith.constant 0 : index
    %c0_24 = arith.constant 0 : index
    %55 = vector.load %arg6[%c0_22, %c0_23, %c0_24] : memref<1x32x1xf32, #tpu.memory_space<vmem>>, vector<1x32x1xf32>
    %56 = vector.shape_cast %55 : vector<1x32x1xf32> to vector<32x1xf32>
    %57 = vector.broadcast %56 : vector<32x1xf32> to vector<32x512xf32>
    %58 = arith.addf %54, %57 : vector<32x512xf32>
    %59 = arith.addf %14, %58 : vector<32x512xf32>
    %c0_25 = arith.constant 0 : index
    %c0_26 = arith.constant 0 : index
    %c0_27 = arith.constant 0 : index
    %60 = vector.load %arg8[%c0_25, %c0_26, %c0_27] : memref<1x32x512xf32, #tpu.memory_space<vmem>>, vector<1x32x512xf32>
    %61 = vector.shape_cast %60 : vector<1x32x512xf32> to vector<32x512xf32>
    %62 = vector.shape_cast %59 : vector<32x512xf32> to vector<1x32x512xf32>
    tpu.vector_store %arg8[%c0_25, %c0_26, %c0_27], %62 {strides = array<i32>} : memref<1x32x512xf32, #tpu.memory_space<vmem>>, vector<1x32x512xf32>,
    return
  }
  func.func @transform_0(%arg0: i32) -> (i32, i32, i32) {
    %c0_i32 = arith.constant 0 : i32
    %c0_i32_0 = arith.constant 0 : i32
    %c0_i32_1 = arith.constant 0 : i32
    return %arg0, %c0_i32, %c0_i32_0 : i32, i32, i32
  }
  func.func @transform_1(%arg0: i32) -> (i32, i32, i32) {
    %c0_i32 = arith.constant 0 : i32
    %c0_i32_0 = arith.constant 0 : i32
    %c0_i32_1 = arith.constant 0 : i32
    return %arg0, %c0_i32, %c0_i32_0 : i32, i32, i32
  }
  func.func @transform_2(%arg0: i32) -> (i32, i32) {
    %c0_i32 = arith.constant 0 : i32
    %c0_i32_0 = arith.constant 0 : i32
    %c0_i32_1 = arith.constant 0 : i32
    return %c0_i32, %c0_i32_0 : i32, i32
  }
  func.func @transform_3(%arg0: i32) -> (i32, i32) {
    %c0_i32 = arith.constant 0 : i32
    %c0_i32_0 = arith.constant 0 : i32
    %c0_i32_1 = arith.constant 0 : i32
    return %c0_i32, %c0_i32_0 : i32, i32
  }
  func.func @transform_4(%arg0: i32) -> (i32, i32, i32) {
    %c0_i32 = arith.constant 0 : i32
    %c0_i32_0 = arith.constant 0 : i32
    %c0_i32_1 = arith.constant 0 : i32
    return %arg0, %c0_i32, %c0_i32_0 : i32, i32, i32
  }
  func.func @transform_5(%arg0: i32) -> (i32, i32, i32) {
    %c0_i32 = arith.constant 0 : i32
    %c0_i32_0 = arith.constant 0 : i32
    %c0_i32_1 = arith.constant 0 : i32
    return %arg0, %c0_i32, %c0_i32_0 : i32, i32, i32
  }
  func.func @transform_6(%arg0: i32) -> (i32, i32) {
    %c0_i32 = arith.constant 0 : i32
    %c0_i32_0 = arith.constant 0 : i32
    %c0_i32_1 = arith.constant 0 : i32
    return %c0_i32, %c0_i32_0 : i32, i32
  }
  func.func @transform_7(%arg0: i32) -> (i32, i32, i32) {
    %c0_i32 = arith.constant 0 : i32
    %c0_i32_0 = arith.constant 0 : i32
    %c0_i32_1 = arith.constant 0 : i32
    return %arg0, %c0_i32, %c0_i32_0 : i32, i32, i32
  }
}

</mosaic_0001>

<llo_original>
// kernel: tpu_custom_call.1
$region0: #{tpu_custom_call.1}
  #allocation0 [shape = 'u32[]', space=smem, size = 0x4, offset = 0x4, fixed_abs, tag = 'smem constant byte address 0x4 - core index']
  #allocation1 [shape = 'u32[72,128]{1,0:T(1,128)}', space=vmem, size = 0x9000, scoped, tag = 'internal scratch']
  %s0 = inlined_call_operand.hbm [shape: f32[2,32,512], index: 0, kind: input, shape index: {}]
  %s1 = inlined_call_operand.vmem [shape: bf16[2,96,24], index: 1, kind: input, shape index: {}]
  %s2 = inlined_call_operand.vmem [shape: bf16[24,512], index: 2, kind: input, shape index: {}]
  %s3 = inlined_call_operand.vmem [shape: bf16[48,96], index: 3, kind: input, shape index: {}]
  %s4 = inlined_call_operand.vmem [shape: bf16[2,32,32], index: 4, kind: input, shape index: {}]
  %s5 = inlined_call_operand.vmem [shape: f32[2,32,1], index: 5, kind: input, shape index: {}]
  %s6 = inlined_call_operand.hbm [shape: bf16[512,512], index: 6, kind: input, shape index: {}]
  %s7 = inlined_call_operand.hbm [shape: f32[2,32,512], index: 7, kind: output, shape index: {}]
  %s8 = sld [smem:[#allocation0]]
  $region69: #{tpu_custom_call.1} parent=0
    _
  %s10 = ssub.s32 1, %s8
  %s11 = scalar_select 0, %s10, %s8
  $region1: #{tpu_custom_call.1} parent=0
    #allocation2 [shape = 'u8[131072]{0}', space=vmem, size = 0x20000, scoped, tag = 'input window, operand 0']
    #allocation3 [shape = 's32[2]{0}', space=sflag, size = 0x8, scoped, tag = 'scoped memory for tpu_custom_call.1']
    #allocation4 [shape = 's32[2]{0}', space=sflag, size = 0x8, scoped, tag = 'scoped memory for tpu_custom_call.1']
    #allocation5 [shape = 'u8[524288]{0}', space=vmem, size = 0x80000, scoped, tag = 'input window, operand 6, single buffered']
    #allocation6 [shape = 's32[1]{0}', space=sflag, size = 0x4, scoped, tag = 'scoped memory for tpu_custom_call.1']
    #allocation7 [shape = 'u8[131072]{0}', space=vmem, size = 0x20000, scoped, tag = 'output window, operand 0']
    %12 = vsyncpa [#allocation3], 0
    %s13 = scalar_lea.sflag [#allocation3], 1
    %14 = vsyncpa %s13, 0
    %15 = vsyncpa [#allocation6], 0
    %16 = vsyncpa [#allocation4], 0
    %s17 = scalar_lea.sflag [#allocation4], 1
    %18 = vsyncpa %s17, 0
    loop: start=0, step=1, limit=4
    $region2: #{tpu_custom_call.1} parent=1 // loop_pre_header
      _
    $region3: #{tpu_custom_call.1} parent=1 // loop_header
      %s20 = sphi 0, %s24
      %p21 = scmp.ge.s32.totalorder %s20, 4
      %s30 = sphi 0, %s32
      %s33 = sphi 0, %s30
      %s34 = sphi 0, %s33
      %s50 = sphi 0, %s34
      %s56 = sphi 0, %s58
      %s59 = sphi 0, %s56
      %s60 = sphi 0, %s59
      %s76 = sphi 0, %s60
      %s80 = sphi 0, %s80
      %s82 = sphi 0, %s80
      %s83 = sphi 0, %s82
      %s97 = sphi 0, %s83
      %s101 = sphi 0, %s101
      %s103 = sphi 0, %s101
      %s104 = sphi 0, %s103
      %s118 = sphi 0, %s104
      %s124 = sphi 0, %s126
      %s127 = sphi 0, %s124
      %s128 = sphi 0, %s127
      %s144 = sphi 0, %s128
      %s150 = sphi 0, %s152
      %s153 = sphi 0, %s150
      %s154 = sphi 0, %s153
      %s170 = sphi 0, %s154
      %s174 = sphi 0, %s174
      %s176 = sphi 0, %s174
      %s177 = sphi 0, %s176
      %s191 = sphi 0, %s177
      %s197 = sphi 0, %s199
      %s200 = sphi 0, %s197
      %s201 = sphi 0, %s200
      %s217 = sphi 0, %s201
    $region4: #{tpu_custom_call.1} parent=1 // loop_header_branch
      %23 = sbr.rel (%p21) target = $region8
    $region5: #{tpu_custom_call.1} parent=1 // loop_body
      %s25 = ssub.s32 %s20, 1
      %s26 = ssub.s32 %s20, 2
      %s27 = sadd.s32 %s20, 1
      %s28 = ssub.s32 %s20, %s27
      %p29 = scmp.eq.s32.totalorder %s28, 0
      %s31 = sadd.s32 %s30, 1
      %s32 = scalar_select %p29, %s30, %s31
      %p35 = pneg %p29
      %p36 = scmp.eq.s32.totalorder %s20, 1
      %p37 = por %p35, %p36
      %p38 = scmp.ne.s32.totalorder %s30, %s33
      %p39 = scmp.eq.s32.totalorder %s20, 0
      %p40 = por %p38, %p39
      %p41 = scmp.ne.s32.totalorder %s30, %s33
      %p42 = scmp.eq.s32.totalorder %s25, 1
      %p43 = por %p41, %p42
      %p44 = scmp.ne.s32.totalorder %s33, %s34
      %p45 = scmp.eq.s32.totalorder %s25, 0
      %p46 = por %p44, %p45
      %p47 = scmp.ne.s32.totalorder %s33, %s34
      %p48 = scmp.eq.s32.totalorder %s26, 1
      %p49 = por %p47, %p48
      %p51 = scmp.ne.s32.totalorder %s34, %s50
      %p52 = scmp.eq.s32.totalorder %s26, 0
      %p53 = por %p51, %p52
      %s54 = ssub.s32 %s20, %s27
      %p55 = scmp.eq.s32.totalorder %s54, 0
      %s57 = sadd.s32 %s56, 1
      %s58 = scalar_select %p55, %s56, %s57
      %p61 = pneg %p55
      %p62 = scmp.eq.s32.totalorder %s20, 1
      %p63 = por %p61, %p62
      %p64 = scmp.ne.s32.totalorder %s56, %s59
      %p65 = scmp.eq.s32.totalorder %s20, 0
      %p66 = por %p64, %p65
      %p67 = scmp.ne.s32.totalorder %s56, %s59
      %p68 = scmp.eq.s32.totalorder %s25, 1
      %p69 = por %p67, %p68
      %p70 = scmp.ne.s32.totalorder %s59, %s60
      %p71 = scmp.eq.s32.totalorder %s25, 0
      %p72 = por %p70, %p71
      %p73 = scmp.ne.s32.totalorder %s59, %s60
      %p74 = scmp.eq.s32.totalorder %s26, 1
      %p75 = por %p73, %p74
      %p77 = scmp.ne.s32.totalorder %s60, %s76
      %p78 = scmp.eq.s32.totalorder %s26, 0
      %p79 = por %p77, %p78
      %s81 = sadd.s32 %s80, 1
      %p84 = scmp.eq.s32.totalorder %s20, 1
      %p85 = scmp.ne.s32.totalorder %s80, %s82
      %p86 = scmp.eq.s32.totalorder %s20, 0
      %p87 = por %p85, %p86
      %p88 = scmp.ne.s32.totalorder %s80, %s82
      %p89 = scmp.eq.s32.totalorder %s25, 1
      %p90 = por %p88, %p89
      %p91 = scmp.ne.s32.totalorder %s82, %s83
      %p92 = scmp.eq.s32.totalorder %s25, 0
      %p93 = por %p91, %p92
      %p94 = scmp.ne.s32.totalorder %s82, %s83
      %p95 = scmp.eq.s32.totalorder %s26, 1
      %p96 = por %p94, %p95
      %p98 = scmp.ne.s32.totalorder %s83, %s97
      %p99 = scmp.eq.s32.totalorder %s26, 0
      %p100 = por %p98, %p99
      %s102 = sadd.s32 %s101, 1
      %p105 = scmp.eq.s32.totalorder %s20, 1
      %p106 = scmp.ne.s32.totalorder %s101, %s103
      %p107 = scmp.eq.s32.totalorder %s20, 0
      %p108 = por %p106, %p107
      %p109 = scmp.ne.s32.totalorder %s101, %s103
      %p110 = scmp.eq.s32.totalorder %s25, 1
      %p111 = por %p109, %p110
      %p112 = scmp.ne.s32.totalorder %s103, %s104
      %p113 = scmp.eq.s32.totalorder %s25, 0
      %p114 = por %p112, %p113
      %p115 = scmp.ne.s32.totalorder %s103, %s104
      %p116 = scmp.eq.s32.totalorder %s26, 1
      %p117 = por %p115, %p116
      %p119 = scmp.ne.s32.totalorder %s104, %s118
      %p120 = scmp.eq.s32.totalorder %s26, 0
      %p121 = por %p119, %p120
      %s122 = ssub.s32 %s20, %s27
      %p123 = scmp.eq.s32.totalorder %s122, 0
      %s125 = sadd.s32 %s124, 1
      %s126 = scalar_select %p123, %s124, %s125
      %p129 = pneg %p123
      %p130 = scmp.eq.s32.totalorder %s20, 1
      %p131 = por %p129, %p130
      %p132 = scmp.ne.s32.totalorder %s124, %s127
      %p133 = scmp.eq.s32.totalorder %s20, 0
      %p134 = por %p132, %p133
      %p135 = scmp.ne.s32.totalorder %s124, %s127
      %p136 = scmp.eq.s32.totalorder %s25, 1
      %p137 = por %p135, %p136
      %p138 = scmp.ne.s32.totalorder %s127, %s128
      %p139 = scmp.eq.s32.totalorder %s25, 0
      %p140 = por %p138, %p139
      %p141 = scmp.ne.s32.totalorder %s127, %s128
      %p142 = scmp.eq.s32.totalorder %s26, 1
      %p143 = por %p141, %p142
      %p145 = scmp.ne.s32.totalorder %s128, %s144
      %p146 = scmp.eq.s32.totalorder %s26, 0
      %p147 = por %p145, %p146
      %s148 = ssub.s32 %s20, %s27
      %p149 = scmp.eq.s32.totalorder %s148, 0
      %s151 = sadd.s32 %s150, 1
      %s152 = scalar_select %p149, %s150, %s151
      %p155 = pneg %p149
      %p156 = scmp.eq.s32.totalorder %s20, 1
      %p157 = por %p155, %p156
      %p158 = scmp.ne.s32.totalorder %s150, %s153
      %p159 = scmp.eq.s32.totalorder %s20, 0
      %p160 = por %p158, %p159
      %p161 = scmp.ne.s32.totalorder %s150, %s153
      %p162 = scmp.eq.s32.totalorder %s25, 1
      %p163 = por %p161, %p162
      %p164 = scmp.ne.s32.totalorder %s153, %s154
      %p165 = scmp.eq.s32.totalorder %s25, 0
      %p166 = por %p164, %p165
      %p167 = scmp.ne.s32.totalorder %s153, %s154
      %p168 = scmp.eq.s32.totalorder %s26, 1
      %p169 = por %p167, %p168
      %p171 = scmp.ne.s32.totalorder %s154, %s170
      %p172 = scmp.eq.s32.totalorder %s26, 0
      %p173 = por %p171, %p172
      %s175 = sadd.s32 %s174, 1
      %p178 = scmp.eq.s32.totalorder %s20, 1
      %p179 = scmp.ne.s32.totalorder %s174, %s176
      %p180 = scmp.eq.s32.totalorder %s20, 0
      %p181 = por %p179, %p180
      %p182 = scmp.ne.s32.totalorder %s174, %s176
      %p183 = scmp.eq.s32.totalorder %s25, 1
      %p184 = por %p182, %p183
      %p185 = scmp.ne.s32.totalorder %s176, %s177
      %p186 = scmp.eq.s32.totalorder %s25, 0
      %p187 = por %p185, %p186
      %p188 = scmp.ne.s32.totalorder %s176, %s177
      %p189 = scmp.eq.s32.totalorder %s26, 1
      %p190 = por %p188, %p189
      %p192 = scmp.ne.s32.totalorder %s177, %s191
      %p193 = scmp.eq.s32.totalorder %s26, 0
      %p194 = por %p192, %p193
      %s195 = ssub.s32 %s20, %s27
      %p196 = scmp.eq.s32.totalorder %s195, 0
      %s198 = sadd.s32 %s197, 1
      %s199 = scalar_select %p196, %s197, %s198
      %p202 = pneg %p196
      %p203 = scmp.eq.s32.totalorder %s20, 1
      %p204 = por %p202, %p203
      %p205 = scmp.ne.s32.totalorder %s197, %s200
      %p206 = scmp.eq.s32.totalorder %s20, 0
      %p207 = por %p205, %p206
      %p208 = scmp.ne.s32.totalorder %s197, %s200
      %p209 = scmp.eq.s32.totalorder %s25, 1
      %p210 = por %p208, %p209
      %p211 = scmp.ne.s32.totalorder %s200, %s201
      %p212 = scmp.eq.s32.totalorder %s25, 0
      %p213 = por %p211, %p212
      %p214 = scmp.ne.s32.totalorder %s200, %s201
      %p215 = scmp.eq.s32.totalorder %s26, 1
      %p216 = por %p214, %p215
      %p218 = scmp.ne.s32.totalorder %s201, %s217
      %p219 = scmp.eq.s32.totalorder %s26, 0
      %p220 = por %p218, %p219
      %p221 = scmp.le.s32.totalorder 1, %s20
      %p222 = scmp.lt.s32.totalorder %s20, 3
      %p223 = pnand %p221, %p222
      %p224 = pneg %p223
      // Predicated region
      $region9: #{tpu_custom_call.1} parent=5 // pred_check
        _
      $region10: #{tpu_custom_call.1} parent=5 // pred_check_branch
        %226 = sbr.rel (%p223) target = $region12
      $region11: #{tpu_custom_call.1} parent=5 // pred_region
        %s227 = ssub.s32 %s20, 1
        // Predicated region
        $region13: #{tpu_custom_call.1} parent=11 // pred_check
          %p228 = pneg %p93
        $region14: #{tpu_custom_call.1} parent=11 // pred_check_branch
          %230 = sbr.rel (%p228) target = $region16
        $region15: #{tpu_custom_call.1} parent=11 // pred_region
          _
        $region16: #{tpu_custom_call.1} parent=11 // pred_fallthru
          _
        // Predicated region
        $region17: #{tpu_custom_call.1} parent=11 // pred_check
          %p231 = pneg %p114
        $region18: #{tpu_custom_call.1} parent=11 // pred_check_branch
          %233 = sbr.rel (%p231) target = $region20
        $region19: #{tpu_custom_call.1} parent=11 // pred_region
          _
        $region20: #{tpu_custom_call.1} parent=11 // pred_fallthru
          _
        // Predicated region
        $region21: #{tpu_custom_call.1} parent=11 // pred_check
          %p234 = pneg %p187
        $region22: #{tpu_custom_call.1} parent=11 // pred_check_branch
          %236 = sbr.rel (%p234) target = $region24
        $region23: #{tpu_custom_call.1} parent=11 // pred_region
          %238 = vsyncadd [#allocation6], 0
          %s239 = sshll.u32 %s6, 4
          %s240 = int_to_ptr.hbm [resolvable:$true] %s239
          %s241 = sshll.u32 [#allocation5], 4
          %s242 = int_to_ptr.vmem [resolvable:$true] %s241
          %247 = dma.hbm_to_vmem [thread:$0]  %s240, 16384, %s242, [#allocation6], 256, 256, 16
        $region24: #{tpu_custom_call.1} parent=11 // pred_fallthru
          _
      $region12: #{tpu_custom_call.1} parent=5 // pred_fallthru
        _
      %p248 = scmp.lt.s32.totalorder %s20, 2
      // Predicated region
      $region25: #{tpu_custom_call.1} parent=5 // pred_check
        %p249 = pneg %p248
      $region26: #{tpu_custom_call.1} parent=5 // pred_check_branch
        %251 = sbr.rel (%p249) target = $region28
      $region27: #{tpu_custom_call.1} parent=5 // pred_region
        // Predicated region
        $region29: #{tpu_custom_call.1} parent=27 // pred_check
          %p252 = pneg %p40
        $region30: #{tpu_custom_call.1} parent=27 // pred_check_branch
          %254 = sbr.rel (%p252) target = $region32
        $region31: #{tpu_custom_call.1} parent=27 // pred_region
          %s255 = sand.u32 %s30, 1
          %s256 = scalar_lea.sflag [#allocation3], %s255
          %s257 = sand.u32 %s30, 1
          %s258 = smul.addr %s257, 128
          %s259 = scalar_lea.vmem [#allocation2], %s258
          %261 = vsyncadd %s256, 0
          %s262 = smul.addr %s20, 16
          %s263 = smul.addr %s262, 8
          %s264 = scalar_lea.hbm %s0, %s263
          %s265 = sshll.u32 %s264, 4
          %s266 = int_to_ptr.hbm [resolvable:$true] %s265
          %s267 = sshll.u32 %s259, 4
          %s268 = int_to_ptr.vmem [resolvable:$true] %s267
          %273 = dma.hbm_to_vmem [thread:$0]  %s266, 2048, %s268, %s256, 512, 512, 32
        $region32: #{tpu_custom_call.1} parent=27 // pred_fallthru
          _
        // Predicated region
        $region33: #{tpu_custom_call.1} parent=27 // pred_check
          %p274 = pneg %p66
        $region34: #{tpu_custom_call.1} parent=27 // pred_check_branch
          %276 = sbr.rel (%p274) target = $region36
        $region35: #{tpu_custom_call.1} parent=27 // pred_region
          %p277 = scmp.lt.s32.totalorder %s20, 1
          %s278 = scalar_select %p277, %s20, 1
          %s279 = smul.addr %s278, 12
          %s280 = smul.addr %s279, 4
          %s281 = scalar_lea.vmem %s1, %s280
        $region36: #{tpu_custom_call.1} parent=27 // pred_fallthru
          _
        // Predicated region
        $region37: #{tpu_custom_call.1} parent=27 // pred_check
          %p282 = pneg %p134
        $region38: #{tpu_custom_call.1} parent=27 // pred_check_branch
          %284 = sbr.rel (%p282) target = $region40
        $region39: #{tpu_custom_call.1} parent=27 // pred_region
          %p285 = scmp.lt.s32.totalorder %s20, 1
          %s286 = scalar_select %p285, %s20, 1
          %s287 = smul.addr %s286, 4
          %s288 = smul.addr %s287, 4
          %s289 = scalar_lea.vmem %s4, %s288
        $region40: #{tpu_custom_call.1} parent=27 // pred_fallthru
          _
        // Predicated region
        $region41: #{tpu_custom_call.1} parent=27 // pred_check
          %p290 = pneg %p160
        $region42: #{tpu_custom_call.1} parent=27 // pred_check_branch
          %292 = sbr.rel (%p290) target = $region44
        $region43: #{tpu_custom_call.1} parent=27 // pred_region
          %p293 = scmp.lt.s32.totalorder %s20, 1
          %s294 = scalar_select %p293, %s20, 1
          %s295 = smul.addr %s294, 4
          %s296 = smul.addr %s295, 8
          %s297 = scalar_lea.vmem %s5, %s296
        $region44: #{tpu_custom_call.1} parent=27 // pred_fallthru
          _
      $region28: #{tpu_custom_call.1} parent=5 // pred_fallthru
        _
      %p298 = scmp.le.s32.totalorder 1, %s20
      %p299 = scmp.lt.s32.totalorder %s20, 3
      %p300 = pnand %p298, %p299
      %p301 = pneg %p300
      // Predicated region
      $region45: #{tpu_custom_call.1} parent=5 // pred_check
        _
      $region46: #{tpu_custom_call.1} parent=5 // pred_check_branch
        %303 = sbr.rel (%p300) target = $region48
      $region47: #{tpu_custom_call.1} parent=5 // pred_region
        %s304 = ssub.s32 %s20, 1
        %s305 = sand.u32 %s33, 1
        %s306 = scalar_lea.sflag [#allocation3], %s305
        %s307 = sand.u32 %s33, 1
        %s308 = smul.addr %s307, 128
        %s309 = scalar_lea.vmem [#allocation2], %s308
        // Predicated region
        $region49: #{tpu_custom_call.1} parent=47 // pred_check
          %p310 = pneg %p46
        $region50: #{tpu_custom_call.1} parent=47 // pred_check_branch
          %312 = sbr.rel (%p310) target = $region52
        $region51: #{tpu_custom_call.1} parent=47 // pred_region
          %314 = dma.done %s306, 2048
        $region52: #{tpu_custom_call.1} parent=47 // pred_fallthru
          _
        // Predicated region
        $region53: #{tpu_custom_call.1} parent=47 // pred_check
          %p315 = pneg %p187
        $region54: #{tpu_custom_call.1} parent=47 // pred_check_branch
          %317 = sbr.rel (%p315) target = $region56
        $region55: #{tpu_custom_call.1} parent=47 // pred_region
          %319 = dma.done [#allocation6], 16384
        $region56: #{tpu_custom_call.1} parent=47 // pred_fallthru
          _
        %s320 = sand.u32 %s33, 1
        %s321 = scalar_lea.sflag [#allocation3], %s320
        %s322 = sand.u32 %s33, 1
        %s323 = smul.addr %s322, 128
        %s324 = scalar_lea.vmem [#allocation2], %s323
        %p325 = pneg %p46
        %p326 = pneg %p43
        %p327 = scmp.lt.s32.totalorder %s25, 1
        %s328 = scalar_select %p327, %s25, 1
        %s329 = smul.addr %s328, 12
        %s330 = smul.addr %s329, 4
        %s331 = scalar_lea.vmem %s1, %s330
        %p332 = pneg %p72
        %p333 = pneg %p69
        %p334 = pneg %p93
        %p335 = pneg %p90
        %p336 = pneg %p114
        %p337 = pneg %p111
        %p338 = scmp.lt.s32.totalorder %s25, 1
        %s339 = scalar_select %p338, %s25, 1
        %s340 = smul.addr %s339, 4
        %s341 = smul.addr %s340, 4
        %s342 = scalar_lea.vmem %s4, %s341
        %p343 = pneg %p140
        %p344 = pneg %p137
        %p345 = scmp.lt.s32.totalorder %s25, 1
        %s346 = scalar_select %p345, %s25, 1
        %s347 = smul.addr %s346, 4
        %s348 = smul.addr %s347, 8
        %s349 = scalar_lea.vmem %s5, %s348
        %p350 = pneg %p166
        %p351 = pneg %p163
        %p352 = pneg %p187
        %p353 = pneg %p184
        %p354 = pneg %p213
        %p355 = pneg %p210
        %s356 = sand.u32 %s200, 1
        %s357 = scalar_lea.sflag [#allocation4], %s356
        %s358 = sand.u32 %s200, 1
        %s359 = smul.addr %s358, 128
        %s360 = scalar_lea.vmem [#allocation7], %s359
        %p361 = scmp.lt.s32.totalorder %s25, 1
        %s362 = scalar_select %p361, %s25, 1
        %s363 = smul.addr %s362, 12
        %s364 = smul.addr %s363, 4
        %s365 = scalar_lea.vmem %s1, %s364
        %p366 = scmp.lt.s32.totalorder %s25, 1
        %s367 = scalar_select %p366, %s25, 1
        %s368 = smul.addr %s367, 4
        %s369 = smul.addr %s368, 4
        %s370 = scalar_lea.vmem %s4, %s369
        %p371 = scmp.lt.s32.totalorder %s25, 1
        %s372 = scalar_select %p371, %s25, 1
        %s373 = smul.addr %s372, 4
        %s374 = smul.addr %s373, 8
        %s375 = scalar_lea.vmem %s5, %s374
        %v377 = vld [vmem:[%s309] sm:$0xff]
        %v378 = vld [vmem:[%s309 + $0x8] sm:$0xff]
        %v379 = vld [vmem:[%s309 + $0x10] sm:$0xff]
        %v380 = vld [vmem:[%s309 + $0x18] sm:$0xff]
        %v381 = vld [vmem:[%s309 + $0x20] sm:$0xff]
        %v382 = vld [vmem:[%s309 + $0x28] sm:$0xff]
        %v383 = vld [vmem:[%s309 + $0x30] sm:$0xff]
        %v384 = vld [vmem:[%s309 + $0x38] sm:$0xff]
        %v385 = vld [vmem:[%s309 + $0x40] sm:$0xff]
        %v386 = vld [vmem:[%s309 + $0x48] sm:$0xff]
        %v387 = vld [vmem:[%s309 + $0x50] sm:$0xff]
        %v388 = vld [vmem:[%s309 + $0x58] sm:$0xff]
        %v389 = vld [vmem:[%s309 + $0x60] sm:$0xff]
        %v390 = vld [vmem:[%s309 + $0x68] sm:$0xff]
        %v391 = vld [vmem:[%s309 + $0x70] sm:$0xff]
        %v392 = vld [vmem:[%s309 + $0x78] sm:$0xff]
        %v393 = vld [vmem:[%s365] sm:$0xf]
        %v394 = vld [vmem:[%s365 + $0x4] sm:$0xf]
        %v395 = vld [vmem:[%s365 + $0x8] sm:$0xf]
        %v396 = vld [vmem:[%s365 + $0xc] sm:$0xf]
        %v397 = vld [vmem:[%s365 + $0x10] sm:$0xf]
        %v398 = vld [vmem:[%s365 + $0x14] sm:$0xf]
        %v399 = vld [vmem:[%s365 + $0x18] sm:$0xf]
        %v400 = vld [vmem:[%s365 + $0x1c] sm:$0xf]
        %v401 = vld [vmem:[%s365 + $0x20] sm:$0xf]
        %v402 = vld [vmem:[%s365 + $0x24] sm:$0xf]
        %v403 = vld [vmem:[%s365 + $0x28] sm:$0xf]
        %v404 = vld [vmem:[%s365 + $0x2c] sm:$0xf]
        %v405 = vld [vmem:[%s2] sm:$0xff]
        %v406 = vld [vmem:[%s2 + $0x8] sm:$0xff]
        %v407 = vld [vmem:[%s2 + $0x10] sm:$0xff]
        %v408 = vld [vmem:[%s2 + $0x18] sm:$0xff]
        %v409 = vld [vmem:[%s2 + $0x20] sm:$0xff]
        %v410 = vld [vmem:[%s2 + $0x28] sm:$0xff]
        %v423 = vunpack.c.l.b16 %v393
        %v424 = vunpack.c.l.b16 %v394
        %v425 = vunpack.c.l.b16 %v395
        %v426 = vunpack.c.l.b16 %v396
        %v427 = vunpack.c.l.b16 %v397
        %v428 = vunpack.c.l.b16 %v398
        %v429 = vunpack.c.l.b16 %v399
        %v430 = vunpack.c.l.b16 %v400
        %v431 = vunpack.c.l.b16 %v401
        %v432 = vunpack.c.l.b16 %v402
        %v433 = vunpack.c.l.b16 %v403
        %v434 = vunpack.c.l.b16 %v404
        %v435 = vpack.c.b16 %v424, %v423
        %v436 = vpack.c.b16 %v426, %v425
        %v437 = vpack.c.b16 %v428, %v427
        %v438 = vpack.c.b16 %v430, %v429
        %v439 = vpack.c.b16 %v432, %v431
        %v440 = vpack.c.b16 %v434, %v433
        %v447 = vunpack.c.l.b16 %v405
        %v448 = vunpack.c.h.b16 %v405
        %v449 = vunpack.c.l.b16 %v406
        %v450 = vunpack.c.h.b16 %v406
        %v451 = vunpack.c.l.b16 %v407
        %v452 = vunpack.c.h.b16 %v407
        %v453 = vunpack.c.l.b16 %v408
        %v454 = vunpack.c.h.b16 %v408
        %v455 = vunpack.c.l.b16 %v409
        %v456 = vunpack.c.h.b16 %v409
        %v457 = vunpack.c.l.b16 %v410
        %v458 = vunpack.c.h.b16 %v410
        %v459 = vpack.c.b16 %v451, %v447
        %v460 = vpack.c.b16 %v452, %v448
        %v461 = vpack.c.b16 %v453, %v449
        %v462 = vpack.c.b16 %v454, %v450
        %v463 = vpack.c.b16 %v455, %v455
        %v464 = vpack.c.b16 %v456, %v456
        %v465 = vpack.c.b16 %v457, %v457
        %v466 = vpack.c.b16 %v458, %v458
        %vm471 = vcmask 195584
        %v473 = vsel %vm471, %v435, 0
        %v476 = vsel %vm471, %v436, 0
        %v479 = vsel %vm471, %v437, 0
        %v482 = vsel %vm471, %v438, 0
        %v485 = vsel %vm471, %v439, 0
        %v488 = vsel %vm471, %v440, 0
        %vm490 = vcmask 1043456
        %v492 = vsel %vm490, %v463, 0
        %v495 = vsel %vm490, %v464, 0
        %v498 = vsel %vm490, %v465, 0
        %v501 = vsel %vm490, %v466, 0
        %503 = vmatpush.bf16.msra.mxu0 0
        %504 = vmatpush.bf16.msra.mxu0 0
        %505 = vmatpush.bf16.msra.mxu0 0
        %506 = vmatpush.bf16.msra.mxu0 0
        %507 = vmatpush.bf16.msra.mxu0 0
        %508 = vmatpush.bf16.msra.mxu0 0
        %509 = vmatpush.bf16.msra.mxu0 %v492
        %510 = vmatpush.bf16.msra.mxu0 %v459
        %511 = vmatmul.bf16.gmra.mxu0 %v473
        %v512 = vpop.f32.mrf.mxu0
        %v513 = vadd.f32 0.0, %v512
        %v514 = vpop.f32.mrf.mxu0
        %v515 = vadd.f32 0.0, %v514
        %516 = vmatmul.bf16.gmra.mxu0 %v476
        %v517 = vpop.f32.mrf.mxu0
        %v518 = vadd.f32 0.0, %v517
        %v519 = vpop.f32.mrf.mxu0
        %v520 = vadd.f32 0.0, %v519
        %521 = vmatmul.bf16.gmra.mxu0 %v479
        %v522 = vpop.f32.mrf.mxu0
        %v523 = vadd.f32 0.0, %v522
        %v524 = vpop.f32.mrf.mxu0
        %v525 = vadd.f32 0.0, %v524
        %526 = vmatmul.bf16.gmra.mxu0 %v482
        %v527 = vpop.f32.mrf.mxu0
        %v528 = vadd.f32 0.0, %v527
        %v529 = vpop.f32.mrf.mxu0
        %v530 = vadd.f32 0.0, %v529
        %531 = vmatmul.bf16.gmra.mxu0 %v485
        %v532 = vpop.f32.mrf.mxu0
        %v533 = vadd.f32 0.0, %v532
        %v534 = vpop.f32.mrf.mxu0
        %v535 = vadd.f32 0.0, %v534
        %536 = vmatmul.bf16.gmra.mxu0 %v488
        %v537 = vpop.f32.mrf.mxu0
        %v538 = vadd.f32 0.0, %v537
        %v539 = vpop.f32.mrf.mxu0
        %v540 = vadd.f32 0.0, %v539
        %541 = vdwg.mxu0
        %542 = vmatpush.bf16.msra.mxu0 0
        %543 = vmatpush.bf16.msra.mxu0 0
        %544 = vmatpush.bf16.msra.mxu0 0
        %545 = vmatpush.bf16.msra.mxu0 0
        %546 = vmatpush.bf16.msra.mxu0 0
        %547 = vmatpush.bf16.msra.mxu0 0
        %548 = vmatpush.bf16.msra.mxu0 %v495
        %549 = vmatpush.bf16.msra.mxu0 %v460
        %550 = vmatmul.bf16.gmra.mxu0 %v473
        %v551 = vpop.f32.mrf.mxu0
        %v552 = vadd.f32 0.0, %v551
        %v553 = vpop.f32.mrf.mxu0
        %v554 = vadd.f32 0.0, %v553
        %555 = vmatmul.bf16.gmra.mxu0 %v476
        %v556 = vpop.f32.mrf.mxu0
        %v557 = vadd.f32 0.0, %v556
        %v558 = vpop.f32.mrf.mxu0
        %v559 = vadd.f32 0.0, %v558
        %560 = vmatmul.bf16.gmra.mxu0 %v479
        %v561 = vpop.f32.mrf.mxu0
        %v562 = vadd.f32 0.0, %v561
        %v563 = vpop.f32.mrf.mxu0
        %v564 = vadd.f32 0.0, %v563
        %565 = vmatmul.bf16.gmra.mxu0 %v482
        %v566 = vpop.f32.mrf.mxu0
        %v567 = vadd.f32 0.0, %v566
        %v568 = vpop.f32.mrf.mxu0
        %v569 = vadd.f32 0.0, %v568
        %570 = vmatmul.bf16.gmra.mxu0 %v485
        %v571 = vpop.f32.mrf.mxu0
        %v572 = vadd.f32 0.0, %v571
        %v573 = vpop.f32.mrf.mxu0
        %v574 = vadd.f32 0.0, %v573
        %575 = vmatmul.bf16.gmra.mxu0 %v488
        %v576 = vpop.f32.mrf.mxu0
        %v577 = vadd.f32 0.0, %v576
        %v578 = vpop.f32.mrf.mxu0
        %v579 = vadd.f32 0.0, %v578
        %580 = vdwg.mxu0
        %581 = vmatpush.bf16.msra.mxu0 0
        %582 = vmatpush.bf16.msra.mxu0 0
        %583 = vmatpush.bf16.msra.mxu0 0
        %584 = vmatpush.bf16.msra.mxu0 0
        %585 = vmatpush.bf16.msra.mxu0 0
        %586 = vmatpush.bf16.msra.mxu0 0
        %587 = vmatpush.bf16.msra.mxu0 %v498
        %588 = vmatpush.bf16.msra.mxu0 %v461
        %589 = vmatmul.bf16.gmra.mxu0 %v473
        %v590 = vpop.f32.mrf.mxu0
        %v591 = vadd.f32 0.0, %v590
        %v592 = vpop.f32.mrf.mxu0
        %v593 = vadd.f32 0.0, %v592
        %594 = vmatmul.bf16.gmra.mxu0 %v476
        %v595 = vpop.f32.mrf.mxu0
        %v596 = vadd.f32 0.0, %v595
        %v597 = vpop.f32.mrf.mxu0
        %v598 = vadd.f32 0.0, %v597
        %599 = vmatmul.bf16.gmra.mxu0 %v479
        %v600 = vpop.f32.mrf.mxu0
        %v601 = vadd.f32 0.0, %v600
        %v602 = vpop.f32.mrf.mxu0
        %v603 = vadd.f32 0.0, %v602
        %604 = vmatmul.bf16.gmra.mxu0 %v482
        %v605 = vpop.f32.mrf.mxu0
        %v606 = vadd.f32 0.0, %v605
        %v607 = vpop.f32.mrf.mxu0
        %v608 = vadd.f32 0.0, %v607
        %609 = vmatmul.bf16.gmra.mxu0 %v485
        %v610 = vpop.f32.mrf.mxu0
        %v611 = vadd.f32 0.0, %v610
        %v612 = vpop.f32.mrf.mxu0
        %v613 = vadd.f32 0.0, %v612
        %614 = vmatmul.bf16.gmra.mxu0 %v488
        %v615 = vpop.f32.mrf.mxu0
        %v616 = vadd.f32 0.0, %v615
        %v617 = vpop.f32.mrf.mxu0
        %v618 = vadd.f32 0.0, %v617
        %619 = vdwg.mxu0
        %620 = vmatpush.bf16.msra.mxu0 0
        %621 = vmatpush.bf16.msra.mxu0 0
        %622 = vmatpush.bf16.msra.mxu0 0
        %623 = vmatpush.bf16.msra.mxu0 0
        %624 = vmatpush.bf16.msra.mxu0 0
        %625 = vmatpush.bf16.msra.mxu0 0
        %626 = vmatpush.bf16.msra.mxu0 %v501
        %627 = vmatpush.bf16.msra.mxu0 %v462
        %628 = vmatmul.bf16.gmra.mxu0 %v473
        %v629 = vpop.f32.mrf.mxu0
        %v630 = vadd.f32 0.0, %v629
        %v631 = vpop.f32.mrf.mxu0
        %v632 = vadd.f32 0.0, %v631
        %633 = vmatmul.bf16.gmra.mxu0 %v476
        %v634 = vpop.f32.mrf.mxu0
        %v635 = vadd.f32 0.0, %v634
        %v636 = vpop.f32.mrf.mxu0
        %v637 = vadd.f32 0.0, %v636
        %638 = vmatmul.bf16.gmra.mxu0 %v479
        %v639 = vpop.f32.mrf.mxu0
        %v640 = vadd.f32 0.0, %v639
        %v641 = vpop.f32.mrf.mxu0
        %v642 = vadd.f32 0.0, %v641
        %643 = vmatmul.bf16.gmra.mxu0 %v482
        %v644 = vpop.f32.mrf.mxu0
        %v645 = vadd.f32 0.0, %v644
        %v646 = vpop.f32.mrf.mxu0
        %v647 = vadd.f32 0.0, %v646
        %648 = vmatmul.bf16.gmra.mxu0 %v485
        %v649 = vpop.f32.mrf.mxu0
        %v650 = vadd.f32 0.0, %v649
        %v651 = vpop.f32.mrf.mxu0
        %v652 = vadd.f32 0.0, %v651
        %653 = vmatmul.bf16.gmra.mxu0 %v488
        %v654 = vpop.f32.mrf.mxu0
        %v655 = vadd.f32 0.0, %v654
        %v656 = vpop.f32.mrf.mxu0
        %v657 = vadd.f32 0.0, %v656
        %658 = vdwg.mxu0
        %v659 = vmul.f32 %v377, %v513
        %v660 = vmul.f32 %v378, %v552
        %v661 = vmul.f32 %v379, %v591
        %v662 = vmul.f32 %v380, %v630
        %v663 = vmul.f32 %v381, %v515
        %v664 = vmul.f32 %v382, %v554
        %v665 = vmul.f32 %v383, %v593
        %v666 = vmul.f32 %v384, %v632
        %v667 = vmul.f32 %v385, %v518
        %v668 = vmul.f32 %v386, %v557
        %v669 = vmul.f32 %v387, %v596
        %v670 = vmul.f32 %v388, %v635
        %v671 = vmul.f32 %v389, %v520
        %v672 = vmul.f32 %v390, %v559
        %v673 = vmul.f32 %v391, %v598
        %v674 = vmul.f32 %v392, %v637
        %v675 = vmul.f32 %v377, %v523
        %v676 = vmul.f32 %v378, %v562
        %v677 = vmul.f32 %v379, %v601
        %v678 = vmul.f32 %v380, %v640
        %v679 = vmul.f32 %v381, %v525
        %v680 = vmul.f32 %v382, %v564
        %v681 = vmul.f32 %v383, %v603
        %v682 = vmul.f32 %v384, %v642
        %v683 = vmul.f32 %v385, %v528
        %v684 = vmul.f32 %v386, %v567
        %v685 = vmul.f32 %v387, %v606
        %v686 = vmul.f32 %v388, %v645
        %v687 = vmul.f32 %v389, %v530
        %v688 = vmul.f32 %v390, %v569
        %v689 = vmul.f32 %v391, %v608
        %v690 = vmul.f32 %v392, %v647
        %v691 = vmul.f32 %v377, %v533
        %v692 = vmul.f32 %v378, %v572
        %v693 = vmul.f32 %v379, %v611
        %v694 = vmul.f32 %v380, %v650
        %v695 = vmul.f32 %v381, %v535
        %v696 = vmul.f32 %v382, %v574
        %v697 = vmul.f32 %v383, %v613
        %v698 = vmul.f32 %v384, %v652
        %v699 = vmul.f32 %v385, %v538
        %v700 = vmul.f32 %v386, %v577
        %v701 = vmul.f32 %v387, %v616
        %v702 = vmul.f32 %v388, %v655
        %v703 = vmul.f32 %v389, %v540
        %v704 = vmul.f32 %v390, %v579
        %v705 = vmul.f32 %v391, %v618
        %v706 = vmul.f32 %v392, %v657
        %v707 = vadd.f32 %v659, %v675
        %v708 = vadd.f32 %v660, %v676
        %v709 = vadd.f32 %v661, %v677
        %v710 = vadd.f32 %v662, %v678
        %v711 = vadd.f32 %v663, %v679
        %v712 = vadd.f32 %v664, %v680
        %v713 = vadd.f32 %v665, %v681
        %v714 = vadd.f32 %v666, %v682
        %v715 = vadd.f32 %v667, %v683
        %v716 = vadd.f32 %v668, %v684
        %v717 = vadd.f32 %v669, %v685
        %v718 = vadd.f32 %v670, %v686
        %v719 = vadd.f32 %v671, %v687
        %v720 = vadd.f32 %v672, %v688
        %v721 = vadd.f32 %v673, %v689
        %v722 = vadd.f32 %v674, %v690
        %v723 = vadd.f32 %v707, %v691
        %v724 = vadd.f32 %v708, %v692
        %v725 = vadd.f32 %v709, %v693
        %v726 = vadd.f32 %v710, %v694
        %v727 = vadd.f32 %v711, %v695
        %v728 = vadd.f32 %v712, %v696
        %v729 = vadd.f32 %v713, %v697
        %v730 = vadd.f32 %v714, %v698
        %v731 = vadd.f32 %v715, %v699
        %v732 = vadd.f32 %v716, %v700
        %v733 = vadd.f32 %v717, %v701
        %v734 = vadd.f32 %v718, %v702
        %v735 = vadd.f32 %v719, %v703
        %v736 = vadd.f32 %v720, %v704
        %v737 = vadd.f32 %v721, %v705
        %v738 = vadd.f32 %v722, %v706
        %v739 = vmul.f32 %v723, 0.33333334
        %v740 = vmul.f32 %v724, 0.33333334
        %v741 = vmul.f32 %v725, 0.33333334
        %v742 = vmul.f32 %v726, 0.33333334
        %v743 = vmul.f32 %v727, 0.33333334
        %v744 = vmul.f32 %v728, 0.33333334
        %v745 = vmul.f32 %v729, 0.33333334
        %v746 = vmul.f32 %v730, 0.33333334
        %v747 = vmul.f32 %v731, 0.33333334
        %v748 = vmul.f32 %v732, 0.33333334
        %v749 = vmul.f32 %v733, 0.33333334
        %v750 = vmul.f32 %v734, 0.33333334
        %v751 = vmul.f32 %v735, 0.33333334
        %v752 = vmul.f32 %v736, 0.33333334
        %v753 = vmul.f32 %v737, 0.33333334
        %v754 = vmul.f32 %v738, 0.33333334
        %v755 = vld [vmem:[%s3] sm:$0xf]
        %v756 = vld [vmem:[%s3 + $0x4] sm:$0xf]
        %v757 = vld [vmem:[%s3 + $0x8] sm:$0xf]
        %v758 = vld [vmem:[%s3 + $0xc] sm:$0xf]
        %v759 = vld [vmem:[%s3 + $0x10] sm:$0xf]
        %v760 = vld [vmem:[%s3 + $0x14] sm:$0xf]
        %v761 = vpack.c.bf16 %v663, %v659
        %v762 = vpack.c.bf16 %v664, %v660
        %v763 = vpack.c.bf16 %v665, %v661
        %v764 = vpack.c.bf16 %v666, %v662
        %v765 = vpack.c.bf16 %v671, %v667
        %v766 = vpack.c.bf16 %v672, %v668
        %v767 = vpack.c.bf16 %v673, %v669
        %v768 = vpack.c.bf16 %v674, %v670
        %v769 = vpack.c.bf16 %v679, %v675
        %v770 = vpack.c.bf16 %v680, %v676
        %v771 = vpack.c.bf16 %v681, %v677
        %v772 = vpack.c.bf16 %v682, %v678
        %v773 = vpack.c.bf16 %v687, %v683
        %v774 = vpack.c.bf16 %v688, %v684
        %v775 = vpack.c.bf16 %v689, %v685
        %v776 = vpack.c.bf16 %v690, %v686
        %v777 = vpack.c.bf16 %v695, %v691
        %v778 = vpack.c.bf16 %v696, %v692
        %v779 = vpack.c.bf16 %v697, %v693
        %v780 = vpack.c.bf16 %v698, %v694
        %v781 = vpack.c.bf16 %v703, %v699
        %v782 = vpack.c.bf16 %v704, %v700
        %v783 = vpack.c.bf16 %v705, %v701
        %v784 = vpack.c.bf16 %v706, %v702
        %v791 = vunpack.c.l.b16 %v755
        %v792 = vunpack.c.l.b16 %v756
        %v793 = vunpack.c.l.b16 %v757
        %v794 = vunpack.c.l.b16 %v758
        %v795 = vunpack.c.l.b16 %v759
        %v796 = vunpack.c.l.b16 %v760
        %v797 = vpack.c.b16 %v792, %v791
        %v798 = vpack.c.b16 %v794, %v793
        %v799 = vpack.c.b16 %v796, %v795
        %vm800 = vcmask 785408
        %v802 = vsel %vm800, %v797, 0
        %v805 = vsel %vm800, %v798, 0
        %v808 = vsel %vm800, %v799, 0
        %810 = vmatpush.bf16.msra.mxu0 0
        %811 = vmatpush.bf16.msra.mxu0 0
        %812 = vmatpush.bf16.msra.mxu0 %v781
        %813 = vmatpush.bf16.msra.mxu0 %v777
        %814 = vmatpush.bf16.msra.mxu0 %v773
        %815 = vmatpush.bf16.msra.mxu0 %v769
        %816 = vmatpush.bf16.msra.mxu0 %v765
        %817 = vmatpush.bf16.msra.mxu0 %v761
        %818 = vmatmul.bf16.gmra.mxu0 %v802
        %v819 = vpop.f32.mrf.mxu0
        %v820 = vadd.f32 0.0, %v819
        %v821 = vpop.f32.mrf.mxu0
        %v822 = vadd.f32 0.0, %v821
        %823 = vmatmul.bf16.gmra.mxu0 %v805
        %v824 = vpop.f32.mrf.mxu0
        %v825 = vadd.f32 0.0, %v824
        %v826 = vpop.f32.mrf.mxu0
        %v827 = vadd.f32 0.0, %v826
        %828 = vmatmul.bf16.gmra.mxu0 %v808
        %v829 = vpop.f32.mrf.mxu0
        %v830 = vadd.f32 0.0, %v829
        %v831 = vpop.f32.mrf.mxu0
        %v832 = vadd.f32 0.0, %v831
        %833 = vdwg.mxu0
        %834 = vmatpush.bf16.msra.mxu0 0
        %835 = vmatpush.bf16.msra.mxu0 0
        %836 = vmatpush.bf16.msra.mxu0 %v782
        %837 = vmatpush.bf16.msra.mxu0 %v778
        %838 = vmatpush.bf16.msra.mxu0 %v774
        %839 = vmatpush.bf16.msra.mxu0 %v770
        %840 = vmatpush.bf16.msra.mxu0 %v766
        %841 = vmatpush.bf16.msra.mxu0 %v762
        %842 = vmatmul.bf16.gmra.mxu0 %v802
        %v843 = vpop.f32.mrf.mxu0
        %v844 = vadd.f32 0.0, %v843
        %v845 = vpop.f32.mrf.mxu0
        %v846 = vadd.f32 0.0, %v845
        %847 = vmatmul.bf16.gmra.mxu0 %v805
        %v848 = vpop.f32.mrf.mxu0
        %v849 = vadd.f32 0.0, %v848
        %v850 = vpop.f32.mrf.mxu0
        %v851 = vadd.f32 0.0, %v850
        %852 = vmatmul.bf16.gmra.mxu0 %v808
        %v853 = vpop.f32.mrf.mxu0
        %v854 = vadd.f32 0.0, %v853
        %v855 = vpop.f32.mrf.mxu0
        %v856 = vadd.f32 0.0, %v855
        %857 = vdwg.mxu0
        %858 = vmatpush.bf16.msra.mxu0 0
        %859 = vmatpush.bf16.msra.mxu0 0
        %860 = vmatpush.bf16.msra.mxu0 %v783
        %861 = vmatpush.bf16.msra.mxu0 %v779
        %862 = vmatpush.bf16.msra.mxu0 %v775
        %863 = vmatpush.bf16.msra.mxu0 %v771
        %864 = vmatpush.bf16.msra.mxu0 %v767
        %865 = vmatpush.bf16.msra.mxu0 %v763
        %866 = vmatmul.bf16.gmra.mxu0 %v802
        %v867 = vpop.f32.mrf.mxu0
        %v868 = vadd.f32 0.0, %v867
        %v869 = vpop.f32.mrf.mxu0
        %v870 = vadd.f32 0.0, %v869
        %871 = vmatmul.bf16.gmra.mxu0 %v805
        %v872 = vpop.f32.mrf.mxu0
        %v873 = vadd.f32 0.0, %v872
        %v874 = vpop.f32.mrf.mxu0
        %v875 = vadd.f32 0.0, %v874
        %876 = vmatmul.bf16.gmra.mxu0 %v808
        %v877 = vpop.f32.mrf.mxu0
        %v878 = vadd.f32 0.0, %v877
        %v879 = vpop.f32.mrf.mxu0
        %v880 = vadd.f32 0.0, %v879
        %881 = vdwg.mxu0
        %882 = vmatpush.bf16.msra.mxu0 0
        %883 = vmatpush.bf16.msra.mxu0 0
        %884 = vmatpush.bf16.msra.mxu0 %v784
        %885 = vmatpush.bf16.msra.mxu0 %v780
        %886 = vmatpush.bf16.msra.mxu0 %v776
        %887 = vmatpush.bf16.msra.mxu0 %v772
        %888 = vmatpush.bf16.msra.mxu0 %v768
        %889 = vmatpush.bf16.msra.mxu0 %v764
        %890 = vmatmul.bf16.gmra.mxu0 %v802
        %v891 = vpop.f32.mrf.mxu0
        %v892 = vadd.f32 0.0, %v891
        %v893 = vpop.f32.mrf.mxu0
        %v894 = vadd.f32 0.0, %v893
        %895 = vmatmul.bf16.gmra.mxu0 %v805
        %v896 = vpop.f32.mrf.mxu0
        %v897 = vadd.f32 0.0, %v896
        %v898 = vpop.f32.mrf.mxu0
        %v899 = vadd.f32 0.0, %v898
        %900 = vmatmul.bf16.gmra.mxu0 %v808
        %v901 = vpop.f32.mrf.mxu0
        %v902 = vadd.f32 0.0, %v901
        %v903 = vpop.f32.mrf.mxu0
        %v904 = vadd.f32 0.0, %v903
        %905 = vdwg.mxu0
        %v906 = vld [vmem:[#allocation5] sm:$0xff]
        %v907 = vld [vmem:[#allocation5 + $0x8] sm:$0xff]
        %v908 = vld [vmem:[#allocation5 + $0x10] sm:$0xff]
        %v909 = vld [vmem:[#allocation5 + $0x18] sm:$0xff]
        %v910 = vld [vmem:[#allocation5 + $0x20] sm:$0xff]
        %v911 = vld [vmem:[#allocation5 + $0x28] sm:$0xff]
        %v912 = vld [vmem:[#allocation5 + $0x30] sm:$0xff]
        %v913 = vld [vmem:[#allocation5 + $0x38] sm:$0xff]
        %v914 = vld [vmem:[#allocation5 + $0x40] sm:$0xff]
        %v915 = vld [vmem:[#allocation5 + $0x48] sm:$0xff]
        %v916 = vld [vmem:[#allocation5 + $0x50] sm:$0xff]
        %v917 = vld [vmem:[#allocation5 + $0x58] sm:$0xff]
        %v918 = vld [vmem:[#allocation5 + $0x60] sm:$0xff]
        %v919 = vld [vmem:[#allocation5 + $0x68] sm:$0xff]
        %v920 = vld [vmem:[#allocation5 + $0x70] sm:$0xff]
        %v921 = vld [vmem:[#allocation5 + $0x78] sm:$0xff]
        %v922 = vld [vmem:[#allocation5 + $0x80] sm:$0xff]
        %v923 = vld [vmem:[#allocation5 + $0x88] sm:$0xff]
        %v924 = vld [vmem:[#allocation5 + $0x90] sm:$0xff]
        %v925 = vld [vmem:[#allocation5 + $0x98] sm:$0xff]
        %v926 = vld [vmem:[#allocation5 + $0xa0] sm:$0xff]
        %v927 = vld [vmem:[#allocation5 + $0xa8] sm:$0xff]
        %v928 = vld [vmem:[#allocation5 + $0xb0] sm:$0xff]
        %v929 = vld [vmem:[#allocation5 + $0xb8] sm:$0xff]
        %v930 = vld [vmem:[#allocation5 + $0xc0] sm:$0xff]
        %v931 = vld [vmem:[#allocation5 + $0xc8] sm:$0xff]
        %v932 = vld [vmem:[#allocation5 + $0xd0] sm:$0xff]
        %v933 = vld [vmem:[#allocation5 + $0xd8] sm:$0xff]
        %v934 = vld [vmem:[#allocation5 + $0xe0] sm:$0xff]
        %v935 = vld [vmem:[#allocation5 + $0xe8] sm:$0xff]
        %v936 = vld [vmem:[#allocation5 + $0xf0] sm:$0xff]
        %v937 = vld [vmem:[#allocation5 + $0xf8] sm:$0xff]
        %v938 = vld [vmem:[#allocation5 + $0x100] sm:$0xff]
        %v939 = vld [vmem:[#allocation5 + $0x108] sm:$0xff]
        %v940 = vld [vmem:[#allocation5 + $0x110] sm:$0xff]
        %v941 = vld [vmem:[#allocation5 + $0x118] sm:$0xff]
        %v942 = vld [vmem:[#allocation5 + $0x120] sm:$0xff]
        %v943 = vld [vmem:[#allocation5 + $0x128] sm:$0xff]
        %v944 = vld [vmem:[#allocation5 + $0x130] sm:$0xff]
        %v945 = vld [vmem:[#allocation5 + $0x138] sm:$0xff]
        %v946 = vld [vmem:[#allocation5 + $0x140] sm:$0xff]
        %v947 = vld [vmem:[#allocation5 + $0x148] sm:$0xff]
        %v948 = vld [vmem:[#allocation5 + $0x150] sm:$0xff]
        %v949 = vld [vmem:[#allocation5 + $0x158] sm:$0xff]
        %v950 = vld [vmem:[#allocation5 + $0x160] sm:$0xff]
        %v951 = vld [vmem:[#allocation5 + $0x168] sm:$0xff]
        %v952 = vld [vmem:[#allocation5 + $0x170] sm:$0xff]
        %v953 = vld [vmem:[#allocation5 + $0x178] sm:$0xff]
        %v954 = vld [vmem:[#allocation5 + $0x180] sm:$0xff]
        %v955 = vld [vmem:[#allocation5 + $0x188] sm:$0xff]
        %v956 = vld [vmem:[#allocation5 + $0x190] sm:$0xff]
        %v957 = vld [vmem:[#allocation5 + $0x198] sm:$0xff]
        %v958 = vld [vmem:[#allocation5 + $0x1a0] sm:$0xff]
        %v959 = vld [vmem:[#allocation5 + $0x1a8] sm:$0xff]
        %v960 = vld [vmem:[#allocation5 + $0x1b0] sm:$0xff]
        %v961 = vld [vmem:[#allocation5 + $0x1b8] sm:$0xff]
        %v962 = vld [vmem:[#allocation5 + $0x1c0] sm:$0xff]
        %v963 = vld [vmem:[#allocation5 + $0x1c8] sm:$0xff]
        %v964 = vld [vmem:[#allocation5 + $0x1d0] sm:$0xff]
        %v965 = vld [vmem:[#allocation5 + $0x1d8] sm:$0xff]
        %v966 = vld [vmem:[#allocation5 + $0x1e0] sm:$0xff]
        %v967 = vld [vmem:[#allocation5 + $0x1e8] sm:$0xff]
        %v968 = vld [vmem:[#allocation5 + $0x1f0] sm:$0xff]
        %v969 = vld [vmem:[#allocation5 + $0x1f8] sm:$0xff]
        %v970 = vld [vmem:[#allocation5 + $0x200] sm:$0xff]
        %v971 = vld [vmem:[#allocation5 + $0x208] sm:$0xff]
        %v972 = vld [vmem:[#allocation5 + $0x210] sm:$0xff]
        %v973 = vld [vmem:[#allocation5 + $0x218] sm:$0xff]
        %v974 = vld [vmem:[#allocation5 + $0x220] sm:$0xff]
        %v975 = vld [vmem:[#allocation5 + $0x228] sm:$0xff]
        %v976 = vld [vmem:[#allocation5 + $0x230] sm:$0xff]
        %v977 = vld [vmem:[#allocation5 + $0x238] sm:$0xff]
        %v978 = vld [vmem:[#allocation5 + $0x240] sm:$0xff]
        %v979 = vld [vmem:[#allocation5 + $0x248] sm:$0xff]
        %v980 = vld [vmem:[#allocation5 + $0x250] sm:$0xff]
        %v981 = vld [vmem:[#allocation5 + $0x258] sm:$0xff]
        %v982 = vld [vmem:[#allocation5 + $0x260] sm:$0xff]
        %v983 = vld [vmem:[#allocation5 + $0x268] sm:$0xff]
        %v984 = vld [vmem:[#allocation5 + $0x270] sm:$0xff]
        %v985 = vld [vmem:[#allocation5 + $0x278] sm:$0xff]
        %v986 = vld [vmem:[#allocation5 + $0x280] sm:$0xff]
        %v987 = vld [vmem:[#allocation5 + $0x288] sm:$0xff]
        %v988 = vld [vmem:[#allocation5 + $0x290] sm:$0xff]
        %v989 = vld [vmem:[#allocation5 + $0x298] sm:$0xff]
        %v990 = vld [vmem:[#allocation5 + $0x2a0] sm:$0xff]
        %v991 = vld [vmem:[#allocation5 + $0x2a8] sm:$0xff]
        %v992 = vld [vmem:[#allocation5 + $0x2b0] sm:$0xff]
        %v993 = vld [vmem:[#allocation5 + $0x2b8] sm:$0xff]
        %v994 = vld [vmem:[#allocation5 + $0x2c0] sm:$0xff]
        %v995 = vld [vmem:[#allocation5 + $0x2c8] sm:$0xff]
        %v996 = vld [vmem:[#allocation5 + $0x2d0] sm:$0xff]
        %v997 = vld [vmem:[#allocation5 + $0x2d8] sm:$0xff]
        %v998 = vld [vmem:[#allocation5 + $0x2e0] sm:$0xff]
        %v999 = vld [vmem:[#allocation5 + $0x2e8] sm:$0xff]
        %v1000 = vld [vmem:[#allocation5 + $0x2f0] sm:$0xff]
        %v1001 = vld [vmem:[#allocation5 + $0x2f8] sm:$0xff]
        %v1002 = vld [vmem:[#allocation5 + $0x300] sm:$0xff]
        %v1003 = vld [vmem:[#allocation5 + $0x308] sm:$0xff]
        %v1004 = vld [vmem:[#allocation5 + $0x310] sm:$0xff]
        %v1005 = vld [vmem:[#allocation5 + $0x318] sm:$0xff]
        %v1006 = vld [vmem:[#allocation5 + $0x320] sm:$0xff]
        %v1007 = vld [vmem:[#allocation5 + $0x328] sm:$0xff]
        %v1008 = vld [vmem:[#allocation5 + $0x330] sm:$0xff]
        %v1009 = vld [vmem:[#allocation5 + $0x338] sm:$0xff]
        %v1010 = vld [vmem:[#allocation5 + $0x340] sm:$0xff]
        %v1011 = vld [vmem:[#allocation5 + $0x348] sm:$0xff]
        %v1012 = vld [vmem:[#allocation5 + $0x350] sm:$0xff]
        %v1013 = vld [vmem:[#allocation5 + $0x358] sm:$0xff]
        %v1014 = vld [vmem:[#allocation5 + $0x360] sm:$0xff]
        %v1015 = vld [vmem:[#allocation5 + $0x368] sm:$0xff]
        %v1016 = vld [vmem:[#allocation5 + $0x370] sm:$0xff]
        %v1017 = vld [vmem:[#allocation5 + $0x378] sm:$0xff]
        %v1018 = vld [vmem:[#allocation5 + $0x380] sm:$0xff]
        %v1019 = vld [vmem:[#allocation5 + $0x388] sm:$0xff]
        %v1020 = vld [vmem:[#allocation5 + $0x390] sm:$0xff]
        %v1021 = vld [vmem:[#allocation5 + $0x398] sm:$0xff]
        %v1022 = vld [vmem:[#allocation5 + $0x3a0] sm:$0xff]
        %v1023 = vld [vmem:[#allocation5 + $0x3a8] sm:$0xff]
        %v1024 = vld [vmem:[#allocation5 + $0x3b0] sm:$0xff]
        %v1025 = vld [vmem:[#allocation5 + $0x3b8] sm:$0xff]
        %v1026 = vld [vmem:[#allocation5 + $0x3c0] sm:$0xff]
        %v1027 = vld [vmem:[#allocation5 + $0x3c8] sm:$0xff]
        %v1028 = vld [vmem:[#allocation5 + $0x3d0] sm:$0xff]
        %v1029 = vld [vmem:[#allocation5 + $0x3d8] sm:$0xff]
        %v1030 = vld [vmem:[#allocation5 + $0x3e0] sm:$0xff]
        %v1031 = vld [vmem:[#allocation5 + $0x3e8] sm:$0xff]
        %v1032 = vld [vmem:[#allocation5 + $0x3f0] sm:$0xff]
        %v1033 = vld [vmem:[#allocation5 + $0x3f8] sm:$0xff]
        %v1034 = vpack.c.bf16 %v827, %v825
        %v1035 = vpack.c.bf16 %v851, %v849
        %v1036 = vpack.c.bf16 %v875, %v873
        %v1037 = vpack.c.bf16 %v899, %v897
        %v1038 = vpack.c.bf16 %v832, %v830
        %v1039 = vpack.c.bf16 %v856, %v854
        %v1040 = vpack.c.bf16 %v880, %v878
        %v1041 = vpack.c.bf16 %v904, %v902
        %v1170 = vunpack.c.l.b16 %v906
        %v1171 = vunpack.c.h.b16 %v906
        %v1172 = vunpack.c.l.b16 %v907
        %v1173 = vunpack.c.h.b16 %v907
        %v1174 = vunpack.c.l.b16 %v908
        %v1175 = vunpack.c.h.b16 %v908
        %v1176 = vunpack.c.l.b16 %v909
        %v1177 = vunpack.c.h.b16 %v909
        %v1178 = vunpack.c.l.b16 %v910
        %v1179 = vunpack.c.h.b16 %v910
        %v1180 = vunpack.c.l.b16 %v911
        %v1181 = vunpack.c.h.b16 %v911
        %v1182 = vunpack.c.l.b16 %v912
        %v1183 = vunpack.c.h.b16 %v912
        %v1184 = vunpack.c.l.b16 %v913
        %v1185 = vunpack.c.h.b16 %v913
        %v1186 = vunpack.c.l.b16 %v914
        %v1187 = vunpack.c.h.b16 %v914
        %v1188 = vunpack.c.l.b16 %v915
        %v1189 = vunpack.c.h.b16 %v915
        %v1190 = vunpack.c.l.b16 %v916
        %v1191 = vunpack.c.h.b16 %v916
        %v1192 = vunpack.c.l.b16 %v917
        %v1193 = vunpack.c.h.b16 %v917
        %v1194 = vunpack.c.l.b16 %v918
        %v1195 = vunpack.c.h.b16 %v918
        %v1196 = vunpack.c.l.b16 %v919
        %v1197 = vunpack.c.h.b16 %v919
        %v1198 = vunpack.c.l.b16 %v920
        %v1199 = vunpack.c.h.b16 %v920
        %v1200 = vunpack.c.l.b16 %v921
        %v1201 = vunpack.c.h.b16 %v921
        %v1202 = vunpack.c.l.b16 %v922
        %v1203 = vunpack.c.h.b16 %v922
        %v1204 = vunpack.c.l.b16 %v923
        %v1205 = vunpack.c.h.b16 %v923
        %v1206 = vunpack.c.l.b16 %v924
        %v1207 = vunpack.c.h.b16 %v924
        %v1208 = vunpack.c.l.b16 %v925
        %v1209 = vunpack.c.h.b16 %v925
        %v1210 = vunpack.c.l.b16 %v926
        %v1211 = vunpack.c.h.b16 %v926
        %v1212 = vunpack.c.l.b16 %v927
        %v1213 = vunpack.c.h.b16 %v927
        %v1214 = vunpack.c.l.b16 %v928
        %v1215 = vunpack.c.h.b16 %v928
        %v1216 = vunpack.c.l.b16 %v929
        %v1217 = vunpack.c.h.b16 %v929
        %v1218 = vunpack.c.l.b16 %v930
        %v1219 = vunpack.c.h.b16 %v930
        %v1220 = vunpack.c.l.b16 %v931
        %v1221 = vunpack.c.h.b16 %v931
        %v1222 = vunpack.c.l.b16 %v932
        %v1223 = vunpack.c.h.b16 %v932
        %v1224 = vunpack.c.l.b16 %v933
        %v1225 = vunpack.c.h.b16 %v933
        %v1226 = vunpack.c.l.b16 %v934
        %v1227 = vunpack.c.h.b16 %v934
        %v1228 = vunpack.c.l.b16 %v935
        %v1229 = vunpack.c.h.b16 %v935
        %v1230 = vunpack.c.l.b16 %v936
        %v1231 = vunpack.c.h.b16 %v936
        %v1232 = vunpack.c.l.b16 %v937
        %v1233 = vunpack.c.h.b16 %v937
        %v1234 = vunpack.c.l.b16 %v938
        %v1235 = vunpack.c.h.b16 %v938
        %v1236 = vunpack.c.l.b16 %v939
        %v1237 = vunpack.c.h.b16 %v939
        %v1238 = vunpack.c.l.b16 %v940
        %v1239 = vunpack.c.h.b16 %v940
        %v1240 = vunpack.c.l.b16 %v941
        %v1241 = vunpack.c.h.b16 %v941
        %v1242 = vunpack.c.l.b16 %v942
        %v1243 = vunpack.c.h.b16 %v942
        %v1244 = vunpack.c.l.b16 %v943
        %v1245 = vunpack.c.h.b16 %v943
        %v1246 = vunpack.c.l.b16 %v944
        %v1247 = vunpack.c.h.b16 %v944
        %v1248 = vunpack.c.l.b16 %v945
        %v1249 = vunpack.c.h.b16 %v945
        %v1250 = vunpack.c.l.b16 %v946
        %v1251 = vunpack.c.h.b16 %v946
        %v1252 = vunpack.c.l.b16 %v947
        %v1253 = vunpack.c.h.b16 %v947
        %v1254 = vunpack.c.l.b16 %v948
        %v1255 = vunpack.c.h.b16 %v948
        %v1256 = vunpack.c.l.b16 %v949
        %v1257 = vunpack.c.h.b16 %v949
        %v1258 = vunpack.c.l.b16 %v950
        %v1259 = vunpack.c.h.b16 %v950
        %v1260 = vunpack.c.l.b16 %v951
        %v1261 = vunpack.c.h.b16 %v951
        %v1262 = vunpack.c.l.b16 %v952
        %v1263 = vunpack.c.h.b16 %v952
        %v1264 = vunpack.c.l.b16 %v953
        %v1265 = vunpack.c.h.b16 %v953
        %v1266 = vunpack.c.l.b16 %v954
        %v1267 = vunpack.c.h.b16 %v954
        %v1268 = vunpack.c.l.b16 %v955
        %v1269 = vunpack.c.h.b16 %v955
        %v1270 = vunpack.c.l.b16 %v956
        %v1271 = vunpack.c.h.b16 %v956
        %v1272 = vunpack.c.l.b16 %v957
        %v1273 = vunpack.c.h.b16 %v957
        %v1274 = vunpack.c.l.b16 %v958
        %v1275 = vunpack.c.h.b16 %v958
        %v1276 = vunpack.c.l.b16 %v959
        %v1277 = vunpack.c.h.b16 %v959
        %v1278 = vunpack.c.l.b16 %v960
        %v1279 = vunpack.c.h.b16 %v960
        %v1280 = vunpack.c.l.b16 %v961
        %v1281 = vunpack.c.h.b16 %v961
        %v1282 = vunpack.c.l.b16 %v962
        %v1283 = vunpack.c.h.b16 %v962
        %v1284 = vunpack.c.l.b16 %v963
        %v1285 = vunpack.c.h.b16 %v963
        %v1286 = vunpack.c.l.b16 %v964
        %v1287 = vunpack.c.h.b16 %v964
        %v1288 = vunpack.c.l.b16 %v965
        %v1289 = vunpack.c.h.b16 %v965
        %v1290 = vunpack.c.l.b16 %v966
        %v1291 = vunpack.c.h.b16 %v966
        %v1292 = vunpack.c.l.b16 %v967
        %v1293 = vunpack.c.h.b16 %v967
        %v1294 = vunpack.c.l.b16 %v968
        %v1295 = vunpack.c.h.b16 %v968
        %v1296 = vunpack.c.l.b16 %v969
        %v1297 = vunpack.c.h.b16 %v969
        %v1298 = vunpack.c.l.b16 %v970
        %v1299 = vunpack.c.h.b16 %v970
        %v1300 = vunpack.c.l.b16 %v971
        %v1301 = vunpack.c.h.b16 %v971
        %v1302 = vunpack.c.l.b16 %v972
        %v1303 = vunpack.c.h.b16 %v972
        %v1304 = vunpack.c.l.b16 %v973
        %v1305 = vunpack.c.h.b16 %v973
        %v1306 = vunpack.c.l.b16 %v974
        %v1307 = vunpack.c.h.b16 %v974
        %v1308 = vunpack.c.l.b16 %v975
        %v1309 = vunpack.c.h.b16 %v975
        %v1310 = vunpack.c.l.b16 %v976
        %v1311 = vunpack.c.h.b16 %v976
        %v1312 = vunpack.c.l.b16 %v977
        %v1313 = vunpack.c.h.b16 %v977
        %v1314 = vunpack.c.l.b16 %v978
        %v1315 = vunpack.c.h.b16 %v978
        %v1316 = vunpack.c.l.b16 %v979
        %v1317 = vunpack.c.h.b16 %v979
        %v1318 = vunpack.c.l.b16 %v980
        %v1319 = vunpack.c.h.b16 %v980
        %v1320 = vunpack.c.l.b16 %v981
        %v1321 = vunpack.c.h.b16 %v981
        %v1322 = vunpack.c.l.b16 %v982
        %v1323 = vunpack.c.h.b16 %v982
        %v1324 = vunpack.c.l.b16 %v983
        %v1325 = vunpack.c.h.b16 %v983
        %v1326 = vunpack.c.l.b16 %v984
        %v1327 = vunpack.c.h.b16 %v984
        %v1328 = vunpack.c.l.b16 %v985
        %v1329 = vunpack.c.h.b16 %v985
        %v1330 = vunpack.c.l.b16 %v986
        %v1331 = vunpack.c.h.b16 %v986
        %v1332 = vunpack.c.l.b16 %v987
        %v1333 = vunpack.c.h.b16 %v987
        %v1334 = vunpack.c.l.b16 %v988
        %v1335 = vunpack.c.h.b16 %v988
        %v1336 = vunpack.c.l.b16 %v989
        %v1337 = vunpack.c.h.b16 %v989
        %v1338 = vunpack.c.l.b16 %v990
        %v1339 = vunpack.c.h.b16 %v990
        %v1340 = vunpack.c.l.b16 %v991
        %v1341 = vunpack.c.h.b16 %v991
        %v1342 = vunpack.c.l.b16 %v992
        %v1343 = vunpack.c.h.b16 %v992
        %v1344 = vunpack.c.l.b16 %v993
        %v1345 = vunpack.c.h.b16 %v993
        %v1346 = vunpack.c.l.b16 %v994
        %v1347 = vunpack.c.h.b16 %v994
        %v1348 = vunpack.c.l.b16 %v995
        %v1349 = vunpack.c.h.b16 %v995
        %v1350 = vunpack.c.l.b16 %v996
        %v1351 = vunpack.c.h.b16 %v996
        %v1352 = vunpack.c.l.b16 %v997
        %v1353 = vunpack.c.h.b16 %v997
        %v1354 = vunpack.c.l.b16 %v998
        %v1355 = vunpack.c.h.b16 %v998
        %v1356 = vunpack.c.l.b16 %v999
        %v1357 = vunpack.c.h.b16 %v999
        %v1358 = vunpack.c.l.b16 %v1000
        %v1359 = vunpack.c.h.b16 %v1000
        %v1360 = vunpack.c.l.b16 %v1001
        %v1361 = vunpack.c.h.b16 %v1001
        %v1362 = vunpack.c.l.b16 %v1002
        %v1363 = vunpack.c.h.b16 %v1002
        %v1364 = vunpack.c.l.b16 %v1003
        %v1365 = vunpack.c.h.b16 %v1003
        %v1366 = vunpack.c.l.b16 %v1004
        %v1367 = vunpack.c.h.b16 %v1004
        %v1368 = vunpack.c.l.b16 %v1005
        %v1369 = vunpack.c.h.b16 %v1005
        %v1370 = vunpack.c.l.b16 %v1006
        %v1371 = vunpack.c.h.b16 %v1006
        %v1372 = vunpack.c.l.b16 %v1007
        %v1373 = vunpack.c.h.b16 %v1007
        %v1374 = vunpack.c.l.b16 %v1008
        %v1375 = vunpack.c.h.b16 %v1008
        %v1376 = vunpack.c.l.b16 %v1009
        %v1377 = vunpack.c.h.b16 %v1009
        %v1378 = vunpack.c.l.b16 %v1010
        %v1379 = vunpack.c.h.b16 %v1010
        %v1380 = vunpack.c.l.b16 %v1011
        %v1381 = vunpack.c.h.b16 %v1011
        %v1382 = vunpack.c.l.b16 %v1012
        %v1383 = vunpack.c.h.b16 %v1012
        %v1384 = vunpack.c.l.b16 %v1013
        %v1385 = vunpack.c.h.b16 %v1013
        %v1386 = vunpack.c.l.b16 %v1014
        %v1387 = vunpack.c.h.b16 %v1014
        %v1388 = vunpack.c.l.b16 %v1015
        %v1389 = vunpack.c.h.b16 %v1015
        %v1390 = vunpack.c.l.b16 %v1016
        %v1391 = vunpack.c.h.b16 %v1016
        %v1392 = vunpack.c.l.b16 %v1017
        %v1393 = vunpack.c.h.b16 %v1017
        %v1394 = vunpack.c.l.b16 %v1018
        %v1395 = vunpack.c.h.b16 %v1018
        %v1396 = vunpack.c.l.b16 %v1019
        %v1397 = vunpack.c.h.b16 %v1019
        %v1398 = vunpack.c.l.b16 %v1020
        %v1399 = vunpack.c.h.b16 %v1020
        %v1400 = vunpack.c.l.b16 %v1021
        %v1401 = vunpack.c.h.b16 %v1021
        %v1402 = vunpack.c.l.b16 %v1022
        %v1403 = vunpack.c.h.b16 %v1022
        %v1404 = vunpack.c.l.b16 %v1023
        %v1405 = vunpack.c.h.b16 %v1023
        %v1406 = vunpack.c.l.b16 %v1024
        %v1407 = vunpack.c.h.b16 %v1024
        %v1408 = vunpack.c.l.b16 %v1025
        %v1409 = vunpack.c.h.b16 %v1025
        %v1410 = vunpack.c.l.b16 %v1026
        %v1411 = vunpack.c.h.b16 %v1026
        %v1412 = vunpack.c.l.b16 %v1027
        %v1413 = vunpack.c.h.b16 %v1027
        %v1414 = vunpack.c.l.b16 %v1028
        %v1415 = vunpack.c.h.b16 %v1028
        %v1416 = vunpack.c.l.b16 %v1029
        %v1417 = vunpack.c.h.b16 %v1029
        %v1418 = vunpack.c.l.b16 %v1030
        %v1419 = vunpack.c.h.b16 %v1030
        %v1420 = vunpack.c.l.b16 %v1031
        %v1421 = vunpack.c.h.b16 %v1031
        %v1422 = vunpack.c.l.b16 %v1032
        %v1423 = vunpack.c.h.b16 %v1032
        %v1424 = vunpack.c.l.b16 %v1033
        %v1425 = vunpack.c.h.b16 %v1033
        %v1426 = vpack.c.b16 %v1174, %v1170
        %v1427 = vpack.c.b16 %v1175, %v1171
        %v1428 = vpack.c.b16 %v1176, %v1172
        %v1429 = vpack.c.b16 %v1177, %v1173
        %v1430 = vpack.c.b16 %v1182, %v1178
        %v1431 = vpack.c.b16 %v1183, %v1179
        %v1432 = vpack.c.b16 %v1184, %v1180
        %v1433 = vpack.c.b16 %v1185, %v1181
        %v1434 = vpack.c.b16 %v1190, %v1186
        %v1435 = vpack.c.b16 %v1191, %v1187
        %v1436 = vpack.c.b16 %v1192, %v1188
        %v1437 = vpack.c.b16 %v1193, %v1189
        %v1438 = vpack.c.b16 %v1198, %v1194
        %v1439 = vpack.c.b16 %v1199, %v1195
        %v1440 = vpack.c.b16 %v1200, %v1196
        %v1441 = vpack.c.b16 %v1201, %v1197
        %v1442 = vpack.c.b16 %v1206, %v1202
        %v1443 = vpack.c.b16 %v1207, %v1203
        %v1444 = vpack.c.b16 %v1208, %v1204
        %v1445 = vpack.c.b16 %v1209, %v1205
        %v1446 = vpack.c.b16 %v1214, %v1210
        %v1447 = vpack.c.b16 %v1215, %v1211
        %v1448 = vpack.c.b16 %v1216, %v1212
        %v1449 = vpack.c.b16 %v1217, %v1213
        %v1450 = vpack.c.b16 %v1222, %v1218
        %v1451 = vpack.c.b16 %v1223, %v1219
        %v1452 = vpack.c.b16 %v1224, %v1220
        %v1453 = vpack.c.b16 %v1225, %v1221
        %v1454 = vpack.c.b16 %v1230, %v1226
        %v1455 = vpack.c.b16 %v1231, %v1227
        %v1456 = vpack.c.b16 %v1232, %v1228
        %v1457 = vpack.c.b16 %v1233, %v1229
        %v1458 = vpack.c.b16 %v1238, %v1234
        %v1459 = vpack.c.b16 %v1239, %v1235
        %v1460 = vpack.c.b16 %v1240, %v1236
        %v1461 = vpack.c.b16 %v1241, %v1237
        %v1462 = vpack.c.b16 %v1246, %v1242
        %v1463 = vpack.c.b16 %v1247, %v1243
        %v1464 = vpack.c.b16 %v1248, %v1244
        %v1465 = vpack.c.b16 %v1249, %v1245
        %v1466 = vpack.c.b16 %v1254, %v1250
        %v1467 = vpack.c.b16 %v1255, %v1251
        %v1468 = vpack.c.b16 %v1256, %v1252
        %v1469 = vpack.c.b16 %v1257, %v1253
        %v1470 = vpack.c.b16 %v1262, %v1258
        %v1471 = vpack.c.b16 %v1263, %v1259
        %v1472 = vpack.c.b16 %v1264, %v1260
        %v1473 = vpack.c.b16 %v1265, %v1261
        %v1474 = vpack.c.b16 %v1270, %v1266
        %v1475 = vpack.c.b16 %v1271, %v1267
        %v1476 = vpack.c.b16 %v1272, %v1268
        %v1477 = vpack.c.b16 %v1273, %v1269
        %v1478 = vpack.c.b16 %v1278, %v1274
        %v1479 = vpack.c.b16 %v1279, %v1275
        %v1480 = vpack.c.b16 %v1280, %v1276
        %v1481 = vpack.c.b16 %v1281, %v1277
        %v1482 = vpack.c.b16 %v1286, %v1282
        %v1483 = vpack.c.b16 %v1287, %v1283
        %v1484 = vpack.c.b16 %v1288, %v1284
        %v1485 = vpack.c.b16 %v1289, %v1285
        %v1486 = vpack.c.b16 %v1294, %v1290
        %v1487 = vpack.c.b16 %v1295, %v1291
        %v1488 = vpack.c.b16 %v1296, %v1292
        %v1489 = vpack.c.b16 %v1297, %v1293
        %v1490 = vpack.c.b16 %v1302, %v1298
        %v1491 = vpack.c.b16 %v1303, %v1299
        %v1492 = vpack.c.b16 %v1304, %v1300
        %v1493 = vpack.c.b16 %v1305, %v1301
        %v1494 = vpack.c.b16 %v1310, %v1306
        %v1495 = vpack.c.b16 %v1311, %v1307
        %v1496 = vpack.c.b16 %v1312, %v1308
        %v1497 = vpack.c.b16 %v1313, %v1309
        %v1498 = vpack.c.b16 %v1318, %v1314
        %v1499 = vpack.c.b16 %v1319, %v1315
        %v1500 = vpack.c.b16 %v1320, %v1316
        %v1501 = vpack.c.b16 %v1321, %v1317
        %v1502 = vpack.c.b16 %v1326, %v1322
        %v1503 = vpack.c.b16 %v1327, %v1323
        %v1504 = vpack.c.b16 %v1328, %v1324
        %v1505 = vpack.c.b16 %v1329, %v1325
        %v1506 = vpack.c.b16 %v1334, %v1330
        %v1507 = vpack.c.b16 %v1335, %v1331
        %v1508 = vpack.c.b16 %v1336, %v1332
        %v1509 = vpack.c.b16 %v1337, %v1333
        %v1510 = vpack.c.b16 %v1342, %v1338
        %v1511 = vpack.c.b16 %v1343, %v1339
        %v1512 = vpack.c.b16 %v1344, %v1340
        %v1513 = vpack.c.b16 %v1345, %v1341
        %v1514 = vpack.c.b16 %v1350, %v1346
        %v1515 = vpack.c.b16 %v1351, %v1347
        %v1516 = vpack.c.b16 %v1352, %v1348
        %v1517 = vpack.c.b16 %v1353, %v1349
        %v1518 = vpack.c.b16 %v1358, %v1354
        %v1519 = vpack.c.b16 %v1359, %v1355
        %v1520 = vpack.c.b16 %v1360, %v1356
        %v1521 = vpack.c.b16 %v1361, %v1357
        %v1522 = vpack.c.b16 %v1366, %v1362
        %v1523 = vpack.c.b16 %v1367, %v1363
        %v1524 = vpack.c.b16 %v1368, %v1364
        %v1525 = vpack.c.b16 %v1369, %v1365
        %v1526 = vpack.c.b16 %v1374, %v1370
        %v1527 = vpack.c.b16 %v1375, %v1371
        %v1528 = vpack.c.b16 %v1376, %v1372
        %v1529 = vpack.c.b16 %v1377, %v1373
        %v1530 = vpack.c.b16 %v1382, %v1378
        %v1531 = vpack.c.b16 %v1383, %v1379
        %v1532 = vpack.c.b16 %v1384, %v1380
        %v1533 = vpack.c.b16 %v1385, %v1381
        %v1534 = vpack.c.b16 %v1390, %v1386
        %v1535 = vpack.c.b16 %v1391, %v1387
        %v1536 = vpack.c.b16 %v1392, %v1388
        %v1537 = vpack.c.b16 %v1393, %v1389
        %v1538 = vpack.c.b16 %v1398, %v1394
        %v1539 = vpack.c.b16 %v1399, %v1395
        %v1540 = vpack.c.b16 %v1400, %v1396
        %v1541 = vpack.c.b16 %v1401, %v1397
        %v1542 = vpack.c.b16 %v1406, %v1402
        %v1543 = vpack.c.b16 %v1407, %v1403
        %v1544 = vpack.c.b16 %v1408, %v1404
        %v1545 = vpack.c.b16 %v1409, %v1405
        %v1546 = vpack.c.b16 %v1414, %v1410
        %v1547 = vpack.c.b16 %v1415, %v1411
        %v1548 = vpack.c.b16 %v1416, %v1412
        %v1549 = vpack.c.b16 %v1417, %v1413
        %v1550 = vpack.c.b16 %v1422, %v1418
        %v1551 = vpack.c.b16 %v1423, %v1419
        %v1552 = vpack.c.b16 %v1424, %v1420
        %v1553 = vpack.c.b16 %v1425, %v1421
        %1682 = vmatpush.bf16.xpose.msra.mxu0 0
        %1683 = vmatpush.bf16.xpose.msra.mxu0 0
        %1684 = vmatpush.bf16.xpose.msra.mxu0 0
        %1685 = vmatpush.bf16.xpose.msra.mxu0 0
        %1686 = vmatpush.bf16.xpose.msra.mxu0 0
        %1687 = vmatpush.bf16.xpose.msra.mxu0 0
        %1688 = vmatpush.bf16.xpose.msra.mxu0 %v1038
        %1689 = vmatpush.bf16.xpose.msra.mxu0 %v1034
        %1690 = vmatmul.bf16.gmra.mxu0 %v1426
        %v1691 = vpop.f32.mrf.mxu0
        %v1692 = vadd.f32 0.0, %v1691
        %v1693 = vpop.f32.mrf.mxu0
        %v1694 = vadd.f32 0.0, %v1693
        %1695 = vmatmul.bf16.gmra.mxu0 %v1430
        %v1696 = vpop.f32.mrf.mxu0
        %v1697 = vadd.f32 0.0, %v1696
        %v1698 = vpop.f32.mrf.mxu0
        %v1699 = vadd.f32 0.0, %v1698
        %1700 = vmatmul.bf16.gmra.mxu0 %v1434
        %v1701 = vpop.f32.mrf.mxu0
        %v1702 = vadd.f32 0.0, %v1701
        %v1703 = vpop.f32.mrf.mxu0
        %v1704 = vadd.f32 0.0, %v1703
        %1705 = vmatmul.bf16.gmra.mxu0 %v1438
        %v1706 = vpop.f32.mrf.mxu0
        %v1707 = vadd.f32 0.0, %v1706
        %v1708 = vpop.f32.mrf.mxu0
        %v1709 = vadd.f32 0.0, %v1708
        %1710 = vmatmul.bf16.gmra.mxu0 %v1442
        %v1711 = vpop.f32.mrf.mxu0
        %v1712 = vadd.f32 0.0, %v1711
        %v1713 = vpop.f32.mrf.mxu0
        %v1714 = vadd.f32 0.0, %v1713
        %1715 = vmatmul.bf16.gmra.mxu0 %v1446
        %v1716 = vpop.f32.mrf.mxu0
        %v1717 = vadd.f32 0.0, %v1716
        %v1718 = vpop.f32.mrf.mxu0
        %v1719 = vadd.f32 0.0, %v1718
        %1720 = vmatmul.bf16.gmra.mxu0 %v1450
        %v1721 = vpop.f32.mrf.mxu0
        %v1722 = vadd.f32 0.0, %v1721
        %v1723 = vpop.f32.mrf.mxu0
        %v1724 = vadd.f32 0.0, %v1723
        %1725 = vmatmul.bf16.gmra.mxu0 %v1454
        %v1726 = vpop.f32.mrf.mxu0
        %v1727 = vadd.f32 0.0, %v1726
        %v1728 = vpop.f32.mrf.mxu0
        %v1729 = vadd.f32 0.0, %v1728
        %1730 = vmatmul.bf16.gmra.mxu0 %v1458
        %v1731 = vpop.f32.mrf.mxu0
        %v1732 = vadd.f32 0.0, %v1731
        %v1733 = vpop.f32.mrf.mxu0
        %v1734 = vadd.f32 0.0, %v1733
        %1735 = vmatmul.bf16.gmra.mxu0 %v1462
        %v1736 = vpop.f32.mrf.mxu0
        %v1737 = vadd.f32 0.0, %v1736
        %v1738 = vpop.f32.mrf.mxu0
        %v1739 = vadd.f32 0.0, %v1738
        %1740 = vmatmul.bf16.gmra.mxu0 %v1466
        %v1741 = vpop.f32.mrf.mxu0
        %v1742 = vadd.f32 0.0, %v1741
        %v1743 = vpop.f32.mrf.mxu0
        %v1744 = vadd.f32 0.0, %v1743
        %1745 = vmatmul.bf16.gmra.mxu0 %v1470
        %v1746 = vpop.f32.mrf.mxu0
        %v1747 = vadd.f32 0.0, %v1746
        %v1748 = vpop.f32.mrf.mxu0
        %v1749 = vadd.f32 0.0, %v1748
        %1750 = vmatmul.bf16.gmra.mxu0 %v1474
        %v1751 = vpop.f32.mrf.mxu0
        %v1752 = vadd.f32 0.0, %v1751
        %v1753 = vpop.f32.mrf.mxu0
        %v1754 = vadd.f32 0.0, %v1753
        %1755 = vmatmul.bf16.gmra.mxu0 %v1478
        %v1756 = vpop.f32.mrf.mxu0
        %v1757 = vadd.f32 0.0, %v1756
        %v1758 = vpop.f32.mrf.mxu0
        %v1759 = vadd.f32 0.0, %v1758
        %1760 = vmatmul.bf16.gmra.mxu0 %v1482
        %v1761 = vpop.f32.mrf.mxu0
        %v1762 = vadd.f32 0.0, %v1761
        %v1763 = vpop.f32.mrf.mxu0
        %v1764 = vadd.f32 0.0, %v1763
        %1765 = vmatmul.bf16.gmra.mxu0 %v1486
        %v1766 = vpop.f32.mrf.mxu0
        %v1767 = vadd.f32 0.0, %v1766
        %v1768 = vpop.f32.mrf.mxu0
        %v1769 = vadd.f32 0.0, %v1768
        %1770 = vmatmul.bf16.gmra.mxu0 %v1490
        %v1771 = vpop.f32.mrf.mxu0
        %v1772 = vadd.f32 0.0, %v1771
        %v1773 = vpop.f32.mrf.mxu0
        %v1774 = vadd.f32 0.0, %v1773
        %1775 = vmatmul.bf16.gmra.mxu0 %v1494
        %v1776 = vpop.f32.mrf.mxu0
        %v1777 = vadd.f32 0.0, %v1776
        %v1778 = vpop.f32.mrf.mxu0
        %v1779 = vadd.f32 0.0, %v1778
        %1780 = vmatmul.bf16.gmra.mxu0 %v1498
        %v1781 = vpop.f32.mrf.mxu0
        %v1782 = vadd.f32 0.0, %v1781
        %v1783 = vpop.f32.mrf.mxu0
        %v1784 = vadd.f32 0.0, %v1783
        %1785 = vmatmul.bf16.gmra.mxu0 %v1502
        %v1786 = vpop.f32.mrf.mxu0
        %v1787 = vadd.f32 0.0, %v1786
        %v1788 = vpop.f32.mrf.mxu0
        %v1789 = vadd.f32 0.0, %v1788
        %1790 = vmatmul.bf16.gmra.mxu0 %v1506
        %v1791 = vpop.f32.mrf.mxu0
        %v1792 = vadd.f32 0.0, %v1791
        %v1793 = vpop.f32.mrf.mxu0
        %v1794 = vadd.f32 0.0, %v1793
        %1795 = vmatmul.bf16.gmra.mxu0 %v1510
        %v1796 = vpop.f32.mrf.mxu0
        %v1797 = vadd.f32 0.0, %v1796
        %v1798 = vpop.f32.mrf.mxu0
        %v1799 = vadd.f32 0.0, %v1798
        %1800 = vmatmul.bf16.gmra.mxu0 %v1514
        %v1801 = vpop.f32.mrf.mxu0
        %v1802 = vadd.f32 0.0, %v1801
        %v1803 = vpop.f32.mrf.mxu0
        %v1804 = vadd.f32 0.0, %v1803
        %1805 = vmatmul.bf16.gmra.mxu0 %v1518
        %v1806 = vpop.f32.mrf.mxu0
        %v1807 = vadd.f32 0.0, %v1806
        %v1808 = vpop.f32.mrf.mxu0
        %v1809 = vadd.f32 0.0, %v1808
        %1810 = vmatmul.bf16.gmra.mxu0 %v1522
        %v1811 = vpop.f32.mrf.mxu0
        %v1812 = vadd.f32 0.0, %v1811
        %v1813 = vpop.f32.mrf.mxu0
        %v1814 = vadd.f32 0.0, %v1813
        %1815 = vmatmul.bf16.gmra.mxu0 %v1526
        %v1816 = vpop.f32.mrf.mxu0
        %v1817 = vadd.f32 0.0, %v1816
        %v1818 = vpop.f32.mrf.mxu0
        %v1819 = vadd.f32 0.0, %v1818
        %1820 = vmatmul.bf16.gmra.mxu0 %v1530
        %v1821 = vpop.f32.mrf.mxu0
        %v1822 = vadd.f32 0.0, %v1821
        %v1823 = vpop.f32.mrf.mxu0
        %v1824 = vadd.f32 0.0, %v1823
        %1825 = vmatmul.bf16.gmra.mxu0 %v1534
        %v1826 = vpop.f32.mrf.mxu0
        %v1827 = vadd.f32 0.0, %v1826
        %v1828 = vpop.f32.mrf.mxu0
        %v1829 = vadd.f32 0.0, %v1828
        %1830 = vmatmul.bf16.gmra.mxu0 %v1538
        %v1831 = vpop.f32.mrf.mxu0
        %v1832 = vadd.f32 0.0, %v1831
        %v1833 = vpop.f32.mrf.mxu0
        %v1834 = vadd.f32 0.0, %v1833
        %1835 = vmatmul.bf16.gmra.mxu0 %v1542
        %v1836 = vpop.f32.mrf.mxu0
        %v1837 = vadd.f32 0.0, %v1836
        %v1838 = vpop.f32.mrf.mxu0
        %v1839 = vadd.f32 0.0, %v1838
        %1840 = vmatmul.bf16.gmra.mxu0 %v1546
        %v1841 = vpop.f32.mrf.mxu0
        %v1842 = vadd.f32 0.0, %v1841
        %v1843 = vpop.f32.mrf.mxu0
        %v1844 = vadd.f32 0.0, %v1843
        %1845 = vmatmul.bf16.gmra.mxu0 %v1550
        %v1846 = vpop.f32.mrf.mxu0
        %v1847 = vadd.f32 0.0, %v1846
        %v1848 = vpop.f32.mrf.mxu0
        %v1849 = vadd.f32 0.0, %v1848
        %1850 = vdwg.mxu0
        %1851 = vmatpush.bf16.xpose.msra.mxu0 0
        %1852 = vmatpush.bf16.xpose.msra.mxu0 0
        %1853 = vmatpush.bf16.xpose.msra.mxu0 0
        %1854 = vmatpush.bf16.xpose.msra.mxu0 0
        %1855 = vmatpush.bf16.xpose.msra.mxu0 0
        %1856 = vmatpush.bf16.xpose.msra.mxu0 0
        %1857 = vmatpush.bf16.xpose.msra.mxu0 %v1039
        %1858 = vmatpush.bf16.xpose.msra.mxu0 %v1035
        %1859 = vmatmul.bf16.gmra.mxu0 %v1427
        %v1860 = vpop.f32.mrf.mxu0
        %v1861 = vadd.f32 %v1692, %v1860
        %v1862 = vpop.f32.mrf.mxu0
        %v1863 = vadd.f32 %v1694, %v1862
        %1864 = vmatmul.bf16.gmra.mxu0 %v1431
        %v1865 = vpop.f32.mrf.mxu0
        %v1866 = vadd.f32 %v1697, %v1865
        %v1867 = vpop.f32.mrf.mxu0
        %v1868 = vadd.f32 %v1699, %v1867
        %1869 = vmatmul.bf16.gmra.mxu0 %v1435
        %v1870 = vpop.f32.mrf.mxu0
        %v1871 = vadd.f32 %v1702, %v1870
        %v1872 = vpop.f32.mrf.mxu0
        %v1873 = vadd.f32 %v1704, %v1872
        %1874 = vmatmul.bf16.gmra.mxu0 %v1439
        %v1875 = vpop.f32.mrf.mxu0
        %v1876 = vadd.f32 %v1707, %v1875
        %v1877 = vpop.f32.mrf.mxu0
        %v1878 = vadd.f32 %v1709, %v1877
        %1879 = vmatmul.bf16.gmra.mxu0 %v1443
        %v1880 = vpop.f32.mrf.mxu0
        %v1881 = vadd.f32 %v1712, %v1880
        %v1882 = vpop.f32.mrf.mxu0
        %v1883 = vadd.f32 %v1714, %v1882
        %1884 = vmatmul.bf16.gmra.mxu0 %v1447
        %v1885 = vpop.f32.mrf.mxu0
        %v1886 = vadd.f32 %v1717, %v1885
        %v1887 = vpop.f32.mrf.mxu0
        %v1888 = vadd.f32 %v1719, %v1887
        %1889 = vmatmul.bf16.gmra.mxu0 %v1451
        %v1890 = vpop.f32.mrf.mxu0
        %v1891 = vadd.f32 %v1722, %v1890
        %v1892 = vpop.f32.mrf.mxu0
        %v1893 = vadd.f32 %v1724, %v1892
        %1894 = vmatmul.bf16.gmra.mxu0 %v1455
        %v1895 = vpop.f32.mrf.mxu0
        %v1896 = vadd.f32 %v1727, %v1895
        %v1897 = vpop.f32.mrf.mxu0
        %v1898 = vadd.f32 %v1729, %v1897
        %1899 = vmatmul.bf16.gmra.mxu0 %v1459
        %v1900 = vpop.f32.mrf.mxu0
        %v1901 = vadd.f32 %v1732, %v1900
        %v1902 = vpop.f32.mrf.mxu0
        %v1903 = vadd.f32 %v1734, %v1902
        %1904 = vmatmul.bf16.gmra.mxu0 %v1463
        %v1905 = vpop.f32.mrf.mxu0
        %v1906 = vadd.f32 %v1737, %v1905
        %v1907 = vpop.f32.mrf.mxu0
        %v1908 = vadd.f32 %v1739, %v1907
        %1909 = vmatmul.bf16.gmra.mxu0 %v1467
        %v1910 = vpop.f32.mrf.mxu0
        %v1911 = vadd.f32 %v1742, %v1910
        %v1912 = vpop.f32.mrf.mxu0
        %v1913 = vadd.f32 %v1744, %v1912
        %1914 = vmatmul.bf16.gmra.mxu0 %v1471
        %v1915 = vpop.f32.mrf.mxu0
        %v1916 = vadd.f32 %v1747, %v1915
        %v1917 = vpop.f32.mrf.mxu0
        %v1918 = vadd.f32 %v1749, %v1917
        %1919 = vmatmul.bf16.gmra.mxu0 %v1475
        %v1920 = vpop.f32.mrf.mxu0
        %v1921 = vadd.f32 %v1752, %v1920
        %v1922 = vpop.f32.mrf.mxu0
        %v1923 = vadd.f32 %v1754, %v1922
        %1924 = vmatmul.bf16.gmra.mxu0 %v1479
        %v1925 = vpop.f32.mrf.mxu0
        %v1926 = vadd.f32 %v1757, %v1925
        %v1927 = vpop.f32.mrf.mxu0
        %v1928 = vadd.f32 %v1759, %v1927
        %1929 = vmatmul.bf16.gmra.mxu0 %v1483
        %v1930 = vpop.f32.mrf.mxu0
        %v1931 = vadd.f32 %v1762, %v1930
        %v1932 = vpop.f32.mrf.mxu0
        %v1933 = vadd.f32 %v1764, %v1932
        %1934 = vmatmul.bf16.gmra.mxu0 %v1487
        %v1935 = vpop.f32.mrf.mxu0
        %v1936 = vadd.f32 %v1767, %v1935
        %v1937 = vpop.f32.mrf.mxu0
        %v1938 = vadd.f32 %v1769, %v1937
        %1939 = vmatmul.bf16.gmra.mxu0 %v1491
        %v1940 = vpop.f32.mrf.mxu0
        %v1941 = vadd.f32 %v1772, %v1940
        %v1942 = vpop.f32.mrf.mxu0
        %v1943 = vadd.f32 %v1774, %v1942
        %1944 = vmatmul.bf16.gmra.mxu0 %v1495
        %v1945 = vpop.f32.mrf.mxu0
        %v1946 = vadd.f32 %v1777, %v1945
        %v1947 = vpop.f32.mrf.mxu0
        %v1948 = vadd.f32 %v1779, %v1947
        %1949 = vmatmul.bf16.gmra.mxu0 %v1499
        %v1950 = vpop.f32.mrf.mxu0
        %v1951 = vadd.f32 %v1782, %v1950
        %v1952 = vpop.f32.mrf.mxu0
        %v1953 = vadd.f32 %v1784, %v1952
        %1954 = vmatmul.bf16.gmra.mxu0 %v1503
        %v1955 = vpop.f32.mrf.mxu0
        %v1956 = vadd.f32 %v1787, %v1955
        %v1957 = vpop.f32.mrf.mxu0
        %v1958 = vadd.f32 %v1789, %v1957
        %1959 = vmatmul.bf16.gmra.mxu0 %v1507
        %v1960 = vpop.f32.mrf.mxu0
        %v1961 = vadd.f32 %v1792, %v1960
        %v1962 = vpop.f32.mrf.mxu0
        %v1963 = vadd.f32 %v1794, %v1962
        %1964 = vmatmul.bf16.gmra.mxu0 %v1511
        %v1965 = vpop.f32.mrf.mxu0
        %v1966 = vadd.f32 %v1797, %v1965
        %v1967 = vpop.f32.mrf.mxu0
        %v1968 = vadd.f32 %v1799, %v1967
        %1969 = vmatmul.bf16.gmra.mxu0 %v1515
        %v1970 = vpop.f32.mrf.mxu0
        %v1971 = vadd.f32 %v1802, %v1970
        %v1972 = vpop.f32.mrf.mxu0
        %v1973 = vadd.f32 %v1804, %v1972
        %1974 = vmatmul.bf16.gmra.mxu0 %v1519
        %v1975 = vpop.f32.mrf.mxu0
        %v1976 = vadd.f32 %v1807, %v1975
        %v1977 = vpop.f32.mrf.mxu0
        %v1978 = vadd.f32 %v1809, %v1977
        %1979 = vmatmul.bf16.gmra.mxu0 %v1523
        %v1980 = vpop.f32.mrf.mxu0
        %v1981 = vadd.f32 %v1812, %v1980
        %v1982 = vpop.f32.mrf.mxu0
        %v1983 = vadd.f32 %v1814, %v1982
        %1984 = vmatmul.bf16.gmra.mxu0 %v1527
        %v1985 = vpop.f32.mrf.mxu0
        %v1986 = vadd.f32 %v1817, %v1985
        %v1987 = vpop.f32.mrf.mxu0
        %v1988 = vadd.f32 %v1819, %v1987
        %1989 = vmatmul.bf16.gmra.mxu0 %v1531
        %v1990 = vpop.f32.mrf.mxu0
        %v1991 = vadd.f32 %v1822, %v1990
        %v1992 = vpop.f32.mrf.mxu0
        %v1993 = vadd.f32 %v1824, %v1992
        %1994 = vmatmul.bf16.gmra.mxu0 %v1535
        %v1995 = vpop.f32.mrf.mxu0
        %v1996 = vadd.f32 %v1827, %v1995
        %v1997 = vpop.f32.mrf.mxu0
        %v1998 = vadd.f32 %v1829, %v1997
        %1999 = vmatmul.bf16.gmra.mxu0 %v1539
        %v2000 = vpop.f32.mrf.mxu0
        %v2001 = vadd.f32 %v1832, %v2000
        %v2002 = vpop.f32.mrf.mxu0
        %v2003 = vadd.f32 %v1834, %v2002
        %2004 = vmatmul.bf16.gmra.mxu0 %v1543
        %v2005 = vpop.f32.mrf.mxu0
        %v2006 = vadd.f32 %v1837, %v2005
        %v2007 = vpop.f32.mrf.mxu0
        %v2008 = vadd.f32 %v1839, %v2007
        %2009 = vmatmul.bf16.gmra.mxu0 %v1547
        %v2010 = vpop.f32.mrf.mxu0
        %v2011 = vadd.f32 %v1842, %v2010
        %v2012 = vpop.f32.mrf.mxu0
        %v2013 = vadd.f32 %v1844, %v2012
        %2014 = vmatmul.bf16.gmra.mxu0 %v1551
        %v2015 = vpop.f32.mrf.mxu0
        %v2016 = vadd.f32 %v1847, %v2015
        %v2017 = vpop.f32.mrf.mxu0
        %v2018 = vadd.f32 %v1849, %v2017
        %2019 = vdwg.mxu0
        %2020 = vmatpush.bf16.xpose.msra.mxu0 0
        %2021 = vmatpush.bf16.xpose.msra.mxu0 0
        %2022 = vmatpush.bf16.xpose.msra.mxu0 0
        %2023 = vmatpush.bf16.xpose.msra.mxu0 0
        %2024 = vmatpush.bf16.xpose.msra.mxu0 0
        %2025 = vmatpush.bf16.xpose.msra.mxu0 0
        %2026 = vmatpush.bf16.xpose.msra.mxu0 %v1040
        %2027 = vmatpush.bf16.xpose.msra.mxu0 %v1036
        %2028 = vmatmul.bf16.gmra.mxu0 %v1428
        %v2029 = vpop.f32.mrf.mxu0
        %v2030 = vadd.f32 %v1861, %v2029
        %v2031 = vpop.f32.mrf.mxu0
        %v2032 = vadd.f32 %v1863, %v2031
        %2033 = vmatmul.bf16.gmra.mxu0 %v1432
        %v2034 = vpop.f32.mrf.mxu0
        %v2035 = vadd.f32 %v1866, %v2034
        %v2036 = vpop.f32.mrf.mxu0
        %v2037 = vadd.f32 %v1868, %v2036
        %2038 = vmatmul.bf16.gmra.mxu0 %v1436
        %v2039 = vpop.f32.mrf.mxu0
        %v2040 = vadd.f32 %v1871, %v2039
        %v2041 = vpop.f32.mrf.mxu0
        %v2042 = vadd.f32 %v1873, %v2041
        %2043 = vmatmul.bf16.gmra.mxu0 %v1440
        %v2044 = vpop.f32.mrf.mxu0
        %v2045 = vadd.f32 %v1876, %v2044
        %v2046 = vpop.f32.mrf.mxu0
        %v2047 = vadd.f32 %v1878, %v2046
        %2048 = vmatmul.bf16.gmra.mxu0 %v1444
        %v2049 = vpop.f32.mrf.mxu0
        %v2050 = vadd.f32 %v1881, %v2049
        %v2051 = vpop.f32.mrf.mxu0
        %v2052 = vadd.f32 %v1883, %v2051
        %2053 = vmatmul.bf16.gmra.mxu0 %v1448
        %v2054 = vpop.f32.mrf.mxu0
        %v2055 = vadd.f32 %v1886, %v2054
        %v2056 = vpop.f32.mrf.mxu0
        %v2057 = vadd.f32 %v1888, %v2056
        %2058 = vmatmul.bf16.gmra.mxu0 %v1452
        %v2059 = vpop.f32.mrf.mxu0
        %v2060 = vadd.f32 %v1891, %v2059
        %v2061 = vpop.f32.mrf.mxu0
        %v2062 = vadd.f32 %v1893, %v2061
        %2063 = vmatmul.bf16.gmra.mxu0 %v1456
        %v2064 = vpop.f32.mrf.mxu0
        %v2065 = vadd.f32 %v1896, %v2064
        %v2066 = vpop.f32.mrf.mxu0
        %v2067 = vadd.f32 %v1898, %v2066
        %2068 = vmatmul.bf16.gmra.mxu0 %v1460
        %v2069 = vpop.f32.mrf.mxu0
        %v2070 = vadd.f32 %v1901, %v2069
        %v2071 = vpop.f32.mrf.mxu0
        %v2072 = vadd.f32 %v1903, %v2071
        %2073 = vmatmul.bf16.gmra.mxu0 %v1464
        %v2074 = vpop.f32.mrf.mxu0
        %v2075 = vadd.f32 %v1906, %v2074
        %v2076 = vpop.f32.mrf.mxu0
        %v2077 = vadd.f32 %v1908, %v2076
        %2078 = vmatmul.bf16.gmra.mxu0 %v1468
        %v2079 = vpop.f32.mrf.mxu0
        %v2080 = vadd.f32 %v1911, %v2079
        %v2081 = vpop.f32.mrf.mxu0
        %v2082 = vadd.f32 %v1913, %v2081
        %2083 = vmatmul.bf16.gmra.mxu0 %v1472
        %v2084 = vpop.f32.mrf.mxu0
        %v2085 = vadd.f32 %v1916, %v2084
        %v2086 = vpop.f32.mrf.mxu0
        %v2087 = vadd.f32 %v1918, %v2086
        %2088 = vmatmul.bf16.gmra.mxu0 %v1476
        %v2089 = vpop.f32.mrf.mxu0
        %v2090 = vadd.f32 %v1921, %v2089
        %v2091 = vpop.f32.mrf.mxu0
        %v2092 = vadd.f32 %v1923, %v2091
        %2093 = vmatmul.bf16.gmra.mxu0 %v1480
        %v2094 = vpop.f32.mrf.mxu0
        %v2095 = vadd.f32 %v1926, %v2094
        %v2096 = vpop.f32.mrf.mxu0
        %v2097 = vadd.f32 %v1928, %v2096
        %2098 = vmatmul.bf16.gmra.mxu0 %v1484
        %v2099 = vpop.f32.mrf.mxu0
        %v2100 = vadd.f32 %v1931, %v2099
        %v2101 = vpop.f32.mrf.mxu0
        %v2102 = vadd.f32 %v1933, %v2101
        %2103 = vmatmul.bf16.gmra.mxu0 %v1488
        %v2104 = vpop.f32.mrf.mxu0
        %v2105 = vadd.f32 %v1936, %v2104
        %v2106 = vpop.f32.mrf.mxu0
        %v2107 = vadd.f32 %v1938, %v2106
        %2108 = vmatmul.bf16.gmra.mxu0 %v1492
        %v2109 = vpop.f32.mrf.mxu0
        %v2110 = vadd.f32 %v1941, %v2109
        %v2111 = vpop.f32.mrf.mxu0
        %v2112 = vadd.f32 %v1943, %v2111
        %2113 = vmatmul.bf16.gmra.mxu0 %v1496
        %v2114 = vpop.f32.mrf.mxu0
        %v2115 = vadd.f32 %v1946, %v2114
        %v2116 = vpop.f32.mrf.mxu0
        %v2117 = vadd.f32 %v1948, %v2116
        %2118 = vmatmul.bf16.gmra.mxu0 %v1500
        %v2119 = vpop.f32.mrf.mxu0
        %v2120 = vadd.f32 %v1951, %v2119
        %v2121 = vpop.f32.mrf.mxu0
        %v2122 = vadd.f32 %v1953, %v2121
        %2123 = vmatmul.bf16.gmra.mxu0 %v1504
        %v2124 = vpop.f32.mrf.mxu0
        %v2125 = vadd.f32 %v1956, %v2124
        %v2126 = vpop.f32.mrf.mxu0
        %v2127 = vadd.f32 %v1958, %v2126
        %2128 = vmatmul.bf16.gmra.mxu0 %v1508
        %v2129 = vpop.f32.mrf.mxu0
        %v2130 = vadd.f32 %v1961, %v2129
        %v2131 = vpop.f32.mrf.mxu0
        %v2132 = vadd.f32 %v1963, %v2131
        %2133 = vmatmul.bf16.gmra.mxu0 %v1512
        %v2134 = vpop.f32.mrf.mxu0
        %v2135 = vadd.f32 %v1966, %v2134
        %v2136 = vpop.f32.mrf.mxu0
        %v2137 = vadd.f32 %v1968, %v2136
        %2138 = vmatmul.bf16.gmra.mxu0 %v1516
        %v2139 = vpop.f32.mrf.mxu0
        %v2140 = vadd.f32 %v1971, %v2139
        %v2141 = vpop.f32.mrf.mxu0
        %v2142 = vadd.f32 %v1973, %v2141
        %2143 = vmatmul.bf16.gmra.mxu0 %v1520
        %v2144 = vpop.f32.mrf.mxu0
        %v2145 = vadd.f32 %v1976, %v2144
        %v2146 = vpop.f32.mrf.mxu0
        %v2147 = vadd.f32 %v1978, %v2146
        %2148 = vmatmul.bf16.gmra.mxu0 %v1524
        %v2149 = vpop.f32.mrf.mxu0
        %v2150 = vadd.f32 %v1981, %v2149
        %v2151 = vpop.f32.mrf.mxu0
        %v2152 = vadd.f32 %v1983, %v2151
        %2153 = vmatmul.bf16.gmra.mxu0 %v1528
        %v2154 = vpop.f32.mrf.mxu0
        %v2155 = vadd.f32 %v1986, %v2154
        %v2156 = vpop.f32.mrf.mxu0
        %v2157 = vadd.f32 %v1988, %v2156
        %2158 = vmatmul.bf16.gmra.mxu0 %v1532
        %v2159 = vpop.f32.mrf.mxu0
        %v2160 = vadd.f32 %v1991, %v2159
        %v2161 = vpop.f32.mrf.mxu0
        %v2162 = vadd.f32 %v1993, %v2161
        %2163 = vmatmul.bf16.gmra.mxu0 %v1536
        %v2164 = vpop.f32.mrf.mxu0
        %v2165 = vadd.f32 %v1996, %v2164
        %v2166 = vpop.f32.mrf.mxu0
        %v2167 = vadd.f32 %v1998, %v2166
        %2168 = vmatmul.bf16.gmra.mxu0 %v1540
        %v2169 = vpop.f32.mrf.mxu0
        %v2170 = vadd.f32 %v2001, %v2169
        %v2171 = vpop.f32.mrf.mxu0
        %v2172 = vadd.f32 %v2003, %v2171
        %2173 = vmatmul.bf16.gmra.mxu0 %v1544
        %v2174 = vpop.f32.mrf.mxu0
        %v2175 = vadd.f32 %v2006, %v2174
        %v2176 = vpop.f32.mrf.mxu0
        %v2177 = vadd.f32 %v2008, %v2176
        %2178 = vmatmul.bf16.gmra.mxu0 %v1548
        %v2179 = vpop.f32.mrf.mxu0
        %v2180 = vadd.f32 %v2011, %v2179
        %v2181 = vpop.f32.mrf.mxu0
        %v2182 = vadd.f32 %v2013, %v2181
        %2183 = vmatmul.bf16.gmra.mxu0 %v1552
        %v2184 = vpop.f32.mrf.mxu0
        %v2185 = vadd.f32 %v2016, %v2184
        %v2186 = vpop.f32.mrf.mxu0
        %v2187 = vadd.f32 %v2018, %v2186
        %2188 = vdwg.mxu0
        %2189 = vmatpush.bf16.xpose.msra.mxu0 0
        %2190 = vmatpush.bf16.xpose.msra.mxu0 0
        %2191 = vmatpush.bf16.xpose.msra.mxu0 0
        %2192 = vmatpush.bf16.xpose.msra.mxu0 0
        %2193 = vmatpush.bf16.xpose.msra.mxu0 0
        %2194 = vmatpush.bf16.xpose.msra.mxu0 0
        %2195 = vmatpush.bf16.xpose.msra.mxu0 %v1041
        %2196 = vmatpush.bf16.xpose.msra.mxu0 %v1037
        %2197 = vmatmul.bf16.gmra.mxu0 %v1429
        %v2198 = vpop.f32.mrf.mxu0
        %v2199 = vadd.f32 %v2030, %v2198
        %v2200 = vpop.f32.mrf.mxu0
        %v2201 = vadd.f32 %v2032, %v2200
        %2202 = vmatmul.bf16.gmra.mxu0 %v1433
        %v2203 = vpop.f32.mrf.mxu0
        %v2204 = vadd.f32 %v2035, %v2203
        %v2205 = vpop.f32.mrf.mxu0
        %v2206 = vadd.f32 %v2037, %v2205
        %2207 = vmatmul.bf16.gmra.mxu0 %v1437
        %v2208 = vpop.f32.mrf.mxu0
        %v2209 = vadd.f32 %v2040, %v2208
        %v2210 = vpop.f32.mrf.mxu0
        %v2211 = vadd.f32 %v2042, %v2210
        %2212 = vmatmul.bf16.gmra.mxu0 %v1441
        %v2213 = vpop.f32.mrf.mxu0
        %v2214 = vadd.f32 %v2045, %v2213
        %v2215 = vpop.f32.mrf.mxu0
        %v2216 = vadd.f32 %v2047, %v2215
        %2217 = vmatmul.bf16.gmra.mxu0 %v1445
        %v2218 = vpop.f32.mrf.mxu0
        %v2219 = vadd.f32 %v2050, %v2218
        %v2220 = vpop.f32.mrf.mxu0
        %v2221 = vadd.f32 %v2052, %v2220
        %2222 = vmatmul.bf16.gmra.mxu0 %v1449
        %v2223 = vpop.f32.mrf.mxu0
        %v2224 = vadd.f32 %v2055, %v2223
        %v2225 = vpop.f32.mrf.mxu0
        %v2226 = vadd.f32 %v2057, %v2225
        %2227 = vmatmul.bf16.gmra.mxu0 %v1453
        %v2228 = vpop.f32.mrf.mxu0
        %v2229 = vadd.f32 %v2060, %v2228
        %v2230 = vpop.f32.mrf.mxu0
        %v2231 = vadd.f32 %v2062, %v2230
        %2232 = vmatmul.bf16.gmra.mxu0 %v1457
        %v2233 = vpop.f32.mrf.mxu0
        %v2234 = vadd.f32 %v2065, %v2233
        %v2235 = vpop.f32.mrf.mxu0
        %v2236 = vadd.f32 %v2067, %v2235
        %2237 = vmatmul.bf16.gmra.mxu0 %v1461
        %v2238 = vpop.f32.mrf.mxu0
        %v2239 = vadd.f32 %v2070, %v2238
        %v2240 = vpop.f32.mrf.mxu0
        %v2241 = vadd.f32 %v2072, %v2240
        %2242 = vmatmul.bf16.gmra.mxu0 %v1465
        %v2243 = vpop.f32.mrf.mxu0
        %v2244 = vadd.f32 %v2075, %v2243
        %v2245 = vpop.f32.mrf.mxu0
        %v2246 = vadd.f32 %v2077, %v2245
        %2247 = vmatmul.bf16.gmra.mxu0 %v1469
        %v2248 = vpop.f32.mrf.mxu0
        %v2249 = vadd.f32 %v2080, %v2248
        %v2250 = vpop.f32.mrf.mxu0
        %v2251 = vadd.f32 %v2082, %v2250
        %2252 = vmatmul.bf16.gmra.mxu0 %v1473
        %v2253 = vpop.f32.mrf.mxu0
        %v2254 = vadd.f32 %v2085, %v2253
        %v2255 = vpop.f32.mrf.mxu0
        %v2256 = vadd.f32 %v2087, %v2255
        %2257 = vmatmul.bf16.gmra.mxu0 %v1477
        %v2258 = vpop.f32.mrf.mxu0
        %v2259 = vadd.f32 %v2090, %v2258
        %v2260 = vpop.f32.mrf.mxu0
        %v2261 = vadd.f32 %v2092, %v2260
        %2262 = vmatmul.bf16.gmra.mxu0 %v1481
        %v2263 = vpop.f32.mrf.mxu0
        %v2264 = vadd.f32 %v2095, %v2263
        %v2265 = vpop.f32.mrf.mxu0
        %v2266 = vadd.f32 %v2097, %v2265
        %2267 = vmatmul.bf16.gmra.mxu0 %v1485
        %v2268 = vpop.f32.mrf.mxu0
        %v2269 = vadd.f32 %v2100, %v2268
        %v2270 = vpop.f32.mrf.mxu0
        %v2271 = vadd.f32 %v2102, %v2270
        %2272 = vmatmul.bf16.gmra.mxu0 %v1489
        %v2273 = vpop.f32.mrf.mxu0
        %v2274 = vadd.f32 %v2105, %v2273
        %v2275 = vpop.f32.mrf.mxu0
        %v2276 = vadd.f32 %v2107, %v2275
        %2277 = vmatmul.bf16.gmra.mxu0 %v1493
        %v2278 = vpop.f32.mrf.mxu0
        %v2279 = vadd.f32 %v2110, %v2278
        %v2280 = vpop.f32.mrf.mxu0
        %v2281 = vadd.f32 %v2112, %v2280
        %2282 = vmatmul.bf16.gmra.mxu0 %v1497
        %v2283 = vpop.f32.mrf.mxu0
        %v2284 = vadd.f32 %v2115, %v2283
        %v2285 = vpop.f32.mrf.mxu0
        %v2286 = vadd.f32 %v2117, %v2285
        %2287 = vmatmul.bf16.gmra.mxu0 %v1501
        %v2288 = vpop.f32.mrf.mxu0
        %v2289 = vadd.f32 %v2120, %v2288
        %v2290 = vpop.f32.mrf.mxu0
        %v2291 = vadd.f32 %v2122, %v2290
        %2292 = vmatmul.bf16.gmra.mxu0 %v1505
        %v2293 = vpop.f32.mrf.mxu0
        %v2294 = vadd.f32 %v2125, %v2293
        %v2295 = vpop.f32.mrf.mxu0
        %v2296 = vadd.f32 %v2127, %v2295
        %2297 = vmatmul.bf16.gmra.mxu0 %v1509
        %v2298 = vpop.f32.mrf.mxu0
        %v2299 = vadd.f32 %v2130, %v2298
        %v2300 = vpop.f32.mrf.mxu0
        %v2301 = vadd.f32 %v2132, %v2300
        %2302 = vmatmul.bf16.gmra.mxu0 %v1513
        %v2303 = vpop.f32.mrf.mxu0
        %v2304 = vadd.f32 %v2135, %v2303
        %v2305 = vpop.f32.mrf.mxu0
        %v2306 = vadd.f32 %v2137, %v2305
        %2307 = vmatmul.bf16.gmra.mxu0 %v1517
        %v2308 = vpop.f32.mrf.mxu0
        %v2309 = vadd.f32 %v2140, %v2308
        %v2310 = vpop.f32.mrf.mxu0
        %v2311 = vadd.f32 %v2142, %v2310
        %2312 = vmatmul.bf16.gmra.mxu0 %v1521
        %v2313 = vpop.f32.mrf.mxu0
        %v2314 = vadd.f32 %v2145, %v2313
        %v2315 = vpop.f32.mrf.mxu0
        %v2316 = vadd.f32 %v2147, %v2315
        %2317 = vmatmul.bf16.gmra.mxu0 %v1525
        %v2318 = vpop.f32.mrf.mxu0
        %v2319 = vadd.f32 %v2150, %v2318
        %v2320 = vpop.f32.mrf.mxu0
        %v2321 = vadd.f32 %v2152, %v2320
        %2322 = vmatmul.bf16.gmra.mxu0 %v1529
        %v2323 = vpop.f32.mrf.mxu0
        %v2324 = vadd.f32 %v2155, %v2323
        %v2325 = vpop.f32.mrf.mxu0
        %v2326 = vadd.f32 %v2157, %v2325
        %2327 = vmatmul.bf16.gmra.mxu0 %v1533
        %v2328 = vpop.f32.mrf.mxu0
        %v2329 = vadd.f32 %v2160, %v2328
        %v2330 = vpop.f32.mrf.mxu0
        %v2331 = vadd.f32 %v2162, %v2330
        %2332 = vmatmul.bf16.gmra.mxu0 %v1537
        %v2333 = vpop.f32.mrf.mxu0
        %v2334 = vadd.f32 %v2165, %v2333
        %v2335 = vpop.f32.mrf.mxu0
        %v2336 = vadd.f32 %v2167, %v2335
        %2337 = vmatmul.bf16.gmra.mxu0 %v1541
        %v2338 = vpop.f32.mrf.mxu0
        %v2339 = vadd.f32 %v2170, %v2338
        %v2340 = vpop.f32.mrf.mxu0
        %v2341 = vadd.f32 %v2172, %v2340
        %2342 = vmatmul.bf16.gmra.mxu0 %v1545
        %v2343 = vpop.f32.mrf.mxu0
        %v2344 = vadd.f32 %v2175, %v2343
        %v2345 = vpop.f32.mrf.mxu0
        %v2346 = vadd.f32 %v2177, %v2345
        %2347 = vmatmul.bf16.gmra.mxu0 %v1549
        %v2348 = vpop.f32.mrf.mxu0
        %v2349 = vadd.f32 %v2180, %v2348
        %v2350 = vpop.f32.mrf.mxu0
        %v2351 = vadd.f32 %v2182, %v2350
        %2352 = vmatmul.bf16.gmra.mxu0 %v1553
        %v2353 = vpop.f32.mrf.mxu0
        %v2354 = vadd.f32 %v2185, %v2353
        %v2355 = vpop.f32.mrf.mxu0
        %v2356 = vadd.f32 %v2187, %v2355
        %2357 = vdwg.mxu0
        %v2358 = vmax.f32 %v2199, %v2219
        %v2359 = vmax.f32 %v2201, %v2221
        %v2360 = vmax.f32 %v2204, %v2224
        %v2361 = vmax.f32 %v2206, %v2226
        %v2362 = vmax.f32 %v2209, %v2229
        %v2363 = vmax.f32 %v2211, %v2231
        %v2364 = vmax.f32 %v2214, %v2234
        %v2365 = vmax.f32 %v2216, %v2236
        %v2366 = vmax.f32 %v2239, %v2259
        %v2367 = vmax.f32 %v2241, %v2261
        %v2368 = vmax.f32 %v2244, %v2264
        %v2369 = vmax.f32 %v2246, %v2266
        %v2370 = vmax.f32 %v2249, %v2269
        %v2371 = vmax.f32 %v2251, %v2271
        %v2372 = vmax.f32 %v2254, %v2274
        %v2373 = vmax.f32 %v2256, %v2276
        %v2374 = vmax.f32 %v2279, %v2299
        %v2375 = vmax.f32 %v2281, %v2301
        %v2376 = vmax.f32 %v2284, %v2304
        %v2377 = vmax.f32 %v2286, %v2306
        %v2378 = vmax.f32 %v2289, %v2309
        %v2379 = vmax.f32 %v2291, %v2311
        %v2380 = vmax.f32 %v2294, %v2314
        %v2381 = vmax.f32 %v2296, %v2316
        %v2382 = vmax.f32 %v2319, %v2339
        %v2383 = vmax.f32 %v2321, %v2341
        %v2384 = vmax.f32 %v2324, %v2344
        %v2385 = vmax.f32 %v2326, %v2346
        %v2386 = vmax.f32 %v2329, %v2349
        %v2387 = vmax.f32 %v2331, %v2351
        %v2388 = vmax.f32 %v2334, %v2354
        %v2389 = vmax.f32 %v2336, %v2356
        %v2390 = vmax.f32 %v2358, %v2366
        %v2391 = vmax.f32 %v2359, %v2367
        %v2392 = vmax.f32 %v2360, %v2368
        %v2393 = vmax.f32 %v2361, %v2369
        %v2394 = vmax.f32 %v2362, %v2370
        %v2395 = vmax.f32 %v2363, %v2371
        %v2396 = vmax.f32 %v2364, %v2372
        %v2397 = vmax.f32 %v2365, %v2373
        %v2398 = vmax.f32 %v2374, %v2382
        %v2399 = vmax.f32 %v2375, %v2383
        %v2400 = vmax.f32 %v2376, %v2384
        %v2401 = vmax.f32 %v2377, %v2385
        %v2402 = vmax.f32 %v2378, %v2386
        %v2403 = vmax.f32 %v2379, %v2387
        %v2404 = vmax.f32 %v2380, %v2388
        %v2405 = vmax.f32 %v2381, %v2389
        %v2406 = vmax.f32 %v2390, %v2398
        %v2407 = vmax.f32 %v2391, %v2399
        %v2408 = vmax.f32 %v2392, %v2400
        %v2409 = vmax.f32 %v2393, %v2401
        %v2410 = vmax.f32 %v2394, %v2402
        %v2411 = vmax.f32 %v2395, %v2403
        %v2412 = vmax.f32 %v2396, %v2404
        %v2413 = vmax.f32 %v2397, %v2405
        %vm2414 = vcmask 130048
        %v2416 = vsel %vm2414, %v2406, 0
        %v2419 = vsel %vm2414, %v2407, 0
        %v2422 = vsel %vm2414, %v2408, 0
        %v2425 = vsel %vm2414, %v2409, 0
        %v2428 = vsel %vm2414, %v2410, 0
        %v2431 = vsel %vm2414, %v2411, 0
        %v2434 = vsel %vm2414, %v2412, 0
        %v2437 = vsel %vm2414, %v2413, 0
        %2439 = vmatpush.msra.mxu0 0.0
        %2440 = vmatpush.msra.mxu0 0.0
        %2441 = vmatpush.msra.mxu0 0.0
        %2442 = vmatpush.msra.mxu0 0.0
        %2443 = vmatpush.msra.mxu0 0.0
        %2444 = vmatpush.msra.mxu0 0.0
        %2445 = vmatpush.msra.mxu0 0.0
        %2446 = vmatpush.msra.mxu0 0.0
        %2447 = vmatpush.msra.mxu0 0.0
        %2448 = vmatpush.msra.mxu0 0.0
        %2449 = vmatpush.msra.mxu0 0.0
        %2450 = vmatpush.msra.mxu0 0.0
        %2451 = vmatpush.msra.mxu0 0.0
        %2452 = vmatpush.msra.mxu0 0.0
        %2453 = vmatpush.msra.mxu0 %v822
        %2454 = vmatpush.msra.mxu0 %v820
        %2455 = vmatmul.f32.gmra.mxu0 %v2416
        %v2456 = vpop.f32.mrf.mxu0
        %v2457 = vadd.f32 0.0, %v2456
        %2458 = vmatmul.f32.gmra.mxu0 %v2419
        %v2459 = vpop.f32.mrf.mxu0
        %v2460 = vadd.f32 0.0, %v2459
        %2461 = vmatmul.f32.gmra.mxu0 %v2422
        %v2462 = vpop.f32.mrf.mxu0
        %v2463 = vadd.f32 0.0, %v2462
        %2464 = vmatmul.f32.gmra.mxu0 %v2425
        %v2465 = vpop.f32.mrf.mxu0
        %v2466 = vadd.f32 0.0, %v2465
        %2467 = vmatmul.f32.gmra.mxu0 %v2428
        %v2468 = vpop.f32.mrf.mxu0
        %v2469 = vadd.f32 0.0, %v2468
        %2470 = vmatmul.f32.gmra.mxu0 %v2431
        %v2471 = vpop.f32.mrf.mxu0
        %v2472 = vadd.f32 0.0, %v2471
        %2473 = vmatmul.f32.gmra.mxu0 %v2434
        %v2474 = vpop.f32.mrf.mxu0
        %v2475 = vadd.f32 0.0, %v2474
        %2476 = vmatmul.f32.gmra.mxu0 %v2437
        %v2477 = vpop.f32.mrf.mxu0
        %v2478 = vadd.f32 0.0, %v2477
        %2479 = vdwg.mxu0
        %2480 = vmatpush.msra.mxu0 0.0
        %2481 = vmatpush.msra.mxu0 0.0
        %2482 = vmatpush.msra.mxu0 0.0
        %2483 = vmatpush.msra.mxu0 0.0
        %2484 = vmatpush.msra.mxu0 0.0
        %2485 = vmatpush.msra.mxu0 0.0
        %2486 = vmatpush.msra.mxu0 0.0
        %2487 = vmatpush.msra.mxu0 0.0
        %2488 = vmatpush.msra.mxu0 0.0
        %2489 = vmatpush.msra.mxu0 0.0
        %2490 = vmatpush.msra.mxu0 0.0
        %2491 = vmatpush.msra.mxu0 0.0
        %2492 = vmatpush.msra.mxu0 0.0
        %2493 = vmatpush.msra.mxu0 0.0
        %2494 = vmatpush.msra.mxu0 %v846
        %2495 = vmatpush.msra.mxu0 %v844
        %2496 = vmatmul.f32.gmra.mxu0 %v2416
        %v2497 = vpop.f32.mrf.mxu0
        %v2498 = vadd.f32 0.0, %v2497
        %2499 = vmatmul.f32.gmra.mxu0 %v2419
        %v2500 = vpop.f32.mrf.mxu0
        %v2501 = vadd.f32 0.0, %v2500
        %2502 = vmatmul.f32.gmra.mxu0 %v2422
        %v2503 = vpop.f32.mrf.mxu0
        %v2504 = vadd.f32 0.0, %v2503
        %2505 = vmatmul.f32.gmra.mxu0 %v2425
        %v2506 = vpop.f32.mrf.mxu0
        %v2507 = vadd.f32 0.0, %v2506
        %2508 = vmatmul.f32.gmra.mxu0 %v2428
        %v2509 = vpop.f32.mrf.mxu0
        %v2510 = vadd.f32 0.0, %v2509
        %2511 = vmatmul.f32.gmra.mxu0 %v2431
        %v2512 = vpop.f32.mrf.mxu0
        %v2513 = vadd.f32 0.0, %v2512
        %2514 = vmatmul.f32.gmra.mxu0 %v2434
        %v2515 = vpop.f32.mrf.mxu0
        %v2516 = vadd.f32 0.0, %v2515
        %2517 = vmatmul.f32.gmra.mxu0 %v2437
        %v2518 = vpop.f32.mrf.mxu0
        %v2519 = vadd.f32 0.0, %v2518
        %2520 = vdwg.mxu0
        %2521 = vmatpush.msra.mxu0 0.0
        %2522 = vmatpush.msra.mxu0 0.0
        %2523 = vmatpush.msra.mxu0 0.0
        %2524 = vmatpush.msra.mxu0 0.0
        %2525 = vmatpush.msra.mxu0 0.0
        %2526 = vmatpush.msra.mxu0 0.0
        %2527 = vmatpush.msra.mxu0 0.0
        %2528 = vmatpush.msra.mxu0 0.0
        %2529 = vmatpush.msra.mxu0 0.0
        %2530 = vmatpush.msra.mxu0 0.0
        %2531 = vmatpush.msra.mxu0 0.0
        %2532 = vmatpush.msra.mxu0 0.0
        %2533 = vmatpush.msra.mxu0 0.0
        %2534 = vmatpush.msra.mxu0 0.0
        %2535 = vmatpush.msra.mxu0 %v870
        %2536 = vmatpush.msra.mxu0 %v868
        %2537 = vmatmul.f32.gmra.mxu0 %v2416
        %v2538 = vpop.f32.mrf.mxu0
        %v2539 = vadd.f32 0.0, %v2538
        %2540 = vmatmul.f32.gmra.mxu0 %v2419
        %v2541 = vpop.f32.mrf.mxu0
        %v2542 = vadd.f32 0.0, %v2541
        %2543 = vmatmul.f32.gmra.mxu0 %v2422
        %v2544 = vpop.f32.mrf.mxu0
        %v2545 = vadd.f32 0.0, %v2544
        %2546 = vmatmul.f32.gmra.mxu0 %v2425
        %v2547 = vpop.f32.mrf.mxu0
        %v2548 = vadd.f32 0.0, %v2547
        %2549 = vmatmul.f32.gmra.mxu0 %v2428
        %v2550 = vpop.f32.mrf.mxu0
        %v2551 = vadd.f32 0.0, %v2550
        %2552 = vmatmul.f32.gmra.mxu0 %v2431
        %v2553 = vpop.f32.mrf.mxu0
        %v2554 = vadd.f32 0.0, %v2553
        %2555 = vmatmul.f32.gmra.mxu0 %v2434
        %v2556 = vpop.f32.mrf.mxu0
        %v2557 = vadd.f32 0.0, %v2556
        %2558 = vmatmul.f32.gmra.mxu0 %v2437
        %v2559 = vpop.f32.mrf.mxu0
        %v2560 = vadd.f32 0.0, %v2559
        %2561 = vdwg.mxu0
        %2562 = vmatpush.msra.mxu0 0.0
        %2563 = vmatpush.msra.mxu0 0.0
        %2564 = vmatpush.msra.mxu0 0.0
        %2565 = vmatpush.msra.mxu0 0.0
        %2566 = vmatpush.msra.mxu0 0.0
        %2567 = vmatpush.msra.mxu0 0.0
        %2568 = vmatpush.msra.mxu0 0.0
        %2569 = vmatpush.msra.mxu0 0.0
        %2570 = vmatpush.msra.mxu0 0.0
        %2571 = vmatpush.msra.mxu0 0.0
        %2572 = vmatpush.msra.mxu0 0.0
        %2573 = vmatpush.msra.mxu0 0.0
        %2574 = vmatpush.msra.mxu0 0.0
        %2575 = vmatpush.msra.mxu0 0.0
        %2576 = vmatpush.msra.mxu0 %v894
        %2577 = vmatpush.msra.mxu0 %v892
        %2578 = vmatmul.f32.gmra.mxu0 %v2416
        %v2579 = vpop.f32.mrf.mxu0
        %v2580 = vadd.f32 0.0, %v2579
        %2581 = vmatmul.f32.gmra.mxu0 %v2419
        %v2582 = vpop.f32.mrf.mxu0
        %v2583 = vadd.f32 0.0, %v2582
        %2584 = vmatmul.f32.gmra.mxu0 %v2422
        %v2585 = vpop.f32.mrf.mxu0
        %v2586 = vadd.f32 0.0, %v2585
        %2587 = vmatmul.f32.gmra.mxu0 %v2425
        %v2588 = vpop.f32.mrf.mxu0
        %v2589 = vadd.f32 0.0, %v2588
        %2590 = vmatmul.f32.gmra.mxu0 %v2428
        %v2591 = vpop.f32.mrf.mxu0
        %v2592 = vadd.f32 0.0, %v2591
        %2593 = vmatmul.f32.gmra.mxu0 %v2431
        %v2594 = vpop.f32.mrf.mxu0
        %v2595 = vadd.f32 0.0, %v2594
        %2596 = vmatmul.f32.gmra.mxu0 %v2434
        %v2597 = vpop.f32.mrf.mxu0
        %v2598 = vadd.f32 0.0, %v2597
        %2599 = vmatmul.f32.gmra.mxu0 %v2437
        %v2600 = vpop.f32.mrf.mxu0
        %v2601 = vadd.f32 0.0, %v2600
        %2602 = vdwg.mxu0
        %v2603 = vmax.f32 %v2457, %v2460
        %v2604 = vmax.f32 %v2603, %v2463
        %v2605 = vmax.f32 %v2604, %v2466
        %v2606 = vmax.f32 %v2605, %v2469
        %v2607 = vmax.f32 %v2606, %v2472
        %v2608 = vmax.f32 %v2607, %v2475
        %v2609 = vmax.f32 %v2608, %v2478
        %v2610 = vrot.slane %v2609, 4
        %v2611 = vmax.f32 %v2609, %v2610
        %v2612 = vrot.slane %v2611, 2
        %v2613 = vmax.f32 %v2611, %v2612
        %v2614 = vrot.slane %v2613, 1
        %v2615 = vmax.f32 %v2613, %v2614
        %v2616 = vmax.f32 %v2498, %v2501
        %v2617 = vmax.f32 %v2616, %v2504
        %v2618 = vmax.f32 %v2617, %v2507
        %v2619 = vmax.f32 %v2618, %v2510
        %v2620 = vmax.f32 %v2619, %v2513
        %v2621 = vmax.f32 %v2620, %v2516
        %v2622 = vmax.f32 %v2621, %v2519
        %v2623 = vrot.slane %v2622, 4
        %v2624 = vmax.f32 %v2622, %v2623
        %v2625 = vrot.slane %v2624, 2
        %v2626 = vmax.f32 %v2624, %v2625
        %v2627 = vrot.slane %v2626, 1
        %v2628 = vmax.f32 %v2626, %v2627
        %v2629 = vmax.f32 %v2539, %v2542
        %v2630 = vmax.f32 %v2629, %v2545
        %v2631 = vmax.f32 %v2630, %v2548
        %v2632 = vmax.f32 %v2631, %v2551
        %v2633 = vmax.f32 %v2632, %v2554
        %v2634 = vmax.f32 %v2633, %v2557
        %v2635 = vmax.f32 %v2634, %v2560
        %v2636 = vrot.slane %v2635, 4
        %v2637 = vmax.f32 %v2635, %v2636
        %v2638 = vrot.slane %v2637, 2
        %v2639 = vmax.f32 %v2637, %v2638
        %v2640 = vrot.slane %v2639, 1
        %v2641 = vmax.f32 %v2639, %v2640
        %v2642 = vmax.f32 %v2580, %v2583
        %v2643 = vmax.f32 %v2642, %v2586
        %v2644 = vmax.f32 %v2643, %v2589
        %v2645 = vmax.f32 %v2644, %v2592
        %v2646 = vmax.f32 %v2645, %v2595
        %v2647 = vmax.f32 %v2646, %v2598
        %v2648 = vmax.f32 %v2647, %v2601
        %v2649 = vrot.slane %v2648, 4
        %v2650 = vmax.f32 %v2648, %v2649
        %v2651 = vrot.slane %v2650, 2
        %v2652 = vmax.f32 %v2650, %v2651
        %v2653 = vrot.slane %v2652, 1
        %v2654 = vmax.f32 %v2652, %v2653
        %v2655 = vsub.f32 %v2457, %v2615
        %v2656 = vsub.f32 %v2498, %v2628
        %v2657 = vsub.f32 %v2539, %v2641
        %v2658 = vsub.f32 %v2580, %v2654
        %v2659 = vsub.f32 %v2460, %v2615
        %v2660 = vsub.f32 %v2501, %v2628
        %v2661 = vsub.f32 %v2542, %v2641
        %v2662 = vsub.f32 %v2583, %v2654
        %v2663 = vsub.f32 %v2463, %v2615
        %v2664 = vsub.f32 %v2504, %v2628
        %v2665 = vsub.f32 %v2545, %v2641
        %v2666 = vsub.f32 %v2586, %v2654
        %v2667 = vsub.f32 %v2466, %v2615
        %v2668 = vsub.f32 %v2507, %v2628
        %v2669 = vsub.f32 %v2548, %v2641
        %v2670 = vsub.f32 %v2589, %v2654
        %v2671 = vsub.f32 %v2469, %v2615
        %v2672 = vsub.f32 %v2510, %v2628
        %v2673 = vsub.f32 %v2551, %v2641
        %v2674 = vsub.f32 %v2592, %v2654
        %v2675 = vsub.f32 %v2472, %v2615
        %v2676 = vsub.f32 %v2513, %v2628
        %v2677 = vsub.f32 %v2554, %v2641
        %v2678 = vsub.f32 %v2595, %v2654
        %v2679 = vsub.f32 %v2475, %v2615
        %v2680 = vsub.f32 %v2516, %v2628
        %v2681 = vsub.f32 %v2557, %v2641
        %v2682 = vsub.f32 %v2598, %v2654
        %v2683 = vsub.f32 %v2478, %v2615
        %v2684 = vsub.f32 %v2519, %v2628
        %v2685 = vsub.f32 %v2560, %v2641
        %v2686 = vsub.f32 %v2601, %v2654
        %v2687 = vmul.f32 %v2655, 1.442695
        %v2688 = vpow.pop %v2687
        %v2689 = vmul.f32 %v2656, 1.442695
        %v2690 = vpow.pop %v2689
        %v2691 = vmul.f32 %v2657, 1.442695
        %v2692 = vpow.pop %v2691
        %v2693 = vmul.f32 %v2658, 1.442695
        %v2694 = vpow.pop %v2693
        %v2695 = vmul.f32 %v2659, 1.442695
        %v2696 = vpow.pop %v2695
        %v2697 = vmul.f32 %v2660, 1.442695
        %v2698 = vpow.pop %v2697
        %v2699 = vmul.f32 %v2661, 1.442695
        %v2700 = vpow.pop %v2699
        %v2701 = vmul.f32 %v2662, 1.442695
        %v2702 = vpow.pop %v2701
        %v2703 = vmul.f32 %v2663, 1.442695
        %v2704 = vpow.pop %v2703
        %v2705 = vmul.f32 %v2664, 1.442695
        %v2706 = vpow.pop %v2705
        %v2707 = vmul.f32 %v2665, 1.442695
        %v2708 = vpow.pop %v2707
        %v2709 = vmul.f32 %v2666, 1.442695
        %v2710 = vpow.pop %v2709
        %v2711 = vmul.f32 %v2667, 1.442695
        %v2712 = vpow.pop %v2711
        %v2713 = vmul.f32 %v2668, 1.442695
        %v2714 = vpow.pop %v2713
        %v2715 = vmul.f32 %v2669, 1.442695
        %v2716 = vpow.pop %v2715
        %v2717 = vmul.f32 %v2670, 1.442695
        %v2718 = vpow.pop %v2717
        %v2719 = vmul.f32 %v2671, 1.442695
        %v2720 = vpow.pop %v2719
        %v2721 = vmul.f32 %v2672, 1.442695
        %v2722 = vpow.pop %v2721
        %v2723 = vmul.f32 %v2673, 1.442695
        %v2724 = vpow.pop %v2723
        %v2725 = vmul.f32 %v2674, 1.442695
        %v2726 = vpow.pop %v2725
        %v2727 = vmul.f32 %v2675, 1.442695
        %v2728 = vpow.pop %v2727
        %v2729 = vmul.f32 %v2676, 1.442695
        %v2730 = vpow.pop %v2729
        %v2731 = vmul.f32 %v2677, 1.442695
        %v2732 = vpow.pop %v2731
        %v2733 = vmul.f32 %v2678, 1.442695
        %v2734 = vpow.pop %v2733
        %v2735 = vmul.f32 %v2679, 1.442695
        %v2736 = vpow.pop %v2735
        %v2737 = vmul.f32 %v2680, 1.442695
        %v2738 = vpow.pop %v2737
        %v2739 = vmul.f32 %v2681, 1.442695
        %v2740 = vpow.pop %v2739
        %v2741 = vmul.f32 %v2682, 1.442695
        %v2742 = vpow.pop %v2741
        %v2743 = vmul.f32 %v2683, 1.442695
        %v2744 = vpow.pop %v2743
        %v2745 = vmul.f32 %v2684, 1.442695
        %v2746 = vpow.pop %v2745
        %v2747 = vmul.f32 %v2685, 1.442695
        %v2748 = vpow.pop %v2747
        %v2749 = vmul.f32 %v2686, 1.442695
        %v2750 = vpow.pop %v2749
        %v2751 = vadd.f32 %v2688, %v2696
        %v2752 = vadd.f32 %v2751, %v2704
        %v2753 = vadd.f32 %v2752, %v2712
        %v2754 = vadd.f32 %v2753, %v2720
        %v2755 = vadd.f32 %v2754, %v2728
        %v2756 = vadd.f32 %v2755, %v2736
        %v2757 = vadd.f32 %v2756, %v2744
        %v2758 = vrot.slane %v2757, 4
        %v2759 = vadd.f32 %v2757, %v2758
        %v2760 = vrot.slane %v2759, 2
        %v2761 = vadd.f32 %v2759, %v2760
        %v2762 = vrot.slane %v2761, 1
        %v2763 = vadd.f32 %v2761, %v2762
        %v2764 = vadd.f32 %v2690, %v2698
        %v2765 = vadd.f32 %v2764, %v2706
        %v2766 = vadd.f32 %v2765, %v2714
        %v2767 = vadd.f32 %v2766, %v2722
        %v2768 = vadd.f32 %v2767, %v2730
        %v2769 = vadd.f32 %v2768, %v2738
        %v2770 = vadd.f32 %v2769, %v2746
        %v2771 = vrot.slane %v2770, 4
        %v2772 = vadd.f32 %v2770, %v2771
        %v2773 = vrot.slane %v2772, 2
        %v2774 = vadd.f32 %v2772, %v2773
        %v2775 = vrot.slane %v2774, 1
        %v2776 = vadd.f32 %v2774, %v2775
        %v2777 = vadd.f32 %v2692, %v2700
        %v2778 = vadd.f32 %v2777, %v2708
        %v2779 = vadd.f32 %v2778, %v2716
        %v2780 = vadd.f32 %v2779, %v2724
        %v2781 = vadd.f32 %v2780, %v2732
        %v2782 = vadd.f32 %v2781, %v2740
        %v2783 = vadd.f32 %v2782, %v2748
        %v2784 = vrot.slane %v2783, 4
        %v2785 = vadd.f32 %v2783, %v2784
        %v2786 = vrot.slane %v2785, 2
        %v2787 = vadd.f32 %v2785, %v2786
        %v2788 = vrot.slane %v2787, 1
        %v2789 = vadd.f32 %v2787, %v2788
        %v2790 = vadd.f32 %v2694, %v2702
        %v2791 = vadd.f32 %v2790, %v2710
        %v2792 = vadd.f32 %v2791, %v2718
        %v2793 = vadd.f32 %v2792, %v2726
        %v2794 = vadd.f32 %v2793, %v2734
        %v2795 = vadd.f32 %v2794, %v2742
        %v2796 = vadd.f32 %v2795, %v2750
        %v2797 = vrot.slane %v2796, 4
        %v2798 = vadd.f32 %v2796, %v2797
        %v2799 = vrot.slane %v2798, 2
        %v2800 = vadd.f32 %v2798, %v2799
        %v2801 = vrot.slane %v2800, 1
        %v2802 = vadd.f32 %v2800, %v2801
        %v2803 = vrcp.pop %v2763
        %v2804 = vrcp.pop %v2776
        %v2805 = vrcp.pop %v2789
        %v2806 = vrcp.pop %v2802
        %v2807 = vmul.f32 %v2688, %v2803
        %v2808 = vmul.f32 %v2690, %v2804
        %v2809 = vmul.f32 %v2692, %v2805
        %v2810 = vmul.f32 %v2694, %v2806
        %v2811 = vmul.f32 %v2696, %v2803
        %v2812 = vmul.f32 %v2698, %v2804
        %v2813 = vmul.f32 %v2700, %v2805
        %v2814 = vmul.f32 %v2702, %v2806
        %v2815 = vmul.f32 %v2704, %v2803
        %v2816 = vmul.f32 %v2706, %v2804
        %v2817 = vmul.f32 %v2708, %v2805
        %v2818 = vmul.f32 %v2710, %v2806
        %v2819 = vmul.f32 %v2712, %v2803
        %v2820 = vmul.f32 %v2714, %v2804
        %v2821 = vmul.f32 %v2716, %v2805
        %v2822 = vmul.f32 %v2718, %v2806
        %v2823 = vmul.f32 %v2720, %v2803
        %v2824 = vmul.f32 %v2722, %v2804
        %v2825 = vmul.f32 %v2724, %v2805
        %v2826 = vmul.f32 %v2726, %v2806
        %v2827 = vmul.f32 %v2728, %v2803
        %v2828 = vmul.f32 %v2730, %v2804
        %v2829 = vmul.f32 %v2732, %v2805
        %v2830 = vmul.f32 %v2734, %v2806
        %v2831 = vmul.f32 %v2736, %v2803
        %v2832 = vmul.f32 %v2738, %v2804
        %v2833 = vmul.f32 %v2740, %v2805
        %v2834 = vmul.f32 %v2742, %v2806
        %v2835 = vmul.f32 %v2744, %v2803
        %v2836 = vmul.f32 %v2746, %v2804
        %v2837 = vmul.f32 %v2748, %v2805
        %v2838 = vmul.f32 %v2750, %v2806
        %2839 = vxpose.xlu0.b32.start [1/16] %v2406, 128
        %2840 = vxpose.xlu0.b32.cont [2/16] %v2407, 128
        %2841 = vxpose.xlu0.b32.cont [3/16] %v2408, 128
        %2842 = vxpose.xlu0.b32.cont [4/16] %v2409, 128
        %2843 = vxpose.xlu0.b32.cont [5/16] %v2410, 128
        %2844 = vxpose.xlu0.b32.cont [6/16] %v2411, 128
        %2845 = vxpose.xlu0.b32.cont [7/16] %v2412, 128
        %2846 = vxpose.xlu0.b32.cont [8/16] %v2413, 128
        %2847 = vxpose.xlu0.b32.cont [9/16] 0.0, 128
        %2848 = vxpose.xlu0.b32.cont [10/16] 0.0, 128
        %2849 = vxpose.xlu0.b32.cont [11/16] 0.0, 128
        %2850 = vxpose.xlu0.b32.cont [12/16] 0.0, 128
        %2851 = vxpose.xlu0.b32.cont [13/16] 0.0, 128
        %2852 = vxpose.xlu0.b32.cont [14/16] 0.0, 128
        %2853 = vxpose.xlu0.b32.cont [15/16] 0.0, 128
        %2854 = vxpose.xlu0.b32.end [16/16] 0.0, 128
        %v2855 = vpop.trf.xlu0
        %v2856 = vpop.trf.xlu0
        %v2857 = vpop.trf.xlu0
        %v2858 = vpop.trf.xlu0
        %v2859 = vpop.trf.xlu0
        %v2860 = vpop.trf.xlu0
        %v2861 = vpop.trf.xlu0
        %v2862 = vpop.trf.xlu0
        %v2863 = vpop.trf.xlu0
        %v2864 = vpop.trf.xlu0
        %v2865 = vpop.trf.xlu0
        %v2866 = vpop.trf.xlu0
        %v2867 = vpop.trf.xlu0
        %v2868 = vpop.trf.xlu0
        %v2869 = vpop.trf.xlu0
        %v2870 = vpop.trf.xlu0
        %vm2871 = vcmask 523264
        %v2873 = vsel %vm2871, %v2855, 0
        %v2876 = vsel %vm2871, %v2856, 0
        %v2879 = vsel %vm2871, %v2857, 0
        %v2882 = vsel %vm2871, %v2858, 0
        %2884 = vmatpush.msra.mxu0 0.0
        %2885 = vmatpush.msra.mxu0 0.0
        %2886 = vmatpush.msra.mxu0 0.0
        %2887 = vmatpush.msra.mxu0 0.0
        %2888 = vmatpush.msra.mxu0 0.0
        %2889 = vmatpush.msra.mxu0 0.0
        %2890 = vmatpush.msra.mxu0 0.0
        %2891 = vmatpush.msra.mxu0 0.0
        %2892 = vmatpush.msra.mxu0 %v2835
        %2893 = vmatpush.msra.mxu0 %v2831
        %2894 = vmatpush.msra.mxu0 %v2827
        %2895 = vmatpush.msra.mxu0 %v2823
        %2896 = vmatpush.msra.mxu0 %v2819
        %2897 = vmatpush.msra.mxu0 %v2815
        %2898 = vmatpush.msra.mxu0 %v2811
        %2899 = vmatpush.msra.mxu0 %v2807
        %2900 = vmatmul.f32.gmra.mxu0 %v2873
        %v2901 = vpop.f32.mrf.mxu0
        %v2902 = vadd.f32 0.0, %v2901
        %2903 = vmatmul.f32.gmra.mxu0 %v2876
        %v2904 = vpop.f32.mrf.mxu0
        %v2905 = vadd.f32 0.0, %v2904
        %2906 = vmatmul.f32.gmra.mxu0 %v2879
        %v2907 = vpop.f32.mrf.mxu0
        %v2908 = vadd.f32 0.0, %v2907
        %2909 = vmatmul.f32.gmra.mxu0 %v2882
        %v2910 = vpop.f32.mrf.mxu0
        %v2911 = vadd.f32 0.0, %v2910
        %2912 = vdwg.mxu0
        %2913 = vmatpush.msra.mxu0 0.0
        %2914 = vmatpush.msra.mxu0 0.0
        %2915 = vmatpush.msra.mxu0 0.0
        %2916 = vmatpush.msra.mxu0 0.0
        %2917 = vmatpush.msra.mxu0 0.0
        %2918 = vmatpush.msra.mxu0 0.0
        %2919 = vmatpush.msra.mxu0 0.0
        %2920 = vmatpush.msra.mxu0 0.0
        %2921 = vmatpush.msra.mxu0 %v2836
        %2922 = vmatpush.msra.mxu0 %v2832
        %2923 = vmatpush.msra.mxu0 %v2828
        %2924 = vmatpush.msra.mxu0 %v2824
        %2925 = vmatpush.msra.mxu0 %v2820
        %2926 = vmatpush.msra.mxu0 %v2816
        %2927 = vmatpush.msra.mxu0 %v2812
        %2928 = vmatpush.msra.mxu0 %v2808
        %2929 = vmatmul.f32.gmra.mxu0 %v2873
        %v2930 = vpop.f32.mrf.mxu0
        %v2931 = vadd.f32 0.0, %v2930
        %2932 = vmatmul.f32.gmra.mxu0 %v2876
        %v2933 = vpop.f32.mrf.mxu0
        %v2934 = vadd.f32 0.0, %v2933
        %2935 = vmatmul.f32.gmra.mxu0 %v2879
        %v2936 = vpop.f32.mrf.mxu0
        %v2937 = vadd.f32 0.0, %v2936
        %2938 = vmatmul.f32.gmra.mxu0 %v2882
        %v2939 = vpop.f32.mrf.mxu0
        %v2940 = vadd.f32 0.0, %v2939
        %2941 = vdwg.mxu0
        %2942 = vmatpush.msra.mxu0 0.0
        %2943 = vmatpush.msra.mxu0 0.0
        %2944 = vmatpush.msra.mxu0 0.0
        %2945 = vmatpush.msra.mxu0 0.0
        %2946 = vmatpush.msra.mxu0 0.0
        %2947 = vmatpush.msra.mxu0 0.0
        %2948 = vmatpush.msra.mxu0 0.0
        %2949 = vmatpush.msra.mxu0 0.0
        %2950 = vmatpush.msra.mxu0 %v2837
        %2951 = vmatpush.msra.mxu0 %v2833
        %2952 = vmatpush.msra.mxu0 %v2829
        %2953 = vmatpush.msra.mxu0 %v2825
        %2954 = vmatpush.msra.mxu0 %v2821
        %2955 = vmatpush.msra.mxu0 %v2817
        %2956 = vmatpush.msra.mxu0 %v2813
        %2957 = vmatpush.msra.mxu0 %v2809
        %2958 = vmatmul.f32.gmra.mxu0 %v2873
        %v2959 = vpop.f32.mrf.mxu0
        %v2960 = vadd.f32 0.0, %v2959
        %2961 = vmatmul.f32.gmra.mxu0 %v2876
        %v2962 = vpop.f32.mrf.mxu0
        %v2963 = vadd.f32 0.0, %v2962
        %2964 = vmatmul.f32.gmra.mxu0 %v2879
        %v2965 = vpop.f32.mrf.mxu0
        %v2966 = vadd.f32 0.0, %v2965
        %2967 = vmatmul.f32.gmra.mxu0 %v2882
        %v2968 = vpop.f32.mrf.mxu0
        %v2969 = vadd.f32 0.0, %v2968
        %2970 = vdwg.mxu0
        %2971 = vmatpush.msra.mxu0 0.0
        %2972 = vmatpush.msra.mxu0 0.0
        %2973 = vmatpush.msra.mxu0 0.0
        %2974 = vmatpush.msra.mxu0 0.0
        %2975 = vmatpush.msra.mxu0 0.0
        %2976 = vmatpush.msra.mxu0 0.0
        %2977 = vmatpush.msra.mxu0 0.0
        %2978 = vmatpush.msra.mxu0 0.0
        %2979 = vmatpush.msra.mxu0 %v2838
        %2980 = vmatpush.msra.mxu0 %v2834
        %2981 = vmatpush.msra.mxu0 %v2830
        %2982 = vmatpush.msra.mxu0 %v2826
        %2983 = vmatpush.msra.mxu0 %v2822
        %2984 = vmatpush.msra.mxu0 %v2818
        %2985 = vmatpush.msra.mxu0 %v2814
        %2986 = vmatpush.msra.mxu0 %v2810
        %2987 = vmatmul.f32.gmra.mxu0 %v2873
        %v2988 = vpop.f32.mrf.mxu0
        %v2989 = vadd.f32 0.0, %v2988
        %2990 = vmatmul.f32.gmra.mxu0 %v2876
        %v2991 = vpop.f32.mrf.mxu0
        %v2992 = vadd.f32 0.0, %v2991
        %2993 = vmatmul.f32.gmra.mxu0 %v2879
        %v2994 = vpop.f32.mrf.mxu0
        %v2995 = vadd.f32 0.0, %v2994
        %2996 = vmatmul.f32.gmra.mxu0 %v2882
        %v2997 = vpop.f32.mrf.mxu0
        %v2998 = vadd.f32 0.0, %v2997
        %2999 = vdwg.mxu0
        %v3000 = vld [vmem:[%s370] sm:$0xf]
        %v3001 = vld [vmem:[%s370 + $0x4] sm:$0xf]
        %v3002 = vld [vmem:[%s370 + $0x8] sm:$0xf]
        %v3003 = vld [vmem:[%s370 + $0xc] sm:$0xf]
        %v3004 = vpack.c.bf16 %v2905, %v2902
        %v3005 = vpack.c.bf16 %v2934, %v2931
        %v3006 = vpack.c.bf16 %v2963, %v2960
        %v3007 = vpack.c.bf16 %v2992, %v2989
        %v3008 = vpack.c.bf16 %v2911, %v2908
        %v3009 = vpack.c.bf16 %v2940, %v2937
        %v3010 = vpack.c.bf16 %v2969, %v2966
        %v3011 = vpack.c.bf16 %v2998, %v2995
        %v3012 = vld [vmem:[%s375] sm:$0xff]
        %v3013 = vld [vmem:[%s375 + $0x8] sm:$0xff]
        %v3014 = vld [vmem:[%s375 + $0x10] sm:$0xff]
        %v3015 = vld [vmem:[%s375 + $0x18] sm:$0xff]
        %3017 = vset.pattern.permute.xlu0 0
        %3018 = vperm.xlu0 %3017, %v3012
        %v3019 = vpop.permute.xlu0 %3018
        %3022 = vset.pattern.permute.xlu0 0
        %3023 = vperm.xlu0 %3022, %v3013
        %v3024 = vpop.permute.xlu0 %3023
        %3027 = vset.pattern.permute.xlu0 0
        %3028 = vperm.xlu0 %3027, %v3014
        %v3029 = vpop.permute.xlu0 %3028
        %3032 = vset.pattern.permute.xlu0 0
        %3033 = vperm.xlu0 %3032, %v3015
        %v3034 = vpop.permute.xlu0 %3033
        %v3040 = vunpack.c.l.b16 %v3000
        %v3041 = vunpack.c.l.b16 %v3001
        %v3042 = vunpack.c.l.b16 %v3002
        %v3043 = vunpack.c.l.b16 %v3003
        %v3044 = vpack.c.b16 %v3041, %v3040
        %v3045 = vpack.c.b16 %v3043, %v3042
        %vm3046 = vcmask 261120
        %v3048 = vsel %vm3046, %v3044, 0
        %v3051 = vsel %vm3046, %v3045, 0
        %3053 = vmatpush.bf16.msra.mxu0 0
        %3054 = vmatpush.bf16.msra.mxu0 0
        %3055 = vmatpush.bf16.msra.mxu0 0
        %3056 = vmatpush.bf16.msra.mxu0 0
        %3057 = vmatpush.bf16.msra.mxu0 0
        %3058 = vmatpush.bf16.msra.mxu0 0
        %3059 = vmatpush.bf16.msra.mxu0 %v3008
        %3060 = vmatpush.bf16.msra.mxu0 %v3004
        %3061 = vmatmul.bf16.gmra.mxu0 %v3048
        %v3062 = vpop.f32.mrf.mxu0
        %v3063 = vadd.f32 %v3019, %v3062
        %v3064 = vpop.f32.mrf.mxu0
        %v3065 = vadd.f32 %v3024, %v3064
        %3066 = vmatmul.bf16.gmra.mxu0 %v3051
        %v3067 = vpop.f32.mrf.mxu0
        %v3068 = vadd.f32 %v3029, %v3067
        %v3069 = vpop.f32.mrf.mxu0
        %v3070 = vadd.f32 %v3034, %v3069
        %3071 = vdwg.mxu0
        %3072 = vmatpush.bf16.msra.mxu0 0
        %3073 = vmatpush.bf16.msra.mxu0 0
        %3074 = vmatpush.bf16.msra.mxu0 0
        %3075 = vmatpush.bf16.msra.mxu0 0
        %3076 = vmatpush.bf16.msra.mxu0 0
        %3077 = vmatpush.bf16.msra.mxu0 0
        %3078 = vmatpush.bf16.msra.mxu0 %v3009
        %3079 = vmatpush.bf16.msra.mxu0 %v3005
        %3080 = vmatmul.bf16.gmra.mxu0 %v3048
        %v3081 = vpop.f32.mrf.mxu0
        %v3082 = vadd.f32 %v3019, %v3081
        %v3083 = vpop.f32.mrf.mxu0
        %v3084 = vadd.f32 %v3024, %v3083
        %3085 = vmatmul.bf16.gmra.mxu0 %v3051
        %v3086 = vpop.f32.mrf.mxu0
        %v3087 = vadd.f32 %v3029, %v3086
        %v3088 = vpop.f32.mrf.mxu0
        %v3089 = vadd.f32 %v3034, %v3088
        %3090 = vdwg.mxu0
        %3091 = vmatpush.bf16.msra.mxu0 0
        %3092 = vmatpush.bf16.msra.mxu0 0
        %3093 = vmatpush.bf16.msra.mxu0 0
        %3094 = vmatpush.bf16.msra.mxu0 0
        %3095 = vmatpush.bf16.msra.mxu0 0
        %3096 = vmatpush.bf16.msra.mxu0 0
        %3097 = vmatpush.bf16.msra.mxu0 %v3010
        %3098 = vmatpush.bf16.msra.mxu0 %v3006
        %3099 = vmatmul.bf16.gmra.mxu0 %v3048
        %v3100 = vpop.f32.mrf.mxu0
        %v3101 = vadd.f32 %v3019, %v3100
        %v3102 = vpop.f32.mrf.mxu0
        %v3103 = vadd.f32 %v3024, %v3102
        %3104 = vmatmul.bf16.gmra.mxu0 %v3051
        %v3105 = vpop.f32.mrf.mxu0
        %v3106 = vadd.f32 %v3029, %v3105
        %v3107 = vpop.f32.mrf.mxu0
        %v3108 = vadd.f32 %v3034, %v3107
        %3109 = vdwg.mxu0
        %3110 = vmatpush.bf16.msra.mxu0 0
        %3111 = vmatpush.bf16.msra.mxu0 0
        %3112 = vmatpush.bf16.msra.mxu0 0
        %3113 = vmatpush.bf16.msra.mxu0 0
        %3114 = vmatpush.bf16.msra.mxu0 0
        %3115 = vmatpush.bf16.msra.mxu0 0
        %3116 = vmatpush.bf16.msra.mxu0 %v3011
        %3117 = vmatpush.bf16.msra.mxu0 %v3007
        %3118 = vmatmul.bf16.gmra.mxu0 %v3048
        %v3119 = vpop.f32.mrf.mxu0
        %v3120 = vadd.f32 %v3019, %v3119
        %v3121 = vpop.f32.mrf.mxu0
        %v3122 = vadd.f32 %v3024, %v3121
        %3123 = vmatmul.bf16.gmra.mxu0 %v3051
        %v3124 = vpop.f32.mrf.mxu0
        %v3125 = vadd.f32 %v3029, %v3124
        %v3126 = vpop.f32.mrf.mxu0
        %v3127 = vadd.f32 %v3034, %v3126
        %3128 = vdwg.mxu0
        %v3129 = vadd.f32 %v739, %v3063
        %v3130 = vadd.f32 %v740, %v3082
        %v3131 = vadd.f32 %v741, %v3101
        %v3132 = vadd.f32 %v742, %v3120
        %v3133 = vadd.f32 %v743, %v3065
        %v3134 = vadd.f32 %v744, %v3084
        %v3135 = vadd.f32 %v745, %v3103
        %v3136 = vadd.f32 %v746, %v3122
        %v3137 = vadd.f32 %v747, %v3068
        %v3138 = vadd.f32 %v748, %v3087
        %v3139 = vadd.f32 %v749, %v3106
        %v3140 = vadd.f32 %v750, %v3125
        %v3141 = vadd.f32 %v751, %v3070
        %v3142 = vadd.f32 %v752, %v3089
        %v3143 = vadd.f32 %v753, %v3108
        %v3144 = vadd.f32 %v754, %v3127
        %3145 = vst [vmem:[%s360] sm:$0xff] %v3129
        %3146 = vst [vmem:[%s360 + $0x8] sm:$0xff] %v3130
        %3147 = vst [vmem:[%s360 + $0x10] sm:$0xff] %v3131
        %3148 = vst [vmem:[%s360 + $0x18] sm:$0xff] %v3132
        %3149 = vst [vmem:[%s360 + $0x20] sm:$0xff] %v3133
        %3150 = vst [vmem:[%s360 + $0x28] sm:$0xff] %v3134
        %3151 = vst [vmem:[%s360 + $0x30] sm:$0xff] %v3135
        %3152 = vst [vmem:[%s360 + $0x38] sm:$0xff] %v3136
        %3153 = vst [vmem:[%s360 + $0x40] sm:$0xff] %v3137
        %3154 = vst [vmem:[%s360 + $0x48] sm:$0xff] %v3138
        %3155 = vst [vmem:[%s360 + $0x50] sm:$0xff] %v3139
        %3156 = vst [vmem:[%s360 + $0x58] sm:$0xff] %v3140
        %3157 = vst [vmem:[%s360 + $0x60] sm:$0xff] %v3141
        %3158 = vst [vmem:[%s360 + $0x68] sm:$0xff] %v3142
        %3159 = vst [vmem:[%s360 + $0x70] sm:$0xff] %v3143
        %3160 = vst [vmem:[%s360 + $0x78] sm:$0xff] %v3144
        %s3161 = sand.u32 %s200, 1
        %s3162 = scalar_lea.sflag [#allocation4], %s3161
        %s3163 = sand.u32 %s200, 1
        %s3164 = smul.addr %s3163, 128
        %s3165 = scalar_lea.vmem [#allocation7], %s3164
        // Predicated region
        $region57: #{tpu_custom_call.1} parent=47 // pred_check
          %p3166 = pneg %p210
        $region58: #{tpu_custom_call.1} parent=47 // pred_check_branch
          %3168 = sbr.rel (%p3166) target = $region60
        $region59: #{tpu_custom_call.1} parent=47 // pred_region
          %3170 = vsyncadd %s3162, 0
          %s3171 = smul.addr %s25, 16
          %s3172 = smul.addr %s3171, 8
          %s3173 = scalar_lea.hbm %s7, %s3172
          %s3174 = sshll.u32 %s3165, 4
          %s3175 = int_to_ptr.vmem [resolvable:$true] %s3174
          %s3176 = sshll.u32 %s3173, 4
          %s3177 = int_to_ptr.hbm [resolvable:$true] %s3176
          %3182 = dma.vmem_to_hbm [thread:$0]  %s3175, 2048, %s3177, %s3162, 512, 512, 32
        $region60: #{tpu_custom_call.1} parent=47 // pred_fallthru
          _
      $region48: #{tpu_custom_call.1} parent=5 // pred_fallthru
        _
      %p3183 = scmp.le.s32.totalorder 2, %s20
      // Predicated region
      $region61: #{tpu_custom_call.1} parent=5 // pred_check
        %p3184 = pneg %p3183
      $region62: #{tpu_custom_call.1} parent=5 // pred_check_branch
        %3186 = sbr.rel (%p3184) target = $region64
      $region63: #{tpu_custom_call.1} parent=5 // pred_region
        %s3187 = ssub.s32 %s20, 2
        // Predicated region
        $region65: #{tpu_custom_call.1} parent=63 // pred_check
          %p3188 = pneg %p216
        $region66: #{tpu_custom_call.1} parent=63 // pred_check_branch
          %3190 = sbr.rel (%p3188) target = $region68
        $region67: #{tpu_custom_call.1} parent=63 // pred_region
          %s3191 = sand.u32 %s201, 1
          %s3192 = scalar_lea.sflag [#allocation4], %s3191
          %s3193 = sand.u32 %s201, 1
          %s3194 = smul.addr %s3193, 128
          %s3195 = scalar_lea.vmem [#allocation7], %s3194
          %3197 = dma.done %s3192, 2048
        $region68: #{tpu_custom_call.1} parent=63 // pred_fallthru
          _
      $region64: #{tpu_custom_call.1} parent=5 // pred_fallthru
        _
    $region6: #{tpu_custom_call.1} parent=1 // loop_footer
      %s24 = sadd.s32 1, %s20
    $region7: #{tpu_custom_call.1} parent=1 // loop_footer_branch
      %19 = sbr.rel target = $region3
    $region8: #{tpu_custom_call.1} parent=1 // loop_exit
      _
    %3198 = vsyncpa [#allocation3], 1
    %s3199 = scalar_lea.sflag [#allocation3], 1
    %3200 = vsyncpa %s3199, 1
    %3201 = vsyncpa [#allocation6], 1
    %3202 = vsyncpa [#allocation4], 1
    %s3203 = scalar_lea.sflag [#allocation4], 1
    %3204 = vsyncpa %s3203, 1

</llo_original>
